<compile_context>
chip_gen: v7x
topology: tpu7x:2x2x1
jax: 0.10.0
libtpu: 0.0.40
codegen_flags: <defaults>
</compile_context>

<pallas_src>
import jax
import jax.numpy as jnp
from jax.experimental import pallas as pl
from jax.experimental.pallas import tpu as pltpu

GN_EPS = 1e-5
WS_EPS = 1e-5


# ------------------------------ block sizing --------------------------------

def _pick_images_per_block(n, h, w, c):
    """How many images to fold into one grid step.

    Batch images so the im2col matmul M dimension (nb*H*W) grows, subject to
    a modest VMEM budget, while keeping >= 2 grid steps when N >= 2 so both
    TensorCores of a v7x chip get work.
    """
    # ~4 MiB of f32 activations per step; ~10 whole-image-sized live buffers
    # (x, h, out1, out2, padded scratch, 9-wide im2col slab, ...).
    max_nb = max(1, (4 * 1024 * 1024) // (10 * h * w * c * 4))
    nb = min(n // 2 if n >= 2 else 1, max_nb)
    nb = max(nb, 1)
    while nb > 1 and n % nb != 0:
        nb -= 1
    return nb


# --------------------------------- kernel -----------------------------------

def resblock_kernel(x_ref, w_res_ref, b_res_ref, w_ws_ref, b_ws_ref,
                    w2_ref, b2_ref, out_ref, pad_ref, slab_ref):
    nb, hp2, wp2, c = pad_ref.shape
    H, W = hp2 - 2, wp2 - 2
    hw = H * W
    cout = w_res_ref.shape[-1]
    inv_hw = 1.0 / float(hw)

    # Zero the padded scratch once per grid step (previously: once per conv).
    # The 1-pixel border is never written below, so all three convs share it.
    pad_ref[...] = jnp.zeros_like(pad_ref)

    def gn_relu(h):
        # num_groups == C -> per-channel norm over (H, W); one-pass stats.
        s1 = jnp.sum(h, axis=(1, 2), keepdims=True)
        s2 = jnp.sum(h * h, axis=(1, 2), keepdims=True)
        mean = s1 * inv_hw
        var = jnp.maximum(s2 * inv_hw - mean * mean, 0.0)
        return jnp.maximum((h - mean) * jax.lax.rsqrt(var + GN_EPS), 0.0)

    def conv3x3(h, w_ref, b_ref):
        # h: (nb, H, W, C).  Single im2col matmul: (nb*H*W, 9C) @ (9C, Cout).
        pad_ref[:, 1:H + 1, 1:W + 1, :] = h
        for ky in range(3):
            for kx in range(3):
                t = ky * 3 + kx
                slab_ref[:, t * c:(t + 1) * c] = (
                    pad_ref[:, ky:ky + H, kx:kx + W, :].reshape(nb * hw, c))
        acc = jnp.dot(slab_ref[...], w_ref[...],
                      preferred_element_type=jnp.float32)
        acc = acc + b_ref[...]                       # (1, Cout) broadcasts
        return acc.reshape(nb, H, W, cout)

    x = x_ref[...].astype(jnp.float32)               # (nb, H, W, Cin)

    out2 = conv3x3(x, w_res_ref, b_res_ref)          # residual branch
    h = gn_relu(x)                                   # main branch
    h = conv3x3(h, w_ws_ref, b_ws_ref)
    h = gn_relu(h)
    out1 = conv3x3(h, w2_ref, b2_ref)

    out_ref[...] = (out1 + out2).astype(out_ref.dtype)


# -------------------------------- wrapper ------------------------------------

def resblock_forward(x_nchw, params):
    N, Cin, H, W = x_nchw.shape
    Cout = params["w_res"].shape[0]
    assert Cin == 32 and Cout == 32, "group_norm(num_groups=32) -> per-channel"

    x = jnp.transpose(x_nchw, (0, 2, 3, 1))          # NCHW -> NHWC

    def to_mat(w):   # (O, I, 3, 3) -> (9*I, O), row order (ky, kx, ci)
        return jnp.transpose(w, (2, 3, 1, 0)).reshape(9 * w.shape[1], w.shape[0])

    # Weight standardization for conv_ws (torch std: ddof=1, divide by std+eps).
    w_ws = params["w_ws"]
    ws_mean = jnp.mean(w_ws, axis=(1, 2, 3), keepdims=True)
    ws_std = jnp.std(w_ws, axis=(1, 2, 3), keepdims=True, ddof=1)
    w_ws_std = (w_ws - ws_mean) / (ws_std + WS_EPS)

    w_res = to_mat(params["w_res"])
    w_wss = to_mat(w_ws_std)
    w2 = to_mat(params["w2"])
    b_res = params["b_res"][None, :]
    b_ws = params["b_ws"][None, :]
    b2 = params["b2"][None, :]

    nb = _pick_images_per_block(N, H, W, max(Cin, Cout))
    grid = (N // nb,)

    w_spec = pl.BlockSpec((9 * Cin, Cout), lambda n: (0, 0))
    b_spec = pl.BlockSpec((1, Cout), lambda n: (0, 0))
    x_spec = pl.BlockSpec((nb, H, W, Cin), lambda n: (n, 0, 0, 0))
    o_spec = pl.BlockSpec((nb, H, W, Cout), lambda n: (n, 0, 0, 0))

    out = pl.pallas_call(
        resblock_kernel,
        out_shape=jax.ShapeDtypeStruct((N, H, W, Cout), x.dtype),
        grid_spec=pltpu.PrefetchScalarGridSpec(
            num_scalar_prefetch=0,
            grid=grid,
            in_specs=[x_spec,
                      w_spec, b_spec,      # conv_res
                      w_spec, b_spec,      # conv_ws (pre-standardized)
                      w_spec, b_spec],     # conv
            out_specs=o_spec,
            scratch_shapes=[
                pltpu.VMEM((nb, H + 2, W + 2, Cin), jnp.float32),  # zero-padded tile
                pltpu.VMEM((nb * H * W, 9 * Cin), jnp.float32),    # im2col slab
            ],
        ),
        compiler_params=pltpu.CompilerParams(
            dimension_semantics=("parallel",),
            vmem_limit_bytes=32 * 1024 * 1024),
    )(x, w_res, b_res, w_wss, b_ws, w2, b2)

    return jnp.transpose(out, (0, 3, 1, 2))          # NHWC -> NCHW


# ------------------------- pure-JAX reference (check) ------------------------

def _ref_conv(x_nhwc, w_hwio, b):
    y = jax.lax.conv_general_dilated(
        x_nhwc, w_hwio, window_strides=(1, 1), padding=((1, 1), (1, 1)),
        dimension_numbers=("NHWC", "HWIO", "NHWC"))
    return y + b[None, None, None, :]


def _ref_gn_relu(x_nhwc, num_groups=32, eps=GN_EPS):
    N, H, W, C = x_nhwc.shape
    g = num_groups
    xr = x_nhwc.reshape(N, H, W, g, C // g)
    mean = xr.mean(axis=(1, 2, 4), keepdims=True)
    var = ((xr - mean) ** 2).mean(axis=(1, 2, 4), keepdims=True)
    y = ((xr - mean) / jnp.sqrt(var + eps)).reshape(N, H, W, C)
    return jnp.maximum(y, 0.0)


def resblock_reference(x_nchw, params):
    x = jnp.transpose(x_nchw, (0, 2, 3, 1))

    def to_hwio(w):
        return jnp.transpose(w, (2, 3, 1, 0))

    w_ws = params["w_ws"]
    ws_mean = jnp.mean(w_ws, axis=(1, 2, 3), keepdims=True)
    ws_std = jnp.std(w_ws, axis=(1, 2, 3), keepdims=True, ddof=1)
    w_ws_std = (w_ws - ws_mean) / (ws_std + WS_EPS)

    out2 = _ref_conv(x, to_hwio(params["w_res"]), params["b_res"])
    h = _ref_gn_relu(x)
    h = _ref_conv(h, to_hwio(w_ws_std), params["b_ws"])
    h = _ref_gn_relu(h)
    out1 = _ref_conv(h, to_hwio(params["w2"]), params["b2"])
    return jnp.transpose(out1 + out2, (0, 3, 1, 2))


# ---------------------------------- main --------------------------------------

if __name__ == "__main__":
    key = jax.random.PRNGKey(0)
    N, Cin, Cout, H, W = 2, 32, 32, 8, 8

    ks = jax.random.split(key, 7)
    params = {
        "w_res": jax.random.normal(ks[0], (Cout, Cin, 3, 3), jnp.float32) * 0.1,
        "b_res": jax.random.normal(ks[1], (Cout,), jnp.float32) * 0.1,
        "w_ws":  jax.random.normal(ks[2], (Cout, Cin, 3, 3), jnp.float32) * 0.1,
        "b_ws":  jax.random.normal(ks[3], (Cout,), jnp.float32) * 0.1,
        "w2":    jax.random.normal(ks[4], (Cout, Cout, 3, 3), jnp.float32) * 0.1,
        "b2":    jax.random.normal(ks[5], (Cout,), jnp.float32) * 0.1,
    }
    x = jax.random.normal(ks[6], (N, Cin, H, W), jnp.float32)

    out = jax.block_until_ready(resblock_forward(x, params))
    ref = jax.block_until_ready(resblock_reference(x, params))

    assert out.shape == (N, Cout, H, W), out.shape
    assert jnp.allclose(out, ref, atol=1e-4, rtol=1e-4), (
        float(jnp.max(jnp.abs(out - ref))))

    print("KERNEL_OK")
</pallas_src>

<mosaic_0001>
module attributes {stable_mosaic.version = 11 : i64} {
  func.func @resblock_kernel(%arg0: i32, %arg1: memref<1x8x8x32xf32, #tpu.memory_space<vmem>>, %arg2: memref<288x32xf32, #tpu.memory_space<vmem>>, %arg3: memref<1x32xf32, #tpu.memory_space<vmem>>, %arg4: memref<288x32xf32, #tpu.memory_space<vmem>>, %arg5: memref<1x32xf32, #tpu.memory_space<vmem>>, %arg6: memref<288x32xf32, #tpu.memory_space<vmem>>, %arg7: memref<1x32xf32, #tpu.memory_space<vmem>>, %arg8: memref<1x8x8x32xf32, #tpu.memory_space<vmem>>, %arg9: memref<1x10x10x32xf32, #tpu.memory_space<vmem>>, %arg10: memref<64x288xf32, #tpu.memory_space<vmem>>) attributes {dimension_semantics = [#tpu.dimension_semantics<parallel>], iteration_bounds = array<i64: 2>, scalar_prefetch = 0 : i64, scratch_operands = 2 : i64, tpu.core_type = #tpu.core_type<tc>, window_params = [{transform_indices = @transform_0, window_bounds = array<i64: 1, 8, 8, 32>}, {pipeline_mode = #tpu.pipeline_mode<synchronous>, transform_indices = @transform_1, window_bounds = array<i64: 288, 32>}, {pipeline_mode = #tpu.pipeline_mode<synchronous>, transform_indices = @transform_2, window_bounds = array<i64: 1, 32>}, {pipeline_mode = #tpu.pipeline_mode<synchronous>, transform_indices = @transform_3, window_bounds = array<i64: 288, 32>}, {pipeline_mode = #tpu.pipeline_mode<synchronous>, transform_indices = @transform_4, window_bounds = array<i64: 1, 32>}, {pipeline_mode = #tpu.pipeline_mode<synchronous>, transform_indices = @transform_5, window_bounds = array<i64: 288, 32>}, {pipeline_mode = #tpu.pipeline_mode<synchronous>, transform_indices = @transform_6, window_bounds = array<i64: 1, 32>}, {transform_indices = @transform_7, window_bounds = array<i64: 1, 8, 8, 32>}]} {
    %cst = arith.constant 0.000000e+00 : f32
    %0 = vector.broadcast %cst : f32 to vector<1x10x10x32xf32>
    %c0 = arith.constant 0 : index
    %c0_0 = arith.constant 0 : index
    %c0_1 = arith.constant 0 : index
    %c0_2 = arith.constant 0 : index
    %1 = vector.load %arg9[%c0, %c0_0, %c0_1, %c0_2] : memref<1x10x10x32xf32, #tpu.memory_space<vmem>>, vector<1x10x10x32xf32>
    tpu.vector_store %arg9[%c0, %c0_0, %c0_1, %c0_2], %0 {strides = array<i32>} : memref<1x10x10x32xf32, #tpu.memory_space<vmem>>, vector<1x10x10x32xf32>,
    %c0_3 = arith.constant 0 : index
    %c0_4 = arith.constant 0 : index
    %c0_5 = arith.constant 0 : index
    %c0_6 = arith.constant 0 : index
    %2 = vector.load %arg1[%c0_3, %c0_4, %c0_5, %c0_6] : memref<1x8x8x32xf32, #tpu.memory_space<vmem>>, vector<1x8x8x32xf32>
    %c0_7 = arith.constant 0 : index
    %c1 = arith.constant 1 : index
    %c1_8 = arith.constant 1 : index
    %c0_9 = arith.constant 0 : index
    %3 = vector.load %arg9[%c0_7, %c1, %c1_8, %c0_9] : memref<1x10x10x32xf32, #tpu.memory_space<vmem>>, vector<1x8x8x32xf32>
    tpu.vector_store %arg9[%c0_7, %c1, %c1_8, %c0_9], %2 {strides = array<i32>} : memref<1x10x10x32xf32, #tpu.memory_space<vmem>>, vector<1x8x8x32xf32>,
    %c0_10 = arith.constant 0 : index
    %c0_11 = arith.constant 0 : index
    %c0_12 = arith.constant 0 : index
    %c0_13 = arith.constant 0 : index
    %4 = vector.load %arg9[%c0_10, %c0_11, %c0_12, %c0_13] : memref<1x10x10x32xf32, #tpu.memory_space<vmem>>, vector<1x8x8x32xf32>
    %5 = vector.shape_cast %4 : vector<1x8x8x32xf32> to vector<64x32xf32>
    %c0_14 = arith.constant 0 : index
    %c0_15 = arith.constant 0 : index
    %6 = vector.load %arg10[%c0_14, %c0_15] : memref<64x288xf32, #tpu.memory_space<vmem>>, vector<64x32xf32>
    tpu.vector_store %arg10[%c0_14, %c0_15], %5 {strides = array<i32>} : memref<64x288xf32, #tpu.memory_space<vmem>>, vector<64x32xf32>,
    %c0_16 = arith.constant 0 : index
    %c0_17 = arith.constant 0 : index
    %c1_18 = arith.constant 1 : index
    %c0_19 = arith.constant 0 : index
    %7 = vector.load %arg9[%c0_16, %c0_17, %c1_18, %c0_19] : memref<1x10x10x32xf32, #tpu.memory_space<vmem>>, vector<1x8x8x32xf32>
    %8 = vector.shape_cast %7 : vector<1x8x8x32xf32> to vector<64x32xf32>
    %c0_20 = arith.constant 0 : index
    %c32 = arith.constant 32 : index
    %9 = vector.load %arg10[%c0_20, %c32] : memref<64x288xf32, #tpu.memory_space<vmem>>, vector<64x32xf32>
    tpu.vector_store %arg10[%c0_20, %c32], %8 {strides = array<i32>} : memref<64x288xf32, #tpu.memory_space<vmem>>, vector<64x32xf32>,
    %c0_21 = arith.constant 0 : index
    %c0_22 = arith.constant 0 : index
    %c2 = arith.constant 2 : index
    %c0_23 = arith.constant 0 : index
    %10 = vector.load %arg9[%c0_21, %c0_22, %c2, %c0_23] : memref<1x10x10x32xf32, #tpu.memory_space<vmem>>, vector<1x8x8x32xf32>
    %11 = vector.shape_cast %10 : vector<1x8x8x32xf32> to vector<64x32xf32>
    %c0_24 = arith.constant 0 : index
    %c64 = arith.constant 64 : index
    %12 = vector.load %arg10[%c0_24, %c64] : memref<64x288xf32, #tpu.memory_space<vmem>>, vector<64x32xf32>
    tpu.vector_store %arg10[%c0_24, %c64], %11 {strides = array<i32>} : memref<64x288xf32, #tpu.memory_space<vmem>>, vector<64x32xf32>,
    %c0_25 = arith.constant 0 : index
    %c1_26 = arith.constant 1 : index
    %c0_27 = arith.constant 0 : index
    %c0_28 = arith.constant 0 : index
    %13 = vector.load %arg9[%c0_25, %c1_26, %c0_27, %c0_28] : memref<1x10x10x32xf32, #tpu.memory_space<vmem>>, vector<1x8x8x32xf32>
    %14 = vector.shape_cast %13 : vector<1x8x8x32xf32> to vector<64x32xf32>
    %c0_29 = arith.constant 0 : index
    %c96 = arith.constant 96 : index
    %15 = vector.load %arg10[%c0_29, %c96] : memref<64x288xf32, #tpu.memory_space<vmem>>, vector<64x32xf32>
    tpu.vector_store %arg10[%c0_29, %c96], %14 {strides = array<i32>} : memref<64x288xf32, #tpu.memory_space<vmem>>, vector<64x32xf32>,
    %c0_30 = arith.constant 0 : index
    %c1_31 = arith.constant 1 : index
    %c1_32 = arith.constant 1 : index
    %c0_33 = arith.constant 0 : index
    %16 = vector.load %arg9[%c0_30, %c1_31, %c1_32, %c0_33] : memref<1x10x10x32xf32, #tpu.memory_space<vmem>>, vector<1x8x8x32xf32>
    %17 = vector.shape_cast %16 : vector<1x8x8x32xf32> to vector<64x32xf32>
    %c0_34 = arith.constant 0 : index
    %c128 = arith.constant 128 : index
    %18 = vector.load %arg10[%c0_34, %c128] : memref<64x288xf32, #tpu.memory_space<vmem>>, vector<64x32xf32>
    tpu.vector_store %arg10[%c0_34, %c128], %17 {strides = array<i32>} : memref<64x288xf32, #tpu.memory_space<vmem>>, vector<64x32xf32>,
    %c0_35 = arith.constant 0 : index
    %c1_36 = arith.constant 1 : index
    %c2_37 = arith.constant 2 : index
    %c0_38 = arith.constant 0 : index
    %19 = vector.load %arg9[%c0_35, %c1_36, %c2_37, %c0_38] : memref<1x10x10x32xf32, #tpu.memory_space<vmem>>, vector<1x8x8x32xf32>
    %20 = vector.shape_cast %19 : vector<1x8x8x32xf32> to vector<64x32xf32>
    %c0_39 = arith.constant 0 : index
    %c160 = arith.constant 160 : index
    %21 = vector.load %arg10[%c0_39, %c160] : memref<64x288xf32, #tpu.memory_space<vmem>>, vector<64x32xf32>
    tpu.vector_store %arg10[%c0_39, %c160], %20 {strides = array<i32>} : memref<64x288xf32, #tpu.memory_space<vmem>>, vector<64x32xf32>,
    %c0_40 = arith.constant 0 : index
    %c2_41 = arith.constant 2 : index
    %c0_42 = arith.constant 0 : index
    %c0_43 = arith.constant 0 : index
    %22 = vector.load %arg9[%c0_40, %c2_41, %c0_42, %c0_43] : memref<1x10x10x32xf32, #tpu.memory_space<vmem>>, vector<1x8x8x32xf32>
    %23 = vector.shape_cast %22 : vector<1x8x8x32xf32> to vector<64x32xf32>
    %c0_44 = arith.constant 0 : index
    %c192 = arith.constant 192 : index
    %24 = vector.load %arg10[%c0_44, %c192] : memref<64x288xf32, #tpu.memory_space<vmem>>, vector<64x32xf32>
    tpu.vector_store %arg10[%c0_44, %c192], %23 {strides = array<i32>} : memref<64x288xf32, #tpu.memory_space<vmem>>, vector<64x32xf32>,
    %c0_45 = arith.constant 0 : index
    %c2_46 = arith.constant 2 : index
    %c1_47 = arith.constant 1 : index
    %c0_48 = arith.constant 0 : index
    %25 = vector.load %arg9[%c0_45, %c2_46, %c1_47, %c0_48] : memref<1x10x10x32xf32, #tpu.memory_space<vmem>>, vector<1x8x8x32xf32>
    %26 = vector.shape_cast %25 : vector<1x8x8x32xf32> to vector<64x32xf32>
    %c0_49 = arith.constant 0 : index
    %c224 = arith.constant 224 : index
    %27 = vector.load %arg10[%c0_49, %c224] : memref<64x288xf32, #tpu.memory_space<vmem>>, vector<64x32xf32>
    tpu.vector_store %arg10[%c0_49, %c224], %26 {strides = array<i32>} : memref<64x288xf32, #tpu.memory_space<vmem>>, vector<64x32xf32>,
    %c0_50 = arith.constant 0 : index
    %c2_51 = arith.constant 2 : index
    %c2_52 = arith.constant 2 : index
    %c0_53 = arith.constant 0 : index
    %28 = vector.load %arg9[%c0_50, %c2_51, %c2_52, %c0_53] : memref<1x10x10x32xf32, #tpu.memory_space<vmem>>, vector<1x8x8x32xf32>
    %29 = vector.shape_cast %28 : vector<1x8x8x32xf32> to vector<64x32xf32>
    %c0_54 = arith.constant 0 : index
    %c256 = arith.constant 256 : index
    %30 = vector.load %arg10[%c0_54, %c256] : memref<64x288xf32, #tpu.memory_space<vmem>>, vector<64x32xf32>
    tpu.vector_store %arg10[%c0_54, %c256], %29 {strides = array<i32>} : memref<64x288xf32, #tpu.memory_space<vmem>>, vector<64x32xf32>,
    %c0_55 = arith.constant 0 : index
    %c0_56 = arith.constant 0 : index
    %31 = vector.load %arg10[%c0_55, %c0_56] : memref<64x288xf32, #tpu.memory_space<vmem>>, vector<64x288xf32>
    %c0_57 = arith.constant 0 : index
    %c0_58 = arith.constant 0 : index
    %32 = vector.load %arg2[%c0_57, %c0_58] : memref<288x32xf32, #tpu.memory_space<vmem>>, vector<288x32xf32>
    %cst_59 = arith.constant dense<0.000000e+00> : vector<64x32xf32>
    %33 = tpu.matmul %31, %32, %cst_59 {dimension_numbers = #tpu.dot_dimension_numbers<[1], [0], [0], [1], [0, 0, 1, 1], [], []>} : vector<64x288xf32>, vector<288x32xf32>, vector<64x32xf32> -> vector<64x32xf32>
    %c0_60 = arith.constant 0 : index
    %c0_61 = arith.constant 0 : index
    %34 = vector.load %arg3[%c0_60, %c0_61] : memref<1x32xf32, #tpu.memory_space<vmem>>, vector<1x32xf32>
    %35 = vector.broadcast %34 : vector<1x32xf32> to vector<64x32xf32>
    %36 = arith.addf %33, %35 : vector<64x32xf32>
    %37 = vector.shape_cast %36 : vector<64x32xf32> to vector<1x8x8x32xf32>
    %cst_62 = arith.constant dense<0.000000e+00> : vector<1x32xf32>
    %38 = vector.multi_reduction <add>, %2, %cst_62 [1, 2] : vector<1x8x8x32xf32> to vector<1x32xf32>
    %39 = vector.shape_cast %38 : vector<1x32xf32> to vector<1x1x1x32xf32>
    %40 = arith.mulf %2, %2 : vector<1x8x8x32xf32>
    %cst_63 = arith.constant dense<0.000000e+00> : vector<1x32xf32>
    %41 = vector.multi_reduction <add>, %40, %cst_63 [1, 2] : vector<1x8x8x32xf32> to vector<1x32xf32>
    %42 = vector.shape_cast %41 : vector<1x32xf32> to vector<1x1x1x32xf32>
    %cst_64 = arith.constant 1.562500e-02 : f32
    %43 = vector.broadcast %cst_64 : f32 to vector<1x1x1x32xf32>
    %44 = arith.mulf %39, %43 : vector<1x1x1x32xf32>
    %cst_65 = arith.constant 1.562500e-02 : f32
    %45 = vector.broadcast %cst_65 : f32 to vector<1x1x1x32xf32>
    %46 = arith.mulf %42, %45 : vector<1x1x1x32xf32>
    %47 = arith.mulf %44, %44 : vector<1x1x1x32xf32>
    %48 = arith.subf %46, %47 : vector<1x1x1x32xf32>
    %cst_66 = arith.constant 0.000000e+00 : f32
    %49 = vector.broadcast %cst_66 : f32 to vector<1x1x1x32xf32>
    %50 = arith.maximumf %48, %49 : vector<1x1x1x32xf32>
    %51 = vector.broadcast %44 : vector<1x1x1x32xf32> to vector<1x8x8x32xf32>
    %52 = arith.subf %2, %51 : vector<1x8x8x32xf32>
    %cst_67 = arith.constant 9.99999974E-6 : f32
    %53 = vector.broadcast %cst_67 : f32 to vector<1x1x1x32xf32>
    %54 = arith.addf %50, %53 : vector<1x1x1x32xf32>
    %55 = math.rsqrt %54 : vector<1x1x1x32xf32>
    %56 = vector.broadcast %55 : vector<1x1x1x32xf32> to vector<1x8x8x32xf32>
    %57 = arith.mulf %52, %56 : vector<1x8x8x32xf32>
    %cst_68 = arith.constant 0.000000e+00 : f32
    %58 = vector.broadcast %cst_68 : f32 to vector<1x8x8x32xf32>
    %59 = arith.maximumf %57, %58 : vector<1x8x8x32xf32>
    %c0_69 = arith.constant 0 : index
    %c1_70 = arith.constant 1 : index
    %c1_71 = arith.constant 1 : index
    %c0_72 = arith.constant 0 : index
    %60 = vector.load %arg9[%c0_69, %c1_70, %c1_71, %c0_72] : memref<1x10x10x32xf32, #tpu.memory_space<vmem>>, vector<1x8x8x32xf32>
    tpu.vector_store %arg9[%c0_69, %c1_70, %c1_71, %c0_72], %59 {strides = array<i32>} : memref<1x10x10x32xf32, #tpu.memory_space<vmem>>, vector<1x8x8x32xf32>,
    %c0_73 = arith.constant 0 : index
    %c0_74 = arith.constant 0 : index
    %c0_75 = arith.constant 0 : index
    %c0_76 = arith.constant 0 : index
    %61 = vector.load %arg9[%c0_73, %c0_74, %c0_75, %c0_76] : memref<1x10x10x32xf32, #tpu.memory_space<vmem>>, vector<1x8x8x32xf32>
    %62 = vector.shape_cast %61 : vector<1x8x8x32xf32> to vector<64x32xf32>
    %c0_77 = arith.constant 0 : index
    %c0_78 = arith.constant 0 : index
    %63 = vector.load %arg10[%c0_77, %c0_78] : memref<64x288xf32, #tpu.memory_space<vmem>>, vector<64x32xf32>
    tpu.vector_store %arg10[%c0_77, %c0_78], %62 {strides = array<i32>} : memref<64x288xf32, #tpu.memory_space<vmem>>, vector<64x32xf32>,
    %c0_79 = arith.constant 0 : index
    %c0_80 = arith.constant 0 : index
    %c1_81 = arith.constant 1 : index
    %c0_82 = arith.constant 0 : index
    %64 = vector.load %arg9[%c0_79, %c0_80, %c1_81, %c0_82] : memref<1x10x10x32xf32, #tpu.memory_space<vmem>>, vector<1x8x8x32xf32>
    %65 = vector.shape_cast %64 : vector<1x8x8x32xf32> to vector<64x32xf32>
    %c0_83 = arith.constant 0 : index
    %c32_84 = arith.constant 32 : index
    %66 = vector.load %arg10[%c0_83, %c32_84] : memref<64x288xf32, #tpu.memory_space<vmem>>, vector<64x32xf32>
    tpu.vector_store %arg10[%c0_83, %c32_84], %65 {strides = array<i32>} : memref<64x288xf32, #tpu.memory_space<vmem>>, vector<64x32xf32>,
    %c0_85 = arith.constant 0 : index
    %c0_86 = arith.constant 0 : index
    %c2_87 = arith.constant 2 : index
    %c0_88 = arith.constant 0 : index
    %67 = vector.load %arg9[%c0_85, %c0_86, %c2_87, %c0_88] : memref<1x10x10x32xf32, #tpu.memory_space<vmem>>, vector<1x8x8x32xf32>
    %68 = vector.shape_cast %67 : vector<1x8x8x32xf32> to vector<64x32xf32>
    %c0_89 = arith.constant 0 : index
    %c64_90 = arith.constant 64 : index
    %69 = vector.load %arg10[%c0_89, %c64_90] : memref<64x288xf32, #tpu.memory_space<vmem>>, vector<64x32xf32>
    tpu.vector_store %arg10[%c0_89, %c64_90], %68 {strides = array<i32>} : memref<64x288xf32, #tpu.memory_space<vmem>>, vector<64x32xf32>,
    %c0_91 = arith.constant 0 : index
    %c1_92 = arith.constant 1 : index
    %c0_93 = arith.constant 0 : index
    %c0_94 = arith.constant 0 : index
    %70 = vector.load %arg9[%c0_91, %c1_92, %c0_93, %c0_94] : memref<1x10x10x32xf32, #tpu.memory_space<vmem>>, vector<1x8x8x32xf32>
    %71 = vector.shape_cast %70 : vector<1x8x8x32xf32> to vector<64x32xf32>
    %c0_95 = arith.constant 0 : index
    %c96_96 = arith.constant 96 : index
    %72 = vector.load %arg10[%c0_95, %c96_96] : memref<64x288xf32, #tpu.memory_space<vmem>>, vector<64x32xf32>
    tpu.vector_store %arg10[%c0_95, %c96_96], %71 {strides = array<i32>} : memref<64x288xf32, #tpu.memory_space<vmem>>, vector<64x32xf32>,
    %c0_97 = arith.constant 0 : index
    %c1_98 = arith.constant 1 : index
    %c1_99 = arith.constant 1 : index
    %c0_100 = arith.constant 0 : index
    %73 = vector.load %arg9[%c0_97, %c1_98, %c1_99, %c0_100] : memref<1x10x10x32xf32, #tpu.memory_space<vmem>>, vector<1x8x8x32xf32>
    %74 = vector.shape_cast %73 : vector<1x8x8x32xf32> to vector<64x32xf32>
    %c0_101 = arith.constant 0 : index
    %c128_102 = arith.constant 128 : index
    %75 = vector.load %arg10[%c0_101, %c128_102] : memref<64x288xf32, #tpu.memory_space<vmem>>, vector<64x32xf32>
    tpu.vector_store %arg10[%c0_101, %c128_102], %74 {strides = array<i32>} : memref<64x288xf32, #tpu.memory_space<vmem>>, vector<64x32xf32>,
    %c0_103 = arith.constant 0 : index
    %c1_104 = arith.constant 1 : index
    %c2_105 = arith.constant 2 : index
    %c0_106 = arith.constant 0 : index
    %76 = vector.load %arg9[%c0_103, %c1_104, %c2_105, %c0_106] : memref<1x10x10x32xf32, #tpu.memory_space<vmem>>, vector<1x8x8x32xf32>
    %77 = vector.shape_cast %76 : vector<1x8x8x32xf32> to vector<64x32xf32>
    %c0_107 = arith.constant 0 : index
    %c160_108 = arith.constant 160 : index
    %78 = vector.load %arg10[%c0_107, %c160_108] : memref<64x288xf32, #tpu.memory_space<vmem>>, vector<64x32xf32>
    tpu.vector_store %arg10[%c0_107, %c160_108], %77 {strides = array<i32>} : memref<64x288xf32, #tpu.memory_space<vmem>>, vector<64x32xf32>,
    %c0_109 = arith.constant 0 : index
    %c2_110 = arith.constant 2 : index
    %c0_111 = arith.constant 0 : index
    %c0_112 = arith.constant 0 : index
    %79 = vector.load %arg9[%c0_109, %c2_110, %c0_111, %c0_112] : memref<1x10x10x32xf32, #tpu.memory_space<vmem>>, vector<1x8x8x32xf32>
    %80 = vector.shape_cast %79 : vector<1x8x8x32xf32> to vector<64x32xf32>
    %c0_113 = arith.constant 0 : index
    %c192_114 = arith.constant 192 : index
    %81 = vector.load %arg10[%c0_113, %c192_114] : memref<64x288xf32, #tpu.memory_space<vmem>>, vector<64x32xf32>
    tpu.vector_store %arg10[%c0_113, %c192_114], %80 {strides = array<i32>} : memref<64x288xf32, #tpu.memory_space<vmem>>, vector<64x32xf32>,
    %c0_115 = arith.constant 0 : index
    %c2_116 = arith.constant 2 : index
    %c1_117 = arith.constant 1 : index
    %c0_118 = arith.constant 0 : index
    %82 = vector.load %arg9[%c0_115, %c2_116, %c1_117, %c0_118] : memref<1x10x10x32xf32, #tpu.memory_space<vmem>>, vector<1x8x8x32xf32>
    %83 = vector.shape_cast %82 : vector<1x8x8x32xf32> to vector<64x32xf32>
    %c0_119 = arith.constant 0 : index
    %c224_120 = arith.constant 224 : index
    %84 = vector.load %arg10[%c0_119, %c224_120] : memref<64x288xf32, #tpu.memory_space<vmem>>, vector<64x32xf32>
    tpu.vector_store %arg10[%c0_119, %c224_120], %83 {strides = array<i32>} : memref<64x288xf32, #tpu.memory_space<vmem>>, vector<64x32xf32>,
    %c0_121 = arith.constant 0 : index
    %c2_122 = arith.constant 2 : index
    %c2_123 = arith.constant 2 : index
    %c0_124 = arith.constant 0 : index
    %85 = vector.load %arg9[%c0_121, %c2_122, %c2_123, %c0_124] : memref<1x10x10x32xf32, #tpu.memory_space<vmem>>, vector<1x8x8x32xf32>
    %86 = vector.shape_cast %85 : vector<1x8x8x32xf32> to vector<64x32xf32>
    %c0_125 = arith.constant 0 : index
    %c256_126 = arith.constant 256 : index
    %87 = vector.load %arg10[%c0_125, %c256_126] : memref<64x288xf32, #tpu.memory_space<vmem>>, vector<64x32xf32>
    tpu.vector_store %arg10[%c0_125, %c256_126], %86 {strides = array<i32>} : memref<64x288xf32, #tpu.memory_space<vmem>>, vector<64x32xf32>,
    %c0_127 = arith.constant 0 : index
    %c0_128 = arith.constant 0 : index
    %88 = vector.load %arg10[%c0_127, %c0_128] : memref<64x288xf32, #tpu.memory_space<vmem>>, vector<64x288xf32>
    %c0_129 = arith.constant 0 : index
    %c0_130 = arith.constant 0 : index
    %89 = vector.load %arg4[%c0_129, %c0_130] : memref<288x32xf32, #tpu.memory_space<vmem>>, vector<288x32xf32>
    %cst_131 = arith.constant dense<0.000000e+00> : vector<64x32xf32>
    %90 = tpu.matmul %88, %89, %cst_131 {dimension_numbers = #tpu.dot_dimension_numbers<[1], [0], [0], [1], [0, 0, 1, 1], [], []>} : vector<64x288xf32>, vector<288x32xf32>, vector<64x32xf32> -> vector<64x32xf32>
    %c0_132 = arith.constant 0 : index
    %c0_133 = arith.constant 0 : index
    %91 = vector.load %arg5[%c0_132, %c0_133] : memref<1x32xf32, #tpu.memory_space<vmem>>, vector<1x32xf32>
    %92 = vector.broadcast %91 : vector<1x32xf32> to vector<64x32xf32>
    %93 = arith.addf %90, %92 : vector<64x32xf32>
    %94 = vector.shape_cast %93 : vector<64x32xf32> to vector<1x8x8x32xf32>
    %cst_134 = arith.constant dense<0.000000e+00> : vector<1x32xf32>
    %95 = vector.multi_reduction <add>, %94, %cst_134 [1, 2] : vector<1x8x8x32xf32> to vector<1x32xf32>
    %96 = vector.shape_cast %95 : vector<1x32xf32> to vector<1x1x1x32xf32>
    %97 = arith.mulf %94, %94 : vector<1x8x8x32xf32>
    %cst_135 = arith.constant dense<0.000000e+00> : vector<1x32xf32>
    %98 = vector.multi_reduction <add>, %97, %cst_135 [1, 2] : vector<1x8x8x32xf32> to vector<1x32xf32>
    %99 = vector.shape_cast %98 : vector<1x32xf32> to vector<1x1x1x32xf32>
    %cst_136 = arith.constant 1.562500e-02 : f32
    %100 = vector.broadcast %cst_136 : f32 to vector<1x1x1x32xf32>
    %101 = arith.mulf %96, %100 : vector<1x1x1x32xf32>
    %cst_137 = arith.constant 1.562500e-02 : f32
    %102 = vector.broadcast %cst_137 : f32 to vector<1x1x1x32xf32>
    %103 = arith.mulf %99, %102 : vector<1x1x1x32xf32>
    %104 = arith.mulf %101, %101 : vector<1x1x1x32xf32>
    %105 = arith.subf %103, %104 : vector<1x1x1x32xf32>
    %cst_138 = arith.constant 0.000000e+00 : f32
    %106 = vector.broadcast %cst_138 : f32 to vector<1x1x1x32xf32>
    %107 = arith.maximumf %105, %106 : vector<1x1x1x32xf32>
    %108 = vector.broadcast %101 : vector<1x1x1x32xf32> to vector<1x8x8x32xf32>
    %109 = arith.subf %94, %108 : vector<1x8x8x32xf32>
    %cst_139 = arith.constant 9.99999974E-6 : f32
    %110 = vector.broadcast %cst_139 : f32 to vector<1x1x1x32xf32>
    %111 = arith.addf %107, %110 : vector<1x1x1x32xf32>
    %112 = math.rsqrt %111 : vector<1x1x1x32xf32>
    %113 = vector.broadcast %112 : vector<1x1x1x32xf32> to vector<1x8x8x32xf32>
    %114 = arith.mulf %109, %113 : vector<1x8x8x32xf32>
    %cst_140 = arith.constant 0.000000e+00 : f32
    %115 = vector.broadcast %cst_140 : f32 to vector<1x8x8x32xf32>
    %116 = arith.maximumf %114, %115 : vector<1x8x8x32xf32>
    %c0_141 = arith.constant 0 : index
    %c1_142 = arith.constant 1 : index
    %c1_143 = arith.constant 1 : index
    %c0_144 = arith.constant 0 : index
    %117 = vector.load %arg9[%c0_141, %c1_142, %c1_143, %c0_144] : memref<1x10x10x32xf32, #tpu.memory_space<vmem>>, vector<1x8x8x32xf32>
    tpu.vector_store %arg9[%c0_141, %c1_142, %c1_143, %c0_144], %116 {strides = array<i32>} : memref<1x10x10x32xf32, #tpu.memory_space<vmem>>, vector<1x8x8x32xf32>,
    %c0_145 = arith.constant 0 : index
    %c0_146 = arith.constant 0 : index
    %c0_147 = arith.constant 0 : index
    %c0_148 = arith.constant 0 : index
    %118 = vector.load %arg9[%c0_145, %c0_146, %c0_147, %c0_148] : memref<1x10x10x32xf32, #tpu.memory_space<vmem>>, vector<1x8x8x32xf32>
    %119 = vector.shape_cast %118 : vector<1x8x8x32xf32> to vector<64x32xf32>
    %c0_149 = arith.constant 0 : index
    %c0_150 = arith.constant 0 : index
    %120 = vector.load %arg10[%c0_149, %c0_150] : memref<64x288xf32, #tpu.memory_space<vmem>>, vector<64x32xf32>
    tpu.vector_store %arg10[%c0_149, %c0_150], %119 {strides = array<i32>} : memref<64x288xf32, #tpu.memory_space<vmem>>, vector<64x32xf32>,
    %c0_151 = arith.constant 0 : index
    %c0_152 = arith.constant 0 : index
    %c1_153 = arith.constant 1 : index
    %c0_154 = arith.constant 0 : index
    %121 = vector.load %arg9[%c0_151, %c0_152, %c1_153, %c0_154] : memref<1x10x10x32xf32, #tpu.memory_space<vmem>>, vector<1x8x8x32xf32>
    %122 = vector.shape_cast %121 : vector<1x8x8x32xf32> to vector<64x32xf32>
    %c0_155 = arith.constant 0 : index
    %c32_156 = arith.constant 32 : index
    %123 = vector.load %arg10[%c0_155, %c32_156] : memref<64x288xf32, #tpu.memory_space<vmem>>, vector<64x32xf32>
    tpu.vector_store %arg10[%c0_155, %c32_156], %122 {strides = array<i32>} : memref<64x288xf32, #tpu.memory_space<vmem>>, vector<64x32xf32>,
    %c0_157 = arith.constant 0 : index
    %c0_158 = arith.constant 0 : index
    %c2_159 = arith.constant 2 : index
    %c0_160 = arith.constant 0 : index
    %124 = vector.load %arg9[%c0_157, %c0_158, %c2_159, %c0_160] : memref<1x10x10x32xf32, #tpu.memory_space<vmem>>, vector<1x8x8x32xf32>
    %125 = vector.shape_cast %124 : vector<1x8x8x32xf32> to vector<64x32xf32>
    %c0_161 = arith.constant 0 : index
    %c64_162 = arith.constant 64 : index
    %126 = vector.load %arg10[%c0_161, %c64_162] : memref<64x288xf32, #tpu.memory_space<vmem>>, vector<64x32xf32>
    tpu.vector_store %arg10[%c0_161, %c64_162], %125 {strides = array<i32>} : memref<64x288xf32, #tpu.memory_space<vmem>>, vector<64x32xf32>,
    %c0_163 = arith.constant 0 : index
    %c1_164 = arith.constant 1 : index
    %c0_165 = arith.constant 0 : index
    %c0_166 = arith.constant 0 : index
    %127 = vector.load %arg9[%c0_163, %c1_164, %c0_165, %c0_166] : memref<1x10x10x32xf32, #tpu.memory_space<vmem>>, vector<1x8x8x32xf32>
    %128 = vector.shape_cast %127 : vector<1x8x8x32xf32> to vector<64x32xf32>
    %c0_167 = arith.constant 0 : index
    %c96_168 = arith.constant 96 : index
    %129 = vector.load %arg10[%c0_167, %c96_168] : memref<64x288xf32, #tpu.memory_space<vmem>>, vector<64x32xf32>
    tpu.vector_store %arg10[%c0_167, %c96_168], %128 {strides = array<i32>} : memref<64x288xf32, #tpu.memory_space<vmem>>, vector<64x32xf32>,
    %c0_169 = arith.constant 0 : index
    %c1_170 = arith.constant 1 : index
    %c1_171 = arith.constant 1 : index
    %c0_172 = arith.constant 0 : index
    %130 = vector.load %arg9[%c0_169, %c1_170, %c1_171, %c0_172] : memref<1x10x10x32xf32, #tpu.memory_space<vmem>>, vector<1x8x8x32xf32>
    %131 = vector.shape_cast %130 : vector<1x8x8x32xf32> to vector<64x32xf32>
    %c0_173 = arith.constant 0 : index
    %c128_174 = arith.constant 128 : index
    %132 = vector.load %arg10[%c0_173, %c128_174] : memref<64x288xf32, #tpu.memory_space<vmem>>, vector<64x32xf32>
    tpu.vector_store %arg10[%c0_173, %c128_174], %131 {strides = array<i32>} : memref<64x288xf32, #tpu.memory_space<vmem>>, vector<64x32xf32>,
    %c0_175 = arith.constant 0 : index
    %c1_176 = arith.constant 1 : index
    %c2_177 = arith.constant 2 : index
    %c0_178 = arith.constant 0 : index
    %133 = vector.load %arg9[%c0_175, %c1_176, %c2_177, %c0_178] : memref<1x10x10x32xf32, #tpu.memory_space<vmem>>, vector<1x8x8x32xf32>
    %134 = vector.shape_cast %133 : vector<1x8x8x32xf32> to vector<64x32xf32>
    %c0_179 = arith.constant 0 : index
    %c160_180 = arith.constant 160 : index
    %135 = vector.load %arg10[%c0_179, %c160_180] : memref<64x288xf32, #tpu.memory_space<vmem>>, vector<64x32xf32>
    tpu.vector_store %arg10[%c0_179, %c160_180], %134 {strides = array<i32>} : memref<64x288xf32, #tpu.memory_space<vmem>>, vector<64x32xf32>,
    %c0_181 = arith.constant 0 : index
    %c2_182 = arith.constant 2 : index
    %c0_183 = arith.constant 0 : index
    %c0_184 = arith.constant 0 : index
    %136 = vector.load %arg9[%c0_181, %c2_182, %c0_183, %c0_184] : memref<1x10x10x32xf32, #tpu.memory_space<vmem>>, vector<1x8x8x32xf32>
    %137 = vector.shape_cast %136 : vector<1x8x8x32xf32> to vector<64x32xf32>
    %c0_185 = arith.constant 0 : index
    %c192_186 = arith.constant 192 : index
    %138 = vector.load %arg10[%c0_185, %c192_186] : memref<64x288xf32, #tpu.memory_space<vmem>>, vector<64x32xf32>
    tpu.vector_store %arg10[%c0_185, %c192_186], %137 {strides = array<i32>} : memref<64x288xf32, #tpu.memory_space<vmem>>, vector<64x32xf32>,
    %c0_187 = arith.constant 0 : index
    %c2_188 = arith.constant 2 : index
    %c1_189 = arith.constant 1 : index
    %c0_190 = arith.constant 0 : index
    %139 = vector.load %arg9[%c0_187, %c2_188, %c1_189, %c0_190] : memref<1x10x10x32xf32, #tpu.memory_space<vmem>>, vector<1x8x8x32xf32>
    %140 = vector.shape_cast %139 : vector<1x8x8x32xf32> to vector<64x32xf32>
    %c0_191 = arith.constant 0 : index
    %c224_192 = arith.constant 224 : index
    %141 = vector.load %arg10[%c0_191, %c224_192] : memref<64x288xf32, #tpu.memory_space<vmem>>, vector<64x32xf32>
    tpu.vector_store %arg10[%c0_191, %c224_192], %140 {strides = array<i32>} : memref<64x288xf32, #tpu.memory_space<vmem>>, vector<64x32xf32>,
    %c0_193 = arith.constant 0 : index
    %c2_194 = arith.constant 2 : index
    %c2_195 = arith.constant 2 : index
    %c0_196 = arith.constant 0 : index
    %142 = vector.load %arg9[%c0_193, %c2_194, %c2_195, %c0_196] : memref<1x10x10x32xf32, #tpu.memory_space<vmem>>, vector<1x8x8x32xf32>
    %143 = vector.shape_cast %142 : vector<1x8x8x32xf32> to vector<64x32xf32>
    %c0_197 = arith.constant 0 : index
    %c256_198 = arith.constant 256 : index
    %144 = vector.load %arg10[%c0_197, %c256_198] : memref<64x288xf32, #tpu.memory_space<vmem>>, vector<64x32xf32>
    tpu.vector_store %arg10[%c0_197, %c256_198], %143 {strides = array<i32>} : memref<64x288xf32, #tpu.memory_space<vmem>>, vector<64x32xf32>,
    %c0_199 = arith.constant 0 : index
    %c0_200 = arith.constant 0 : index
    %145 = vector.load %arg10[%c0_199, %c0_200] : memref<64x288xf32, #tpu.memory_space<vmem>>, vector<64x288xf32>
    %c0_201 = arith.constant 0 : index
    %c0_202 = arith.constant 0 : index
    %146 = vector.load %arg6[%c0_201, %c0_202] : memref<288x32xf32, #tpu.memory_space<vmem>>, vector<288x32xf32>
    %cst_203 = arith.constant dense<0.000000e+00> : vector<64x32xf32>
    %147 = tpu.matmul %145, %146, %cst_203 {dimension_numbers = #tpu.dot_dimension_numbers<[1], [0], [0], [1], [0, 0, 1, 1], [], []>} : vector<64x288xf32>, vector<288x32xf32>, vector<64x32xf32> -> vector<64x32xf32>
    %c0_204 = arith.constant 0 : index
    %c0_205 = arith.constant 0 : index
    %148 = vector.load %arg7[%c0_204, %c0_205] : memref<1x32xf32, #tpu.memory_space<vmem>>, vector<1x32xf32>
    %149 = vector.broadcast %148 : vector<1x32xf32> to vector<64x32xf32>
    %150 = arith.addf %147, %149 : vector<64x32xf32>
    %151 = vector.shape_cast %150 : vector<64x32xf32> to vector<1x8x8x32xf32>
    %152 = arith.addf %151, %37 : vector<1x8x8x32xf32>
    %c0_206 = arith.constant 0 : index
    %c0_207 = arith.constant 0 : index
    %c0_208 = arith.constant 0 : index
    %c0_209 = arith.constant 0 : index
    %153 = vector.load %arg8[%c0_206, %c0_207, %c0_208, %c0_209] : memref<1x8x8x32xf32, #tpu.memory_space<vmem>>, vector<1x8x8x32xf32>
    tpu.vector_store %arg8[%c0_206, %c0_207, %c0_208, %c0_209], %152 {strides = array<i32>} : memref<1x8x8x32xf32, #tpu.memory_space<vmem>>, vector<1x8x8x32xf32>,
    return
  }
  func.func @transform_0(%arg0: i32) -> (i32, i32, i32, i32) {
    %c0_i32 = arith.constant 0 : i32
    %c0_i32_0 = arith.constant 0 : i32
    %c0_i32_1 = arith.constant 0 : i32
    %c0_i32_2 = arith.constant 0 : i32
    return %arg0, %c0_i32, %c0_i32_0, %c0_i32_1 : i32, i32, i32, i32
  }
  func.func @transform_1(%arg0: i32) -> (i32, i32) {
    %c0_i32 = arith.constant 0 : i32
    %c0_i32_0 = arith.constant 0 : i32
    %c0_i32_1 = arith.constant 0 : i32
    return %c0_i32, %c0_i32_0 : i32, i32
  }
  func.func @transform_2(%arg0: i32) -> (i32, i32) {
    %c0_i32 = arith.constant 0 : i32
    %c0_i32_0 = arith.constant 0 : i32
    %c0_i32_1 = arith.constant 0 : i32
    return %c0_i32, %c0_i32_0 : i32, i32
  }
  func.func @transform_3(%arg0: i32) -> (i32, i32) {
    %c0_i32 = arith.constant 0 : i32
    %c0_i32_0 = arith.constant 0 : i32
    %c0_i32_1 = arith.constant 0 : i32
    return %c0_i32, %c0_i32_0 : i32, i32
  }
  func.func @transform_4(%arg0: i32) -> (i32, i32) {
    %c0_i32 = arith.constant 0 : i32
    %c0_i32_0 = arith.constant 0 : i32
    %c0_i32_1 = arith.constant 0 : i32
    return %c0_i32, %c0_i32_0 : i32, i32
  }
  func.func @transform_5(%arg0: i32) -> (i32, i32) {
    %c0_i32 = arith.constant 0 : i32
    %c0_i32_0 = arith.constant 0 : i32
    %c0_i32_1 = arith.constant 0 : i32
    return %c0_i32, %c0_i32_0 : i32, i32
  }
  func.func @transform_6(%arg0: i32) -> (i32, i32) {
    %c0_i32 = arith.constant 0 : i32
    %c0_i32_0 = arith.constant 0 : i32
    %c0_i32_1 = arith.constant 0 : i32
    return %c0_i32, %c0_i32_0 : i32, i32
  }
  func.func @transform_7(%arg0: i32) -> (i32, i32, i32, i32) {
    %c0_i32 = arith.constant 0 : i32
    %c0_i32_0 = arith.constant 0 : i32
    %c0_i32_1 = arith.constant 0 : i32
    %c0_i32_2 = arith.constant 0 : i32
    return %arg0, %c0_i32, %c0_i32_0, %c0_i32_1 : i32, i32, i32, i32
  }
}

</mosaic_0001>

<llo_original>
// kernel: tpu_custom_call.1
$region0: #{tpu_custom_call.1}
  #allocation0 [shape = 'u32[]', space=smem, size = 0x4, offset = 0x4, fixed_abs, tag = 'smem constant byte address 0x4 - core index']
  #allocation1 [shape = 'u32[144,128]{1,0:T(1,128)}', space=vmem, size = 0x12000, scoped, tag = 'internal scratch']
  #allocation2 [shape = 'f32[1,10,10,32]{3,2,1,0:T(8,128)}', space=vmem, size = 0x14000, scoped, tag = 'scratch operand']
  #allocation3 [shape = 'f32[64,288]{1,0:T(8,128)}', space=vmem, size = 0x18000, scoped, tag = 'scratch operand']
  %s0 = inlined_call_operand.vmem [shape: f32[2,8,8,32], index: 0, kind: input, shape index: {}]
  %s1 = inlined_call_operand.vmem [shape: f32[288,32], index: 1, kind: input, shape index: {}]
  %s2 = inlined_call_operand.vmem [shape: f32[1,32], index: 2, kind: input, shape index: {}]
  %s3 = inlined_call_operand.vmem [shape: f32[288,32], index: 3, kind: input, shape index: {}]
  %s4 = inlined_call_operand.vmem [shape: f32[1,32], index: 4, kind: input, shape index: {}]
  %s5 = inlined_call_operand.vmem [shape: f32[288,32], index: 5, kind: input, shape index: {}]
  %s6 = inlined_call_operand.vmem [shape: f32[1,32], index: 6, kind: input, shape index: {}]
  %s7 = inlined_call_operand.hbm [shape: f32[2,8,8,32], index: 7, kind: output, shape index: {}]
  %s8 = sld [smem:[#allocation0]]
  $region61: #{tpu_custom_call.1} parent=0
    _
  %s10 = ssub.s32 1, %s8
  %s11 = scalar_select 0, %s10, %s8
  $region1: #{tpu_custom_call.1} parent=0
    #allocation4 [shape = 'u8[65536]{0}', space=vmem, size = 0x10000, scoped, tag = 'output window, operand 0']
    #allocation5 [shape = 's32[2]{0}', space=sflag, size = 0x8, scoped, tag = 'scoped memory for tpu_custom_call.1']
    %12 = vsyncpa [#allocation5], 0
    %s13 = scalar_lea.sflag [#allocation5], 1
    %14 = vsyncpa %s13, 0
    loop: start=0, step=1, limit=4
    $region2: #{tpu_custom_call.1} parent=1 // loop_pre_header
      _
    $region3: #{tpu_custom_call.1} parent=1 // loop_header
      %s16 = sphi 0, %s20
      %p17 = scmp.ge.s32.totalorder %s16, 4
      %s26 = sphi 0, %s28
      %s29 = sphi 0, %s26
      %s30 = sphi 0, %s29
      %s46 = sphi 0, %s30
      %s50 = sphi 0, %s50
      %s52 = sphi 0, %s50
      %s53 = sphi 0, %s52
      %s67 = sphi 0, %s53
      %s71 = sphi 0, %s71
      %s73 = sphi 0, %s71
      %s74 = sphi 0, %s73
      %s88 = sphi 0, %s74
      %s92 = sphi 0, %s92
      %s94 = sphi 0, %s92
      %s95 = sphi 0, %s94
      %s109 = sphi 0, %s95
      %s113 = sphi 0, %s113
      %s115 = sphi 0, %s113
      %s116 = sphi 0, %s115
      %s130 = sphi 0, %s116
      %s134 = sphi 0, %s134
      %s136 = sphi 0, %s134
      %s137 = sphi 0, %s136
      %s151 = sphi 0, %s137
      %s155 = sphi 0, %s155
      %s157 = sphi 0, %s155
      %s158 = sphi 0, %s157
      %s172 = sphi 0, %s158
      %s178 = sphi 0, %s180
      %s181 = sphi 0, %s178
      %s182 = sphi 0, %s181
      %s198 = sphi 0, %s182
    $region4: #{tpu_custom_call.1} parent=1 // loop_header_branch
      %19 = sbr.rel (%p17) target = $region8
    $region5: #{tpu_custom_call.1} parent=1 // loop_body
      %s21 = ssub.s32 %s16, 1
      %s22 = ssub.s32 %s16, 2
      %s23 = sadd.s32 %s16, 1
      %s24 = ssub.s32 %s16, %s23
      %p25 = scmp.eq.s32.totalorder %s24, 0
      %s27 = sadd.s32 %s26, 1
      %s28 = scalar_select %p25, %s26, %s27
      %p31 = pneg %p25
      %p32 = scmp.eq.s32.totalorder %s16, 1
      %p33 = por %p31, %p32
      %p34 = scmp.ne.s32.totalorder %s26, %s29
      %p35 = scmp.eq.s32.totalorder %s16, 0
      %p36 = por %p34, %p35
      %p37 = scmp.ne.s32.totalorder %s26, %s29
      %p38 = scmp.eq.s32.totalorder %s21, 1
      %p39 = por %p37, %p38
      %p40 = scmp.ne.s32.totalorder %s29, %s30
      %p41 = scmp.eq.s32.totalorder %s21, 0
      %p42 = por %p40, %p41
      %p43 = scmp.ne.s32.totalorder %s29, %s30
      %p44 = scmp.eq.s32.totalorder %s22, 1
      %p45 = por %p43, %p44
      %p47 = scmp.ne.s32.totalorder %s30, %s46
      %p48 = scmp.eq.s32.totalorder %s22, 0
      %p49 = por %p47, %p48
      %s51 = sadd.s32 %s50, 1
      %p54 = scmp.eq.s32.totalorder %s16, 1
      %p55 = scmp.ne.s32.totalorder %s50, %s52
      %p56 = scmp.eq.s32.totalorder %s16, 0
      %p57 = por %p55, %p56
      %p58 = scmp.ne.s32.totalorder %s50, %s52
      %p59 = scmp.eq.s32.totalorder %s21, 1
      %p60 = por %p58, %p59
      %p61 = scmp.ne.s32.totalorder %s52, %s53
      %p62 = scmp.eq.s32.totalorder %s21, 0
      %p63 = por %p61, %p62
      %p64 = scmp.ne.s32.totalorder %s52, %s53
      %p65 = scmp.eq.s32.totalorder %s22, 1
      %p66 = por %p64, %p65
      %p68 = scmp.ne.s32.totalorder %s53, %s67
      %p69 = scmp.eq.s32.totalorder %s22, 0
      %p70 = por %p68, %p69
      %s72 = sadd.s32 %s71, 1
      %p75 = scmp.eq.s32.totalorder %s16, 1
      %p76 = scmp.ne.s32.totalorder %s71, %s73
      %p77 = scmp.eq.s32.totalorder %s16, 0
      %p78 = por %p76, %p77
      %p79 = scmp.ne.s32.totalorder %s71, %s73
      %p80 = scmp.eq.s32.totalorder %s21, 1
      %p81 = por %p79, %p80
      %p82 = scmp.ne.s32.totalorder %s73, %s74
      %p83 = scmp.eq.s32.totalorder %s21, 0
      %p84 = por %p82, %p83
      %p85 = scmp.ne.s32.totalorder %s73, %s74
      %p86 = scmp.eq.s32.totalorder %s22, 1
      %p87 = por %p85, %p86
      %p89 = scmp.ne.s32.totalorder %s74, %s88
      %p90 = scmp.eq.s32.totalorder %s22, 0
      %p91 = por %p89, %p90
      %s93 = sadd.s32 %s92, 1
      %p96 = scmp.eq.s32.totalorder %s16, 1
      %p97 = scmp.ne.s32.totalorder %s92, %s94
      %p98 = scmp.eq.s32.totalorder %s16, 0
      %p99 = por %p97, %p98
      %p100 = scmp.ne.s32.totalorder %s92, %s94
      %p101 = scmp.eq.s32.totalorder %s21, 1
      %p102 = por %p100, %p101
      %p103 = scmp.ne.s32.totalorder %s94, %s95
      %p104 = scmp.eq.s32.totalorder %s21, 0
      %p105 = por %p103, %p104
      %p106 = scmp.ne.s32.totalorder %s94, %s95
      %p107 = scmp.eq.s32.totalorder %s22, 1
      %p108 = por %p106, %p107
      %p110 = scmp.ne.s32.totalorder %s95, %s109
      %p111 = scmp.eq.s32.totalorder %s22, 0
      %p112 = por %p110, %p111
      %s114 = sadd.s32 %s113, 1
      %p117 = scmp.eq.s32.totalorder %s16, 1
      %p118 = scmp.ne.s32.totalorder %s113, %s115
      %p119 = scmp.eq.s32.totalorder %s16, 0
      %p120 = por %p118, %p119
      %p121 = scmp.ne.s32.totalorder %s113, %s115
      %p122 = scmp.eq.s32.totalorder %s21, 1
      %p123 = por %p121, %p122
      %p124 = scmp.ne.s32.totalorder %s115, %s116
      %p125 = scmp.eq.s32.totalorder %s21, 0
      %p126 = por %p124, %p125
      %p127 = scmp.ne.s32.totalorder %s115, %s116
      %p128 = scmp.eq.s32.totalorder %s22, 1
      %p129 = por %p127, %p128
      %p131 = scmp.ne.s32.totalorder %s116, %s130
      %p132 = scmp.eq.s32.totalorder %s22, 0
      %p133 = por %p131, %p132
      %s135 = sadd.s32 %s134, 1
      %p138 = scmp.eq.s32.totalorder %s16, 1
      %p139 = scmp.ne.s32.totalorder %s134, %s136
      %p140 = scmp.eq.s32.totalorder %s16, 0
      %p141 = por %p139, %p140
      %p142 = scmp.ne.s32.totalorder %s134, %s136
      %p143 = scmp.eq.s32.totalorder %s21, 1
      %p144 = por %p142, %p143
      %p145 = scmp.ne.s32.totalorder %s136, %s137
      %p146 = scmp.eq.s32.totalorder %s21, 0
      %p147 = por %p145, %p146
      %p148 = scmp.ne.s32.totalorder %s136, %s137
      %p149 = scmp.eq.s32.totalorder %s22, 1
      %p150 = por %p148, %p149
      %p152 = scmp.ne.s32.totalorder %s137, %s151
      %p153 = scmp.eq.s32.totalorder %s22, 0
      %p154 = por %p152, %p153
      %s156 = sadd.s32 %s155, 1
      %p159 = scmp.eq.s32.totalorder %s16, 1
      %p160 = scmp.ne.s32.totalorder %s155, %s157
      %p161 = scmp.eq.s32.totalorder %s16, 0
      %p162 = por %p160, %p161
      %p163 = scmp.ne.s32.totalorder %s155, %s157
      %p164 = scmp.eq.s32.totalorder %s21, 1
      %p165 = por %p163, %p164
      %p166 = scmp.ne.s32.totalorder %s157, %s158
      %p167 = scmp.eq.s32.totalorder %s21, 0
      %p168 = por %p166, %p167
      %p169 = scmp.ne.s32.totalorder %s157, %s158
      %p170 = scmp.eq.s32.totalorder %s22, 1
      %p171 = por %p169, %p170
      %p173 = scmp.ne.s32.totalorder %s158, %s172
      %p174 = scmp.eq.s32.totalorder %s22, 0
      %p175 = por %p173, %p174
      %s176 = ssub.s32 %s16, %s23
      %p177 = scmp.eq.s32.totalorder %s176, 0
      %s179 = sadd.s32 %s178, 1
      %s180 = scalar_select %p177, %s178, %s179
      %p183 = pneg %p177
      %p184 = scmp.eq.s32.totalorder %s16, 1
      %p185 = por %p183, %p184
      %p186 = scmp.ne.s32.totalorder %s178, %s181
      %p187 = scmp.eq.s32.totalorder %s16, 0
      %p188 = por %p186, %p187
      %p189 = scmp.ne.s32.totalorder %s178, %s181
      %p190 = scmp.eq.s32.totalorder %s21, 1
      %p191 = por %p189, %p190
      %p192 = scmp.ne.s32.totalorder %s181, %s182
      %p193 = scmp.eq.s32.totalorder %s21, 0
      %p194 = por %p192, %p193
      %p195 = scmp.ne.s32.totalorder %s181, %s182
      %p196 = scmp.eq.s32.totalorder %s22, 1
      %p197 = por %p195, %p196
      %p199 = scmp.ne.s32.totalorder %s182, %s198
      %p200 = scmp.eq.s32.totalorder %s22, 0
      %p201 = por %p199, %p200
      %p202 = scmp.le.s32.totalorder 1, %s16
      %p203 = scmp.lt.s32.totalorder %s16, 3
      %p204 = pnand %p202, %p203
      %p205 = pneg %p204
      // Predicated region
      $region9: #{tpu_custom_call.1} parent=5 // pred_check
        _
      $region10: #{tpu_custom_call.1} parent=5 // pred_check_branch
        %207 = sbr.rel (%p204) target = $region12
      $region11: #{tpu_custom_call.1} parent=5 // pred_region
        %s208 = ssub.s32 %s16, 1
        // Predicated region
        $region13: #{tpu_custom_call.1} parent=11 // pred_check
          %p209 = pneg %p63
        $region14: #{tpu_custom_call.1} parent=11 // pred_check_branch
          %211 = sbr.rel (%p209) target = $region16
        $region15: #{tpu_custom_call.1} parent=11 // pred_region
          _
        $region16: #{tpu_custom_call.1} parent=11 // pred_fallthru
          _
        // Predicated region
        $region17: #{tpu_custom_call.1} parent=11 // pred_check
          %p212 = pneg %p84
        $region18: #{tpu_custom_call.1} parent=11 // pred_check_branch
          %214 = sbr.rel (%p212) target = $region20
        $region19: #{tpu_custom_call.1} parent=11 // pred_region
          _
        $region20: #{tpu_custom_call.1} parent=11 // pred_fallthru
          _
        // Predicated region
        $region21: #{tpu_custom_call.1} parent=11 // pred_check
          %p215 = pneg %p105
        $region22: #{tpu_custom_call.1} parent=11 // pred_check_branch
          %217 = sbr.rel (%p215) target = $region24
        $region23: #{tpu_custom_call.1} parent=11 // pred_region
          _
        $region24: #{tpu_custom_call.1} parent=11 // pred_fallthru
          _
        // Predicated region
        $region25: #{tpu_custom_call.1} parent=11 // pred_check
          %p218 = pneg %p126
        $region26: #{tpu_custom_call.1} parent=11 // pred_check_branch
          %220 = sbr.rel (%p218) target = $region28
        $region27: #{tpu_custom_call.1} parent=11 // pred_region
          _
        $region28: #{tpu_custom_call.1} parent=11 // pred_fallthru
          _
        // Predicated region
        $region29: #{tpu_custom_call.1} parent=11 // pred_check
          %p221 = pneg %p147
        $region30: #{tpu_custom_call.1} parent=11 // pred_check_branch
          %223 = sbr.rel (%p221) target = $region32
        $region31: #{tpu_custom_call.1} parent=11 // pred_region
          _
        $region32: #{tpu_custom_call.1} parent=11 // pred_fallthru
          _
        // Predicated region
        $region33: #{tpu_custom_call.1} parent=11 // pred_check
          %p224 = pneg %p168
        $region34: #{tpu_custom_call.1} parent=11 // pred_check_branch
          %226 = sbr.rel (%p224) target = $region36
        $region35: #{tpu_custom_call.1} parent=11 // pred_region
          _
        $region36: #{tpu_custom_call.1} parent=11 // pred_fallthru
          _
      $region12: #{tpu_custom_call.1} parent=5 // pred_fallthru
        _
      %p227 = scmp.lt.s32.totalorder %s16, 2
      // Predicated region
      $region37: #{tpu_custom_call.1} parent=5 // pred_check
        %p228 = pneg %p227
      $region38: #{tpu_custom_call.1} parent=5 // pred_check_branch
        %230 = sbr.rel (%p228) target = $region40
      $region39: #{tpu_custom_call.1} parent=5 // pred_region
        // Predicated region
        $region41: #{tpu_custom_call.1} parent=39 // pred_check
          %p231 = pneg %p36
        $region42: #{tpu_custom_call.1} parent=39 // pred_check_branch
          %233 = sbr.rel (%p231) target = $region44
        $region43: #{tpu_custom_call.1} parent=39 // pred_region
          %p234 = scmp.lt.s32.totalorder %s16, 1
          %s235 = scalar_select %p234, %s16, 1
          %s236 = smul.addr %s235, 8
          %s237 = smul.addr %s236, 8
          %s238 = scalar_lea.vmem %s0, %s237
        $region44: #{tpu_custom_call.1} parent=39 // pred_fallthru
          _
      $region40: #{tpu_custom_call.1} parent=5 // pred_fallthru
        _
      %p239 = scmp.le.s32.totalorder 1, %s16
      %p240 = scmp.lt.s32.totalorder %s16, 3
      %p241 = pnand %p239, %p240
      %p242 = pneg %p241
      // Predicated region
      $region45: #{tpu_custom_call.1} parent=5 // pred_check
        _
      $region46: #{tpu_custom_call.1} parent=5 // pred_check_branch
        %244 = sbr.rel (%p241) target = $region48
      $region47: #{tpu_custom_call.1} parent=5 // pred_region
        %s245 = ssub.s32 %s16, 1
        %p246 = scmp.lt.s32.totalorder %s21, 1
        %s247 = scalar_select %p246, %s21, 1
        %s248 = smul.addr %s247, 8
        %s249 = smul.addr %s248, 8
        %s250 = scalar_lea.vmem %s0, %s249
        %p251 = pneg %p42
        %p252 = pneg %p39
        %p253 = pneg %p63
        %p254 = pneg %p60
        %p255 = pneg %p84
        %p256 = pneg %p81
        %p257 = pneg %p105
        %p258 = pneg %p102
        %p259 = pneg %p126
        %p260 = pneg %p123
        %p261 = pneg %p147
        %p262 = pneg %p144
        %p263 = pneg %p168
        %p264 = pneg %p165
        %p265 = pneg %p194
        %p266 = pneg %p191
        %s267 = sand.u32 %s181, 1
        %s268 = scalar_lea.sflag [#allocation5], %s267
        %s269 = sand.u32 %s181, 1
        %s270 = smul.addr %s269, 64
        %s271 = scalar_lea.vmem [#allocation4], %s270
        %p272 = scmp.lt.s32.totalorder %s21, 1
        %s273 = scalar_select %p272, %s21, 1
        %s274 = smul.addr %s273, 8
        %s275 = smul.addr %s274, 8
        %s276 = scalar_lea.vmem %s0, %s275
        %vm277 = vcmask 261120
        %278 = vst.msk [vmem:[#allocation2] sm:$0xff] %vm277, 0.0
        %vm279 = vcmask 254976
        %280 = vst.msk [vmem:[#allocation2 + $0x8] sm:$0x3] %vm279, 0.0
        %281 = vst.msk [vmem:[#allocation2 + $0x10] sm:$0xff] %vm277, 0.0
        %282 = vst.msk [vmem:[#allocation2 + $0x18] sm:$0x3] %vm279, 0.0
        %283 = vst.msk [vmem:[#allocation2 + $0x20] sm:$0xff] %vm277, 0.0
        %284 = vst.msk [vmem:[#allocation2 + $0x28] sm:$0x3] %vm279, 0.0
        %285 = vst.msk [vmem:[#allocation2 + $0x30] sm:$0xff] %vm277, 0.0
        %286 = vst.msk [vmem:[#allocation2 + $0x38] sm:$0x3] %vm279, 0.0
        %287 = vst.msk [vmem:[#allocation2 + $0x40] sm:$0xff] %vm277, 0.0
        %288 = vst.msk [vmem:[#allocation2 + $0x48] sm:$0x3] %vm279, 0.0
        %289 = vst.msk [vmem:[#allocation2 + $0x50] sm:$0xff] %vm277, 0.0
        %290 = vst.msk [vmem:[#allocation2 + $0x58] sm:$0x3] %vm279, 0.0
        %291 = vst.msk [vmem:[#allocation2 + $0x60] sm:$0xff] %vm277, 0.0
        %292 = vst.msk [vmem:[#allocation2 + $0x68] sm:$0x3] %vm279, 0.0
        %293 = vst.msk [vmem:[#allocation2 + $0x70] sm:$0xff] %vm277, 0.0
        %294 = vst.msk [vmem:[#allocation2 + $0x78] sm:$0x3] %vm279, 0.0
        %295 = vst.msk [vmem:[#allocation2 + $0x80] sm:$0xff] %vm277, 0.0
        %296 = vst.msk [vmem:[#allocation2 + $0x88] sm:$0x3] %vm279, 0.0
        %297 = vst.msk [vmem:[#allocation2 + $0x90] sm:$0xff] %vm277, 0.0
        %298 = vst.msk [vmem:[#allocation2 + $0x98] sm:$0x3] %vm279, 0.0
        %v299 = vld [vmem:[%s276] sm:$0xff]
        %v300 = vld [vmem:[%s276 + $0x8] sm:$0xff]
        %v301 = vld [vmem:[%s276 + $0x10] sm:$0xff]
        %v302 = vld [vmem:[%s276 + $0x18] sm:$0xff]
        %v303 = vld [vmem:[%s276 + $0x20] sm:$0xff]
        %v304 = vld [vmem:[%s276 + $0x28] sm:$0xff]
        %v305 = vld [vmem:[%s276 + $0x30] sm:$0xff]
        %v306 = vld [vmem:[%s276 + $0x38] sm:$0xff]
        %s307 = scalar_lea.vmem [#allocation2], 16
        %308 = vst.msk [vmem:[%s307 + $0x1] sm:$0xff] %vm277, %v299
        %309 = vst.msk [vmem:[%s307 + $0x11] sm:$0xff] %vm277, %v300
        %310 = vst.msk [vmem:[%s307 + $0x21] sm:$0xff] %vm277, %v301
        %311 = vst.msk [vmem:[%s307 + $0x31] sm:$0xff] %vm277, %v302
        %312 = vst.msk [vmem:[%s307 + $0x41] sm:$0xff] %vm277, %v303
        %313 = vst.msk [vmem:[%s307 + $0x51] sm:$0xff] %vm277, %v304
        %314 = vst.msk [vmem:[%s307 + $0x61] sm:$0xff] %vm277, %v305
        %315 = vst.msk [vmem:[%s307 + $0x71] sm:$0xff] %vm277, %v306
        %v316 = vld [vmem:[#allocation2] sm:$0xff]
        %v317 = vld [vmem:[#allocation2 + $0x10] sm:$0xff]
        %v318 = vld [vmem:[#allocation2 + $0x20] sm:$0xff]
        %v319 = vld [vmem:[#allocation2 + $0x30] sm:$0xff]
        %v320 = vld [vmem:[#allocation2 + $0x40] sm:$0xff]
        %v321 = vld [vmem:[#allocation2 + $0x50] sm:$0xff]
        %v322 = vld [vmem:[#allocation2 + $0x60] sm:$0xff]
        %v323 = vld [vmem:[#allocation2 + $0x70] sm:$0xff]
        %324 = vst.msk [vmem:[#allocation3] sm:$0xff] %vm277, %v316
        %325 = vst.msk [vmem:[#allocation3 + $0x18] sm:$0xff] %vm277, %v317
        %326 = vst.msk [vmem:[#allocation3 + $0x30] sm:$0xff] %vm277, %v318
        %327 = vst.msk [vmem:[#allocation3 + $0x48] sm:$0xff] %vm277, %v319
        %328 = vst.msk [vmem:[#allocation3 + $0x60] sm:$0xff] %vm277, %v320
        %329 = vst.msk [vmem:[#allocation3 + $0x78] sm:$0xff] %vm277, %v321
        %330 = vst.msk [vmem:[#allocation3 + $0x90] sm:$0xff] %vm277, %v322
        %331 = vst.msk [vmem:[#allocation3 + $0xa8] sm:$0xff] %vm277, %v323
        %v332 = vld [vmem:[#allocation2 + $0x1] sm:$0xff]
        %v333 = vld [vmem:[#allocation2 + $0x11] sm:$0xff]
        %v334 = vld [vmem:[#allocation2 + $0x21] sm:$0xff]
        %v335 = vld [vmem:[#allocation2 + $0x31] sm:$0xff]
        %v336 = vld [vmem:[#allocation2 + $0x41] sm:$0xff]
        %v337 = vld [vmem:[#allocation2 + $0x51] sm:$0xff]
        %v338 = vld [vmem:[#allocation2 + $0x61] sm:$0xff]
        %v339 = vld [vmem:[#allocation2 + $0x71] sm:$0xff]
        %348 = vrot.lane.b32.xlu0 %v332, 32
        %v349 = vpop.permute.xlu0 %348
        %350 = vrot.lane.b32.xlu0 %v333, 32
        %v351 = vpop.permute.xlu0 %350
        %352 = vrot.lane.b32.xlu0 %v334, 32
        %v353 = vpop.permute.xlu0 %352
        %354 = vrot.lane.b32.xlu0 %v335, 32
        %v355 = vpop.permute.xlu0 %354
        %356 = vrot.lane.b32.xlu0 %v336, 32
        %v357 = vpop.permute.xlu0 %356
        %358 = vrot.lane.b32.xlu0 %v337, 32
        %v359 = vpop.permute.xlu0 %358
        %360 = vrot.lane.b32.xlu0 %v338, 32
        %v361 = vpop.permute.xlu0 %360
        %362 = vrot.lane.b32.xlu0 %v339, 32
        %v363 = vpop.permute.xlu0 %362
        %vm372 = vcmask 523520
        %373 = vst.msk [vmem:[#allocation3] sm:$0xff] %vm372, %v349
        %374 = vst.msk [vmem:[#allocation3 + $0x18] sm:$0xff] %vm372, %v351
        %375 = vst.msk [vmem:[#allocation3 + $0x30] sm:$0xff] %vm372, %v353
        %376 = vst.msk [vmem:[#allocation3 + $0x48] sm:$0xff] %vm372, %v355
        %377 = vst.msk [vmem:[#allocation3 + $0x60] sm:$0xff] %vm372, %v357
        %378 = vst.msk [vmem:[#allocation3 + $0x78] sm:$0xff] %vm372, %v359
        %379 = vst.msk [vmem:[#allocation3 + $0x90] sm:$0xff] %vm372, %v361
        %380 = vst.msk [vmem:[#allocation3 + $0xa8] sm:$0xff] %vm372, %v363
        %v381 = vld [vmem:[#allocation2 + $0x2] sm:$0xff]
        %v382 = vld [vmem:[#allocation2 + $0x12] sm:$0xff]
        %v383 = vld [vmem:[#allocation2 + $0x22] sm:$0xff]
        %v384 = vld [vmem:[#allocation2 + $0x32] sm:$0xff]
        %v385 = vld [vmem:[#allocation2 + $0x42] sm:$0xff]
        %v386 = vld [vmem:[#allocation2 + $0x52] sm:$0xff]
        %v387 = vld [vmem:[#allocation2 + $0x62] sm:$0xff]
        %v388 = vld [vmem:[#allocation2 + $0x72] sm:$0xff]
        %397 = vrot.lane.b32.xlu0 %v381, 64
        %v398 = vpop.permute.xlu0 %397
        %399 = vrot.lane.b32.xlu0 %v382, 64
        %v400 = vpop.permute.xlu0 %399
        %401 = vrot.lane.b32.xlu0 %v383, 64
        %v402 = vpop.permute.xlu0 %401
        %403 = vrot.lane.b32.xlu0 %v384, 64
        %v404 = vpop.permute.xlu0 %403
        %405 = vrot.lane.b32.xlu0 %v385, 64
        %v406 = vpop.permute.xlu0 %405
        %407 = vrot.lane.b32.xlu0 %v386, 64
        %v408 = vpop.permute.xlu0 %407
        %409 = vrot.lane.b32.xlu0 %v387, 64
        %v410 = vpop.permute.xlu0 %409
        %411 = vrot.lane.b32.xlu0 %v388, 64
        %v412 = vpop.permute.xlu0 %411
        %vm421 = vcmask 785920
        %422 = vst.msk [vmem:[#allocation3] sm:$0xff] %vm421, %v398
        %423 = vst.msk [vmem:[#allocation3 + $0x18] sm:$0xff] %vm421, %v400
        %424 = vst.msk [vmem:[#allocation3 + $0x30] sm:$0xff] %vm421, %v402
        %425 = vst.msk [vmem:[#allocation3 + $0x48] sm:$0xff] %vm421, %v404
        %426 = vst.msk [vmem:[#allocation3 + $0x60] sm:$0xff] %vm421, %v406
        %427 = vst.msk [vmem:[#allocation3 + $0x78] sm:$0xff] %vm421, %v408
        %428 = vst.msk [vmem:[#allocation3 + $0x90] sm:$0xff] %vm421, %v410
        %429 = vst.msk [vmem:[#allocation3 + $0xa8] sm:$0xff] %vm421, %v412
        %v430 = vld [vmem:[%s307] sm:$0xff]
        %v431 = vld [vmem:[%s307 + $0x10] sm:$0xff]
        %v432 = vld [vmem:[%s307 + $0x20] sm:$0xff]
        %v433 = vld [vmem:[%s307 + $0x30] sm:$0xff]
        %v434 = vld [vmem:[%s307 + $0x40] sm:$0xff]
        %v435 = vld [vmem:[%s307 + $0x50] sm:$0xff]
        %v436 = vld [vmem:[%s307 + $0x60] sm:$0xff]
        %v437 = vld [vmem:[%s307 + $0x70] sm:$0xff]
        %446 = vrot.lane.b32.xlu0 %v430, 96
        %v447 = vpop.permute.xlu0 %446
        %448 = vrot.lane.b32.xlu0 %v431, 96
        %v449 = vpop.permute.xlu0 %448
        %450 = vrot.lane.b32.xlu0 %v432, 96
        %v451 = vpop.permute.xlu0 %450
        %452 = vrot.lane.b32.xlu0 %v433, 96
        %v453 = vpop.permute.xlu0 %452
        %454 = vrot.lane.b32.xlu0 %v434, 96
        %v455 = vpop.permute.xlu0 %454
        %456 = vrot.lane.b32.xlu0 %v435, 96
        %v457 = vpop.permute.xlu0 %456
        %458 = vrot.lane.b32.xlu0 %v436, 96
        %v459 = vpop.permute.xlu0 %458
        %460 = vrot.lane.b32.xlu0 %v437, 96
        %v461 = vpop.permute.xlu0 %460
        %vm470 = vcmask 1048320
        %471 = vst.msk [vmem:[#allocation3] sm:$0xff] %vm470, %v447
        %472 = vst.msk [vmem:[#allocation3 + $0x18] sm:$0xff] %vm470, %v449
        %473 = vst.msk [vmem:[#allocation3 + $0x30] sm:$0xff] %vm470, %v451
        %474 = vst.msk [vmem:[#allocation3 + $0x48] sm:$0xff] %vm470, %v453
        %475 = vst.msk [vmem:[#allocation3 + $0x60] sm:$0xff] %vm470, %v455
        %476 = vst.msk [vmem:[#allocation3 + $0x78] sm:$0xff] %vm470, %v457
        %477 = vst.msk [vmem:[#allocation3 + $0x90] sm:$0xff] %vm470, %v459
        %478 = vst.msk [vmem:[#allocation3 + $0xa8] sm:$0xff] %vm470, %v461
        %v479 = vld [vmem:[%s307 + $0x1] sm:$0xff]
        %v480 = vld [vmem:[%s307 + $0x11] sm:$0xff]
        %v481 = vld [vmem:[%s307 + $0x21] sm:$0xff]
        %v482 = vld [vmem:[%s307 + $0x31] sm:$0xff]
        %v483 = vld [vmem:[%s307 + $0x41] sm:$0xff]
        %v484 = vld [vmem:[%s307 + $0x51] sm:$0xff]
        %v485 = vld [vmem:[%s307 + $0x61] sm:$0xff]
        %v486 = vld [vmem:[%s307 + $0x71] sm:$0xff]
        %487 = vst.msk [vmem:[#allocation3 + $0x8] sm:$0xff] %vm277, %v479
        %488 = vst.msk [vmem:[#allocation3 + $0x20] sm:$0xff] %vm277, %v480
        %489 = vst.msk [vmem:[#allocation3 + $0x38] sm:$0xff] %vm277, %v481
        %490 = vst.msk [vmem:[#allocation3 + $0x50] sm:$0xff] %vm277, %v482
        %491 = vst.msk [vmem:[#allocation3 + $0x68] sm:$0xff] %vm277, %v483
        %492 = vst.msk [vmem:[#allocation3 + $0x80] sm:$0xff] %vm277, %v484
        %493 = vst.msk [vmem:[#allocation3 + $0x98] sm:$0xff] %vm277, %v485
        %494 = vst.msk [vmem:[#allocation3 + $0xb0] sm:$0xff] %vm277, %v486
        %v495 = vld [vmem:[%s307 + $0x2] sm:$0xff]
        %v496 = vld [vmem:[%s307 + $0x12] sm:$0xff]
        %v497 = vld [vmem:[%s307 + $0x22] sm:$0xff]
        %v498 = vld [vmem:[%s307 + $0x32] sm:$0xff]
        %v499 = vld [vmem:[%s307 + $0x42] sm:$0xff]
        %v500 = vld [vmem:[%s307 + $0x52] sm:$0xff]
        %v501 = vld [vmem:[%s307 + $0x62] sm:$0xff]
        %v502 = vld [vmem:[%s307 + $0x72] sm:$0xff]
        %511 = vrot.lane.b32.xlu0 %v495, 32
        %v512 = vpop.permute.xlu0 %511
        %513 = vrot.lane.b32.xlu0 %v496, 32
        %v514 = vpop.permute.xlu0 %513
        %515 = vrot.lane.b32.xlu0 %v497, 32
        %v516 = vpop.permute.xlu0 %515
        %517 = vrot.lane.b32.xlu0 %v498, 32
        %v518 = vpop.permute.xlu0 %517
        %519 = vrot.lane.b32.xlu0 %v499, 32
        %v520 = vpop.permute.xlu0 %519
        %521 = vrot.lane.b32.xlu0 %v500, 32
        %v522 = vpop.permute.xlu0 %521
        %523 = vrot.lane.b32.xlu0 %v501, 32
        %v524 = vpop.permute.xlu0 %523
        %525 = vrot.lane.b32.xlu0 %v502, 32
        %v526 = vpop.permute.xlu0 %525
        %535 = vst.msk [vmem:[#allocation3 + $0x8] sm:$0xff] %vm372, %v512
        %536 = vst.msk [vmem:[#allocation3 + $0x20] sm:$0xff] %vm372, %v514
        %537 = vst.msk [vmem:[#allocation3 + $0x38] sm:$0xff] %vm372, %v516
        %538 = vst.msk [vmem:[#allocation3 + $0x50] sm:$0xff] %vm372, %v518
        %539 = vst.msk [vmem:[#allocation3 + $0x68] sm:$0xff] %vm372, %v520
        %540 = vst.msk [vmem:[#allocation3 + $0x80] sm:$0xff] %vm372, %v522
        %541 = vst.msk [vmem:[#allocation3 + $0x98] sm:$0xff] %vm372, %v524
        %542 = vst.msk [vmem:[#allocation3 + $0xb0] sm:$0xff] %vm372, %v526
        %s543 = scalar_lea.vmem [#allocation2], 32
        %v544 = vld [vmem:[%s543] sm:$0xff]
        %v545 = vld [vmem:[%s543 + $0x10] sm:$0xff]
        %v546 = vld [vmem:[%s543 + $0x20] sm:$0xff]
        %v547 = vld [vmem:[%s543 + $0x30] sm:$0xff]
        %v548 = vld [vmem:[%s543 + $0x40] sm:$0xff]
        %v549 = vld [vmem:[%s543 + $0x50] sm:$0xff]
        %v550 = vld [vmem:[%s543 + $0x60] sm:$0xff]
        %v551 = vld [vmem:[%s543 + $0x70] sm:$0xff]
        %560 = vrot.lane.b32.xlu0 %v544, 64
        %v561 = vpop.permute.xlu0 %560
        %562 = vrot.lane.b32.xlu0 %v545, 64
        %v563 = vpop.permute.xlu0 %562
        %564 = vrot.lane.b32.xlu0 %v546, 64
        %v565 = vpop.permute.xlu0 %564
        %566 = vrot.lane.b32.xlu0 %v547, 64
        %v567 = vpop.permute.xlu0 %566
        %568 = vrot.lane.b32.xlu0 %v548, 64
        %v569 = vpop.permute.xlu0 %568
        %570 = vrot.lane.b32.xlu0 %v549, 64
        %v571 = vpop.permute.xlu0 %570
        %572 = vrot.lane.b32.xlu0 %v550, 64
        %v573 = vpop.permute.xlu0 %572
        %574 = vrot.lane.b32.xlu0 %v551, 64
        %v575 = vpop.permute.xlu0 %574
        %584 = vst.msk [vmem:[#allocation3 + $0x8] sm:$0xff] %vm421, %v561
        %585 = vst.msk [vmem:[#allocation3 + $0x20] sm:$0xff] %vm421, %v563
        %586 = vst.msk [vmem:[#allocation3 + $0x38] sm:$0xff] %vm421, %v565
        %587 = vst.msk [vmem:[#allocation3 + $0x50] sm:$0xff] %vm421, %v567
        %588 = vst.msk [vmem:[#allocation3 + $0x68] sm:$0xff] %vm421, %v569
        %589 = vst.msk [vmem:[#allocation3 + $0x80] sm:$0xff] %vm421, %v571
        %590 = vst.msk [vmem:[#allocation3 + $0x98] sm:$0xff] %vm421, %v573
        %591 = vst.msk [vmem:[#allocation3 + $0xb0] sm:$0xff] %vm421, %v575
        %v592 = vld [vmem:[%s543 + $0x1] sm:$0xff]
        %v593 = vld [vmem:[%s543 + $0x11] sm:$0xff]
        %v594 = vld [vmem:[%s543 + $0x21] sm:$0xff]
        %v595 = vld [vmem:[%s543 + $0x31] sm:$0xff]
        %v596 = vld [vmem:[%s543 + $0x41] sm:$0xff]
        %v597 = vld [vmem:[%s543 + $0x51] sm:$0xff]
        %v598 = vld [vmem:[%s543 + $0x61] sm:$0xff]
        %v599 = vld [vmem:[%s543 + $0x71] sm:$0xff]
        %608 = vrot.lane.b32.xlu0 %v592, 96
        %v609 = vpop.permute.xlu0 %608
        %610 = vrot.lane.b32.xlu0 %v593, 96
        %v611 = vpop.permute.xlu0 %610
        %612 = vrot.lane.b32.xlu0 %v594, 96
        %v613 = vpop.permute.xlu0 %612
        %614 = vrot.lane.b32.xlu0 %v595, 96
        %v615 = vpop.permute.xlu0 %614
        %616 = vrot.lane.b32.xlu0 %v596, 96
        %v617 = vpop.permute.xlu0 %616
        %618 = vrot.lane.b32.xlu0 %v597, 96
        %v619 = vpop.permute.xlu0 %618
        %620 = vrot.lane.b32.xlu0 %v598, 96
        %v621 = vpop.permute.xlu0 %620
        %622 = vrot.lane.b32.xlu0 %v599, 96
        %v623 = vpop.permute.xlu0 %622
        %632 = vst.msk [vmem:[#allocation3 + $0x8] sm:$0xff] %vm470, %v609
        %633 = vst.msk [vmem:[#allocation3 + $0x20] sm:$0xff] %vm470, %v611
        %634 = vst.msk [vmem:[#allocation3 + $0x38] sm:$0xff] %vm470, %v613
        %635 = vst.msk [vmem:[#allocation3 + $0x50] sm:$0xff] %vm470, %v615
        %636 = vst.msk [vmem:[#allocation3 + $0x68] sm:$0xff] %vm470, %v617
        %637 = vst.msk [vmem:[#allocation3 + $0x80] sm:$0xff] %vm470, %v619
        %638 = vst.msk [vmem:[#allocation3 + $0x98] sm:$0xff] %vm470, %v621
        %639 = vst.msk [vmem:[#allocation3 + $0xb0] sm:$0xff] %vm470, %v623
        %v640 = vld [vmem:[%s543 + $0x2] sm:$0xff]
        %v641 = vld [vmem:[%s543 + $0x12] sm:$0xff]
        %v642 = vld [vmem:[%s543 + $0x22] sm:$0xff]
        %v643 = vld [vmem:[%s543 + $0x32] sm:$0xff]
        %v644 = vld [vmem:[%s543 + $0x42] sm:$0xff]
        %v645 = vld [vmem:[%s543 + $0x52] sm:$0xff]
        %v646 = vld [vmem:[%s543 + $0x62] sm:$0xff]
        %v647 = vld [vmem:[%s543 + $0x72] sm:$0xff]
        %648 = vst.msk [vmem:[#allocation3 + $0x10] sm:$0xff] %vm277, %v640
        %649 = vst.msk [vmem:[#allocation3 + $0x28] sm:$0xff] %vm277, %v641
        %650 = vst.msk [vmem:[#allocation3 + $0x40] sm:$0xff] %vm277, %v642
        %651 = vst.msk [vmem:[#allocation3 + $0x58] sm:$0xff] %vm277, %v643
        %652 = vst.msk [vmem:[#allocation3 + $0x70] sm:$0xff] %vm277, %v644
        %653 = vst.msk [vmem:[#allocation3 + $0x88] sm:$0xff] %vm277, %v645
        %654 = vst.msk [vmem:[#allocation3 + $0xa0] sm:$0xff] %vm277, %v646
        %655 = vst.msk [vmem:[#allocation3 + $0xb8] sm:$0xff] %vm277, %v647
        %v656 = vld [vmem:[#allocation3] sm:$0xff]
        %v657 = vld [vmem:[#allocation3 + $0x8] sm:$0xff]
        %v658 = vld [vmem:[#allocation3 + $0x10] sm:$0xff]
        %v659 = vld [vmem:[#allocation3 + $0x18] sm:$0xff]
        %v660 = vld [vmem:[#allocation3 + $0x20] sm:$0xff]
        %v661 = vld [vmem:[#allocation3 + $0x28] sm:$0xff]
        %v662 = vld [vmem:[#allocation3 + $0x30] sm:$0xff]
        %v663 = vld [vmem:[#allocation3 + $0x38] sm:$0xff]
        %v664 = vld [vmem:[#allocation3 + $0x40] sm:$0xff]
        %v665 = vld [vmem:[#allocation3 + $0x48] sm:$0xff]
        %v666 = vld [vmem:[#allocation3 + $0x50] sm:$0xff]
        %v667 = vld [vmem:[#allocation3 + $0x58] sm:$0xff]
        %v668 = vld [vmem:[#allocation3 + $0x60] sm:$0xff]
        %v669 = vld [vmem:[#allocation3 + $0x68] sm:$0xff]
        %v670 = vld [vmem:[#allocation3 + $0x70] sm:$0xff]
        %v671 = vld [vmem:[#allocation3 + $0x78] sm:$0xff]
        %v672 = vld [vmem:[#allocation3 + $0x80] sm:$0xff]
        %v673 = vld [vmem:[#allocation3 + $0x88] sm:$0xff]
        %v674 = vld [vmem:[#allocation3 + $0x90] sm:$0xff]
        %v675 = vld [vmem:[#allocation3 + $0x98] sm:$0xff]
        %v676 = vld [vmem:[#allocation3 + $0xa0] sm:$0xff]
        %v677 = vld [vmem:[#allocation3 + $0xa8] sm:$0xff]
        %v678 = vld [vmem:[#allocation3 + $0xb0] sm:$0xff]
        %v679 = vld [vmem:[#allocation3 + $0xb8] sm:$0xff]
        %v680 = vld [vmem:[%s1] sm:$0xff]
        %v681 = vld [vmem:[%s1 + $0x8] sm:$0xff]
        %v682 = vld [vmem:[%s1 + $0x10] sm:$0xff]
        %v683 = vld [vmem:[%s1 + $0x18] sm:$0xff]
        %v684 = vld [vmem:[%s1 + $0x20] sm:$0xff]
        %v685 = vld [vmem:[%s1 + $0x28] sm:$0xff]
        %v686 = vld [vmem:[%s1 + $0x30] sm:$0xff]
        %v687 = vld [vmem:[%s1 + $0x38] sm:$0xff]
        %v688 = vld [vmem:[%s1 + $0x40] sm:$0xff]
        %v689 = vld [vmem:[%s1 + $0x48] sm:$0xff]
        %v690 = vld [vmem:[%s1 + $0x50] sm:$0xff]
        %v691 = vld [vmem:[%s1 + $0x58] sm:$0xff]
        %v692 = vld [vmem:[%s1 + $0x60] sm:$0xff]
        %v693 = vld [vmem:[%s1 + $0x68] sm:$0xff]
        %v694 = vld [vmem:[%s1 + $0x70] sm:$0xff]
        %v695 = vld [vmem:[%s1 + $0x78] sm:$0xff]
        %v696 = vld [vmem:[%s1 + $0x80] sm:$0xff]
        %v697 = vld [vmem:[%s1 + $0x88] sm:$0xff]
        %v698 = vld [vmem:[%s1 + $0x90] sm:$0xff]
        %v699 = vld [vmem:[%s1 + $0x98] sm:$0xff]
        %v700 = vld [vmem:[%s1 + $0xa0] sm:$0xff]
        %v701 = vld [vmem:[%s1 + $0xa8] sm:$0xff]
        %v702 = vld [vmem:[%s1 + $0xb0] sm:$0xff]
        %v703 = vld [vmem:[%s1 + $0xb8] sm:$0xff]
        %v704 = vld [vmem:[%s1 + $0xc0] sm:$0xff]
        %v705 = vld [vmem:[%s1 + $0xc8] sm:$0xff]
        %v706 = vld [vmem:[%s1 + $0xd0] sm:$0xff]
        %v707 = vld [vmem:[%s1 + $0xd8] sm:$0xff]
        %v708 = vld [vmem:[%s1 + $0xe0] sm:$0xff]
        %v709 = vld [vmem:[%s1 + $0xe8] sm:$0xff]
        %v710 = vld [vmem:[%s1 + $0xf0] sm:$0xff]
        %v711 = vld [vmem:[%s1 + $0xf8] sm:$0xff]
        %v712 = vld [vmem:[%s1 + $0x100] sm:$0xff]
        %v713 = vld [vmem:[%s1 + $0x108] sm:$0xff]
        %v714 = vld [vmem:[%s1 + $0x110] sm:$0xff]
        %v715 = vld [vmem:[%s1 + $0x118] sm:$0xff]
        %v716 = vld [vmem:[%s2] sm:$0x1]
        %v718 = vlaneseq
        %v719 = vshrl.u32 %v718, 7
        %v720 = vsub.s32 0, %v719
        %v721 = vrot.slane %v716, %v720
        %v724 = vsel %vm277, %v658, 0
        %v727 = vsel %vm277, %v661, 0
        %v730 = vsel %vm277, %v664, 0
        %v733 = vsel %vm277, %v667, 0
        %v736 = vsel %vm277, %v670, 0
        %v739 = vsel %vm277, %v673, 0
        %v742 = vsel %vm277, %v676, 0
        %v745 = vsel %vm277, %v679, 0
        %747 = vmatprep.subr.mxu0 0.0
        %748 = vmatpush1.msra.mxu0 %v680
        %749 = vmatprep.subr.mxu0 0.0
        %750 = vmatpush1.msra.mxu0 %v681
        %751 = vmatprep.subr.mxu0 0.0
        %752 = vmatpush1.msra.mxu0 %v682
        %753 = vmatprep.subr.mxu0 0.0
        %754 = vmatpush1.msra.mxu0 %v683
        %755 = vmatprep.subr.mxu0 0.0
        %756 = vmatpush1.msra.mxu0 %v684
        %757 = vmatprep.subr.mxu0 0.0
        %758 = vmatpush1.msra.mxu0 %v685
        %759 = vmatprep.subr.mxu0 0.0
        %760 = vmatpush1.msra.mxu0 %v686
        %761 = vmatprep.subr.mxu0 0.0
        %762 = vmatpush1.msra.mxu0 %v687
        %763 = vmatprep.subr.mxu0 0.0
        %764 = vmatpush1.msra.mxu0 %v688
        %765 = vmatprep.subr.mxu0 0.0
        %766 = vmatpush1.msra.mxu0 %v689
        %767 = vmatprep.subr.mxu0 0.0
        %768 = vmatpush1.msra.mxu0 %v690
        %769 = vmatprep.subr.mxu0 0.0
        %770 = vmatpush1.msra.mxu0 %v691
        %771 = vmatprep.subr.mxu0 0.0
        %772 = vmatpush1.msra.mxu0 %v692
        %773 = vmatprep.subr.mxu0 0.0
        %774 = vmatpush1.msra.mxu0 %v693
        %775 = vmatprep.subr.mxu0 0.0
        %776 = vmatpush1.msra.mxu0 %v694
        %777 = vmatprep.subr.mxu0 0.0
        %778 = vmatpush1.msra.mxu0 %v695
        %779 = vmatprep.subr.mxu0 0.0
        %780 = vmatpush1.msra.mxu0 %v696
        %781 = vmatprep.subr.mxu0 0.0
        %782 = vmatpush1.msra.mxu0 %v697
        %783 = vmatprep.subr.mxu0 0.0
        %784 = vmatpush1.msra.mxu0 %v698
        %785 = vmatprep.subr.mxu0 0.0
        %786 = vmatpush1.msra.mxu0 %v699
        %787 = vmatprep.subr.mxu0 0.0
        %788 = vmatpush1.msra.mxu0 %v700
        %789 = vmatprep.subr.mxu0 0.0
        %790 = vmatpush1.msra.mxu0 %v701
        %791 = vmatprep.subr.mxu0 0.0
        %792 = vmatpush1.msra.mxu0 %v702
        %793 = vmatprep.subr.mxu0 0.0
        %794 = vmatpush1.msra.mxu0 %v703
        %795 = vmatprep.subr.mxu0 0.0
        %796 = vmatpush1.msra.mxu0 %v704
        %797 = vmatprep.subr.mxu0 0.0
        %798 = vmatpush1.msra.mxu0 %v705
        %799 = vmatprep.subr.mxu0 0.0
        %800 = vmatpush1.msra.mxu0 %v706
        %801 = vmatprep.subr.mxu0 0.0
        %802 = vmatpush1.msra.mxu0 %v707
        %803 = vmatprep.subr.mxu0 0.0
        %804 = vmatpush1.msra.mxu0 %v708
        %805 = vmatprep.subr.mxu0 0.0
        %806 = vmatpush1.msra.mxu0 %v709
        %807 = vmatprep.subr.mxu0 0.0
        %808 = vmatpush1.msra.mxu0 %v710
        %809 = vmatprep.subr.mxu0 0.0
        %810 = vmatpush1.msra.mxu0 %v711
        %811 = vmatprep.mubr.f32.mxu0 %v657
        %812 = vmatmul.mubr.f32.gmra.mrb[0].mxu0 %v656
        %v813 = vpop.f32.mrb[0].mxu0
        %v814 = vadd.f32 %v721, %v813
        %v815 = vpop.f32.mrb[0].mxu0
        %816 = vmatprep.mubr.f32.mxu0 %v660
        %817 = vmatmul.mubr.f32.gmra.mrb[0].mxu0 %v659
        %v818 = vpop.f32.mrb[0].mxu0
        %v819 = vadd.f32 %v721, %v818
        %v820 = vpop.f32.mrb[0].mxu0
        %821 = vmatprep.mubr.f32.mxu0 %v663
        %822 = vmatmul.mubr.f32.gmra.mrb[0].mxu0 %v662
        %v823 = vpop.f32.mrb[0].mxu0
        %v824 = vadd.f32 %v721, %v823
        %v825 = vpop.f32.mrb[0].mxu0
        %826 = vmatprep.mubr.f32.mxu0 %v666
        %827 = vmatmul.mubr.f32.gmra.mrb[0].mxu0 %v665
        %v828 = vpop.f32.mrb[0].mxu0
        %v829 = vadd.f32 %v721, %v828
        %v830 = vpop.f32.mrb[0].mxu0
        %831 = vmatprep.mubr.f32.mxu0 %v669
        %832 = vmatmul.mubr.f32.gmra.mrb[0].mxu0 %v668
        %v833 = vpop.f32.mrb[0].mxu0
        %v834 = vadd.f32 %v721, %v833
        %v835 = vpop.f32.mrb[0].mxu0
        %836 = vmatprep.mubr.f32.mxu0 %v672
        %837 = vmatmul.mubr.f32.gmra.mrb[0].mxu0 %v671
        %v838 = vpop.f32.mrb[0].mxu0
        %v839 = vadd.f32 %v721, %v838
        %v840 = vpop.f32.mrb[0].mxu0
        %841 = vmatprep.mubr.f32.mxu0 %v675
        %842 = vmatmul.mubr.f32.gmra.mrb[0].mxu0 %v674
        %v843 = vpop.f32.mrb[0].mxu0
        %v844 = vadd.f32 %v721, %v843
        %v845 = vpop.f32.mrb[0].mxu0
        %846 = vmatprep.mubr.f32.mxu0 %v678
        %847 = vmatmul.mubr.f32.gmra.mrb[0].mxu0 %v677
        %v848 = vpop.f32.mrb[0].mxu0
        %v849 = vadd.f32 %v721, %v848
        %v850 = vpop.f32.mrb[0].mxu0
        %851 = vdwg.mxu0
        %852 = vmatprep.subr.mxu0 0.0
        %853 = vmatpush1.msra.mxu0 %v712
        %854 = vmatprep.subr.mxu0 0.0
        %855 = vmatpush1.msra.mxu0 %v713
        %856 = vmatprep.subr.mxu0 0.0
        %857 = vmatpush1.msra.mxu0 %v714
        %858 = vmatprep.subr.mxu0 0.0
        %859 = vmatpush1.msra.mxu0 %v715
        %860 = vmatprep.subr.mxu0 0.0
        %861 = vmatpush1.msra.mxu0 0.0
        %862 = vmatprep.subr.mxu0 0.0
        %863 = vmatpush1.msra.mxu0 0.0
        %864 = vmatprep.subr.mxu0 0.0
        %865 = vmatpush1.msra.mxu0 0.0
        %866 = vmatprep.subr.mxu0 0.0
        %867 = vmatpush1.msra.mxu0 0.0
        %868 = vmatprep.subr.mxu0 0.0
        %869 = vmatpush1.msra.mxu0 0.0
        %870 = vmatprep.subr.mxu0 0.0
        %871 = vmatpush1.msra.mxu0 0.0
        %872 = vmatprep.subr.mxu0 0.0
        %873 = vmatpush1.msra.mxu0 0.0
        %874 = vmatprep.subr.mxu0 0.0
        %875 = vmatpush1.msra.mxu0 0.0
        %876 = vmatprep.subr.mxu0 0.0
        %877 = vmatpush1.msra.mxu0 0.0
        %878 = vmatprep.subr.mxu0 0.0
        %879 = vmatpush1.msra.mxu0 0.0
        %880 = vmatprep.subr.mxu0 0.0
        %881 = vmatpush1.msra.mxu0 0.0
        %882 = vmatprep.subr.mxu0 0.0
        %883 = vmatpush1.msra.mxu0 0.0
        %884 = vmatprep.subr.mxu0 0.0
        %885 = vmatpush1.msra.mxu0 0.0
        %886 = vmatprep.subr.mxu0 0.0
        %887 = vmatpush1.msra.mxu0 0.0
        %888 = vmatprep.subr.mxu0 0.0
        %889 = vmatpush1.msra.mxu0 0.0
        %890 = vmatprep.subr.mxu0 0.0
        %891 = vmatpush1.msra.mxu0 0.0
        %892 = vmatprep.subr.mxu0 0.0
        %893 = vmatpush1.msra.mxu0 0.0
        %894 = vmatprep.subr.mxu0 0.0
        %895 = vmatpush1.msra.mxu0 0.0
        %896 = vmatprep.subr.mxu0 0.0
        %897 = vmatpush1.msra.mxu0 0.0
        %898 = vmatprep.subr.mxu0 0.0
        %899 = vmatpush1.msra.mxu0 0.0
        %900 = vmatprep.subr.mxu0 0.0
        %901 = vmatpush1.msra.mxu0 0.0
        %902 = vmatprep.subr.mxu0 0.0
        %903 = vmatpush1.msra.mxu0 0.0
        %904 = vmatprep.subr.mxu0 0.0
        %905 = vmatpush1.msra.mxu0 0.0
        %906 = vmatprep.subr.mxu0 0.0
        %907 = vmatpush1.msra.mxu0 0.0
        %908 = vmatprep.subr.mxu0 0.0
        %909 = vmatpush1.msra.mxu0 0.0
        %910 = vmatprep.subr.mxu0 0.0
        %911 = vmatpush1.msra.mxu0 0.0
        %912 = vmatprep.subr.mxu0 0.0
        %913 = vmatpush1.msra.mxu0 0.0
        %914 = vmatprep.subr.mxu0 0.0
        %915 = vmatpush1.msra.mxu0 0.0
        %916 = vmatprep.mubr.f32.mxu0 0.0
        %917 = vmatmul.mubr.f32.gmra.mrb[0].mxu0 %v724
        %v918 = vpop.f32.mrb[0].mxu0
        %v919 = vadd.f32 %v814, %v918
        %v920 = vpop.f32.mrb[0].mxu0
        %921 = vmatprep.mubr.f32.mxu0 0.0
        %922 = vmatmul.mubr.f32.gmra.mrb[0].mxu0 %v727
        %v923 = vpop.f32.mrb[0].mxu0
        %v924 = vadd.f32 %v819, %v923
        %v925 = vpop.f32.mrb[0].mxu0
        %926 = vmatprep.mubr.f32.mxu0 0.0
        %927 = vmatmul.mubr.f32.gmra.mrb[0].mxu0 %v730
        %v928 = vpop.f32.mrb[0].mxu0
        %v929 = vadd.f32 %v824, %v928
        %v930 = vpop.f32.mrb[0].mxu0
        %931 = vmatprep.mubr.f32.mxu0 0.0
        %932 = vmatmul.mubr.f32.gmra.mrb[0].mxu0 %v733
        %v933 = vpop.f32.mrb[0].mxu0
        %v934 = vadd.f32 %v829, %v933
        %v935 = vpop.f32.mrb[0].mxu0
        %936 = vmatprep.mubr.f32.mxu0 0.0
        %937 = vmatmul.mubr.f32.gmra.mrb[0].mxu0 %v736
        %v938 = vpop.f32.mrb[0].mxu0
        %v939 = vadd.f32 %v834, %v938
        %v940 = vpop.f32.mrb[0].mxu0
        %941 = vmatprep.mubr.f32.mxu0 0.0
        %942 = vmatmul.mubr.f32.gmra.mrb[0].mxu0 %v739
        %v943 = vpop.f32.mrb[0].mxu0
        %v944 = vadd.f32 %v839, %v943
        %v945 = vpop.f32.mrb[0].mxu0
        %946 = vmatprep.mubr.f32.mxu0 0.0
        %947 = vmatmul.mubr.f32.gmra.mrb[0].mxu0 %v742
        %v948 = vpop.f32.mrb[0].mxu0
        %v949 = vadd.f32 %v844, %v948
        %v950 = vpop.f32.mrb[0].mxu0
        %951 = vmatprep.mubr.f32.mxu0 0.0
        %952 = vmatmul.mubr.f32.gmra.mrb[0].mxu0 %v745
        %v953 = vpop.f32.mrb[0].mxu0
        %v954 = vadd.f32 %v849, %v953
        %v955 = vpop.f32.mrb[0].mxu0
        %956 = vdwg.mxu0
        %v957 = vsel %vm277, %v299, 0.0
        %v958 = vsel %vm277, %v300, 0.0
        %v959 = vadd.f32 %v957, %v958
        %v960 = vsel %vm277, %v301, 0.0
        %v961 = vadd.f32 %v959, %v960
        %v962 = vsel %vm277, %v302, 0.0
        %v963 = vadd.f32 %v961, %v962
        %v964 = vsel %vm277, %v303, 0.0
        %v965 = vadd.f32 %v963, %v964
        %v966 = vsel %vm277, %v304, 0.0
        %v967 = vadd.f32 %v965, %v966
        %v968 = vsel %vm277, %v305, 0.0
        %v969 = vadd.f32 %v967, %v968
        %v970 = vsel %vm277, %v306, 0.0
        %v971 = vadd.f32 %v969, %v970
        %v972 = vrot.slane %v971, 4
        %v973 = vadd.f32 %v971, %v972
        %v974 = vrot.slane %v973, 2
        %v975 = vadd.f32 %v973, %v974
        %v976 = vrot.slane %v975, 1
        %v977 = vadd.f32 %v975, %v976
        %v978 = vmul.f32 %v299, %v299
        %v979 = vmul.f32 %v300, %v300
        %v980 = vmul.f32 %v301, %v301
        %v981 = vmul.f32 %v302, %v302
        %v982 = vmul.f32 %v303, %v303
        %v983 = vmul.f32 %v304, %v304
        %v984 = vmul.f32 %v305, %v305
        %v985 = vmul.f32 %v306, %v306
        %v986 = vsel %vm277, %v978, 0.0
        %v987 = vsel %vm277, %v979, 0.0
        %v988 = vadd.f32 %v986, %v987
        %v989 = vsel %vm277, %v980, 0.0
        %v990 = vadd.f32 %v988, %v989
        %v991 = vsel %vm277, %v981, 0.0
        %v992 = vadd.f32 %v990, %v991
        %v993 = vsel %vm277, %v982, 0.0
        %v994 = vadd.f32 %v992, %v993
        %v995 = vsel %vm277, %v983, 0.0
        %v996 = vadd.f32 %v994, %v995
        %v997 = vsel %vm277, %v984, 0.0
        %v998 = vadd.f32 %v996, %v997
        %v999 = vsel %vm277, %v985, 0.0
        %v1000 = vadd.f32 %v998, %v999
        %v1001 = vrot.slane %v1000, 4
        %v1002 = vadd.f32 %v1000, %v1001
        %v1003 = vrot.slane %v1002, 2
        %v1004 = vadd.f32 %v1002, %v1003
        %v1005 = vrot.slane %v1004, 1
        %v1006 = vadd.f32 %v1004, %v1005
        %v1007 = vmul.f32 %v977, 0.015625
        %v1008 = vmul.f32 %v1006, 0.015625
        %v1009 = vmul.f32 %v1007, %v1007
        %v1010 = vsub.f32 %v1008, %v1009
        %v1011 = vmax.f32 %v1010, 0.0
        %v1012 = vsub.f32 %v299, %v1007
        %v1013 = vsub.f32 %v300, %v1007
        %v1014 = vsub.f32 %v301, %v1007
        %v1015 = vsub.f32 %v302, %v1007
        %v1016 = vsub.f32 %v303, %v1007
        %v1017 = vsub.f32 %v304, %v1007
        %v1018 = vsub.f32 %v305, %v1007
        %v1019 = vsub.f32 %v306, %v1007
        %v1020 = vadd.f32 %v1011, 1e-05
        %v1021 = vrsqrt.pop %v1020
        %v1022 = vmul.f32 %v1012, %v1021
        %v1023 = vmul.f32 %v1013, %v1021
        %v1024 = vmul.f32 %v1014, %v1021
        %v1025 = vmul.f32 %v1015, %v1021
        %v1026 = vmul.f32 %v1016, %v1021
        %v1027 = vmul.f32 %v1017, %v1021
        %v1028 = vmul.f32 %v1018, %v1021
        %v1029 = vmul.f32 %v1019, %v1021
        %v1030 = vmax.f32 %v1022, 0.0
        %v1031 = vmax.f32 %v1023, 0.0
        %v1032 = vmax.f32 %v1024, 0.0
        %v1033 = vmax.f32 %v1025, 0.0
        %v1034 = vmax.f32 %v1026, 0.0
        %v1035 = vmax.f32 %v1027, 0.0
        %v1036 = vmax.f32 %v1028, 0.0
        %v1037 = vmax.f32 %v1029, 0.0
        %1038 = vst.msk [vmem:[%s307 + $0x1] sm:$0xff] %vm277, %v1030
        %1039 = vst.msk [vmem:[%s307 + $0x11] sm:$0xff] %vm277, %v1031
        %1040 = vst.msk [vmem:[%s307 + $0x21] sm:$0xff] %vm277, %v1032
        %1041 = vst.msk [vmem:[%s307 + $0x31] sm:$0xff] %vm277, %v1033
        %1042 = vst.msk [vmem:[%s307 + $0x41] sm:$0xff] %vm277, %v1034
        %1043 = vst.msk [vmem:[%s307 + $0x51] sm:$0xff] %vm277, %v1035
        %1044 = vst.msk [vmem:[%s307 + $0x61] sm:$0xff] %vm277, %v1036
        %1045 = vst.msk [vmem:[%s307 + $0x71] sm:$0xff] %vm277, %v1037
        %v1046 = vld [vmem:[#allocation2] sm:$0xff]
        %v1047 = vld [vmem:[#allocation2 + $0x10] sm:$0xff]
        %v1048 = vld [vmem:[#allocation2 + $0x20] sm:$0xff]
        %v1049 = vld [vmem:[#allocation2 + $0x30] sm:$0xff]
        %v1050 = vld [vmem:[#allocation2 + $0x40] sm:$0xff]
        %v1051 = vld [vmem:[#allocation2 + $0x50] sm:$0xff]
        %v1052 = vld [vmem:[#allocation2 + $0x60] sm:$0xff]
        %v1053 = vld [vmem:[#allocation2 + $0x70] sm:$0xff]
        %1054 = vst.msk [vmem:[#allocation3] sm:$0xff] %vm277, %v1046
        %1055 = vst.msk [vmem:[#allocation3 + $0x18] sm:$0xff] %vm277, %v1047
        %1056 = vst.msk [vmem:[#allocation3 + $0x30] sm:$0xff] %vm277, %v1048
        %1057 = vst.msk [vmem:[#allocation3 + $0x48] sm:$0xff] %vm277, %v1049
        %1058 = vst.msk [vmem:[#allocation3 + $0x60] sm:$0xff] %vm277, %v1050
        %1059 = vst.msk [vmem:[#allocation3 + $0x78] sm:$0xff] %vm277, %v1051
        %1060 = vst.msk [vmem:[#allocation3 + $0x90] sm:$0xff] %vm277, %v1052
        %1061 = vst.msk [vmem:[#allocation3 + $0xa8] sm:$0xff] %vm277, %v1053
        %v1062 = vld [vmem:[#allocation2 + $0x1] sm:$0xff]
        %v1063 = vld [vmem:[#allocation2 + $0x11] sm:$0xff]
        %v1064 = vld [vmem:[#allocation2 + $0x21] sm:$0xff]
        %v1065 = vld [vmem:[#allocation2 + $0x31] sm:$0xff]
        %v1066 = vld [vmem:[#allocation2 + $0x41] sm:$0xff]
        %v1067 = vld [vmem:[#allocation2 + $0x51] sm:$0xff]
        %v1068 = vld [vmem:[#allocation2 + $0x61] sm:$0xff]
        %v1069 = vld [vmem:[#allocation2 + $0x71] sm:$0xff]
        %1078 = vrot.lane.b32.xlu0 %v1062, 32
        %v1079 = vpop.permute.xlu0 %1078
        %1080 = vrot.lane.b32.xlu0 %v1063, 32
        %v1081 = vpop.permute.xlu0 %1080
        %1082 = vrot.lane.b32.xlu0 %v1064, 32
        %v1083 = vpop.permute.xlu0 %1082
        %1084 = vrot.lane.b32.xlu0 %v1065, 32
        %v1085 = vpop.permute.xlu0 %1084
        %1086 = vrot.lane.b32.xlu0 %v1066, 32
        %v1087 = vpop.permute.xlu0 %1086
        %1088 = vrot.lane.b32.xlu0 %v1067, 32
        %v1089 = vpop.permute.xlu0 %1088
        %1090 = vrot.lane.b32.xlu0 %v1068, 32
        %v1091 = vpop.permute.xlu0 %1090
        %1092 = vrot.lane.b32.xlu0 %v1069, 32
        %v1093 = vpop.permute.xlu0 %1092
        %1102 = vst.msk [vmem:[#allocation3] sm:$0xff] %vm372, %v1079
        %1103 = vst.msk [vmem:[#allocation3 + $0x18] sm:$0xff] %vm372, %v1081
        %1104 = vst.msk [vmem:[#allocation3 + $0x30] sm:$0xff] %vm372, %v1083
        %1105 = vst.msk [vmem:[#allocation3 + $0x48] sm:$0xff] %vm372, %v1085
        %1106 = vst.msk [vmem:[#allocation3 + $0x60] sm:$0xff] %vm372, %v1087
        %1107 = vst.msk [vmem:[#allocation3 + $0x78] sm:$0xff] %vm372, %v1089
        %1108 = vst.msk [vmem:[#allocation3 + $0x90] sm:$0xff] %vm372, %v1091
        %1109 = vst.msk [vmem:[#allocation3 + $0xa8] sm:$0xff] %vm372, %v1093
        %v1110 = vld [vmem:[#allocation2 + $0x2] sm:$0xff]
        %v1111 = vld [vmem:[#allocation2 + $0x12] sm:$0xff]
        %v1112 = vld [vmem:[#allocation2 + $0x22] sm:$0xff]
        %v1113 = vld [vmem:[#allocation2 + $0x32] sm:$0xff]
        %v1114 = vld [vmem:[#allocation2 + $0x42] sm:$0xff]
        %v1115 = vld [vmem:[#allocation2 + $0x52] sm:$0xff]
        %v1116 = vld [vmem:[#allocation2 + $0x62] sm:$0xff]
        %v1117 = vld [vmem:[#allocation2 + $0x72] sm:$0xff]
        %1126 = vrot.lane.b32.xlu0 %v1110, 64
        %v1127 = vpop.permute.xlu0 %1126
        %1128 = vrot.lane.b32.xlu0 %v1111, 64
        %v1129 = vpop.permute.xlu0 %1128
        %1130 = vrot.lane.b32.xlu0 %v1112, 64
        %v1131 = vpop.permute.xlu0 %1130
        %1132 = vrot.lane.b32.xlu0 %v1113, 64
        %v1133 = vpop.permute.xlu0 %1132
        %1134 = vrot.lane.b32.xlu0 %v1114, 64
        %v1135 = vpop.permute.xlu0 %1134
        %1136 = vrot.lane.b32.xlu0 %v1115, 64
        %v1137 = vpop.permute.xlu0 %1136
        %1138 = vrot.lane.b32.xlu0 %v1116, 64
        %v1139 = vpop.permute.xlu0 %1138
        %1140 = vrot.lane.b32.xlu0 %v1117, 64
        %v1141 = vpop.permute.xlu0 %1140
        %1150 = vst.msk [vmem:[#allocation3] sm:$0xff] %vm421, %v1127
        %1151 = vst.msk [vmem:[#allocation3 + $0x18] sm:$0xff] %vm421, %v1129
        %1152 = vst.msk [vmem:[#allocation3 + $0x30] sm:$0xff] %vm421, %v1131
        %1153 = vst.msk [vmem:[#allocation3 + $0x48] sm:$0xff] %vm421, %v1133
        %1154 = vst.msk [vmem:[#allocation3 + $0x60] sm:$0xff] %vm421, %v1135
        %1155 = vst.msk [vmem:[#allocation3 + $0x78] sm:$0xff] %vm421, %v1137
        %1156 = vst.msk [vmem:[#allocation3 + $0x90] sm:$0xff] %vm421, %v1139
        %1157 = vst.msk [vmem:[#allocation3 + $0xa8] sm:$0xff] %vm421, %v1141
        %v1158 = vld [vmem:[%s307] sm:$0xff]
        %v1159 = vld [vmem:[%s307 + $0x10] sm:$0xff]
        %v1160 = vld [vmem:[%s307 + $0x20] sm:$0xff]
        %v1161 = vld [vmem:[%s307 + $0x30] sm:$0xff]
        %v1162 = vld [vmem:[%s307 + $0x40] sm:$0xff]
        %v1163 = vld [vmem:[%s307 + $0x50] sm:$0xff]
        %v1164 = vld [vmem:[%s307 + $0x60] sm:$0xff]
        %v1165 = vld [vmem:[%s307 + $0x70] sm:$0xff]
        %1174 = vrot.lane.b32.xlu0 %v1158, 96
        %v1175 = vpop.permute.xlu0 %1174
        %1176 = vrot.lane.b32.xlu0 %v1159, 96
        %v1177 = vpop.permute.xlu0 %1176
        %1178 = vrot.lane.b32.xlu0 %v1160, 96
        %v1179 = vpop.permute.xlu0 %1178
        %1180 = vrot.lane.b32.xlu0 %v1161, 96
        %v1181 = vpop.permute.xlu0 %1180
        %1182 = vrot.lane.b32.xlu0 %v1162, 96
        %v1183 = vpop.permute.xlu0 %1182
        %1184 = vrot.lane.b32.xlu0 %v1163, 96
        %v1185 = vpop.permute.xlu0 %1184
        %1186 = vrot.lane.b32.xlu0 %v1164, 96
        %v1187 = vpop.permute.xlu0 %1186
        %1188 = vrot.lane.b32.xlu0 %v1165, 96
        %v1189 = vpop.permute.xlu0 %1188
        %1198 = vst.msk [vmem:[#allocation3] sm:$0xff] %vm470, %v1175
        %1199 = vst.msk [vmem:[#allocation3 + $0x18] sm:$0xff] %vm470, %v1177
        %1200 = vst.msk [vmem:[#allocation3 + $0x30] sm:$0xff] %vm470, %v1179
        %1201 = vst.msk [vmem:[#allocation3 + $0x48] sm:$0xff] %vm470, %v1181
        %1202 = vst.msk [vmem:[#allocation3 + $0x60] sm:$0xff] %vm470, %v1183
        %1203 = vst.msk [vmem:[#allocation3 + $0x78] sm:$0xff] %vm470, %v1185
        %1204 = vst.msk [vmem:[#allocation3 + $0x90] sm:$0xff] %vm470, %v1187
        %1205 = vst.msk [vmem:[#allocation3 + $0xa8] sm:$0xff] %vm470, %v1189
        %v1206 = vld [vmem:[%s307 + $0x1] sm:$0xff]
        %v1207 = vld [vmem:[%s307 + $0x11] sm:$0xff]
        %v1208 = vld [vmem:[%s307 + $0x21] sm:$0xff]
        %v1209 = vld [vmem:[%s307 + $0x31] sm:$0xff]
        %v1210 = vld [vmem:[%s307 + $0x41] sm:$0xff]
        %v1211 = vld [vmem:[%s307 + $0x51] sm:$0xff]
        %v1212 = vld [vmem:[%s307 + $0x61] sm:$0xff]
        %v1213 = vld [vmem:[%s307 + $0x71] sm:$0xff]
        %1214 = vst.msk [vmem:[#allocation3 + $0x8] sm:$0xff] %vm277, %v1206
        %1215 = vst.msk [vmem:[#allocation3 + $0x20] sm:$0xff] %vm277, %v1207
        %1216 = vst.msk [vmem:[#allocation3 + $0x38] sm:$0xff] %vm277, %v1208
        %1217 = vst.msk [vmem:[#allocation3 + $0x50] sm:$0xff] %vm277, %v1209
        %1218 = vst.msk [vmem:[#allocation3 + $0x68] sm:$0xff] %vm277, %v1210
        %1219 = vst.msk [vmem:[#allocation3 + $0x80] sm:$0xff] %vm277, %v1211
        %1220 = vst.msk [vmem:[#allocation3 + $0x98] sm:$0xff] %vm277, %v1212
        %1221 = vst.msk [vmem:[#allocation3 + $0xb0] sm:$0xff] %vm277, %v1213
        %v1222 = vld [vmem:[%s307 + $0x2] sm:$0xff]
        %v1223 = vld [vmem:[%s307 + $0x12] sm:$0xff]
        %v1224 = vld [vmem:[%s307 + $0x22] sm:$0xff]
        %v1225 = vld [vmem:[%s307 + $0x32] sm:$0xff]
        %v1226 = vld [vmem:[%s307 + $0x42] sm:$0xff]
        %v1227 = vld [vmem:[%s307 + $0x52] sm:$0xff]
        %v1228 = vld [vmem:[%s307 + $0x62] sm:$0xff]
        %v1229 = vld [vmem:[%s307 + $0x72] sm:$0xff]
        %1238 = vrot.lane.b32.xlu0 %v1222, 32
        %v1239 = vpop.permute.xlu0 %1238
        %1240 = vrot.lane.b32.xlu0 %v1223, 32
        %v1241 = vpop.permute.xlu0 %1240
        %1242 = vrot.lane.b32.xlu0 %v1224, 32
        %v1243 = vpop.permute.xlu0 %1242
        %1244 = vrot.lane.b32.xlu0 %v1225, 32
        %v1245 = vpop.permute.xlu0 %1244
        %1246 = vrot.lane.b32.xlu0 %v1226, 32
        %v1247 = vpop.permute.xlu0 %1246
        %1248 = vrot.lane.b32.xlu0 %v1227, 32
        %v1249 = vpop.permute.xlu0 %1248
        %1250 = vrot.lane.b32.xlu0 %v1228, 32
        %v1251 = vpop.permute.xlu0 %1250
        %1252 = vrot.lane.b32.xlu0 %v1229, 32
        %v1253 = vpop.permute.xlu0 %1252
        %1262 = vst.msk [vmem:[#allocation3 + $0x8] sm:$0xff] %vm372, %v1239
        %1263 = vst.msk [vmem:[#allocation3 + $0x20] sm:$0xff] %vm372, %v1241
        %1264 = vst.msk [vmem:[#allocation3 + $0x38] sm:$0xff] %vm372, %v1243
        %1265 = vst.msk [vmem:[#allocation3 + $0x50] sm:$0xff] %vm372, %v1245
        %1266 = vst.msk [vmem:[#allocation3 + $0x68] sm:$0xff] %vm372, %v1247
        %1267 = vst.msk [vmem:[#allocation3 + $0x80] sm:$0xff] %vm372, %v1249
        %1268 = vst.msk [vmem:[#allocation3 + $0x98] sm:$0xff] %vm372, %v1251
        %1269 = vst.msk [vmem:[#allocation3 + $0xb0] sm:$0xff] %vm372, %v1253
        %v1270 = vld [vmem:[%s543] sm:$0xff]
        %v1271 = vld [vmem:[%s543 + $0x10] sm:$0xff]
        %v1272 = vld [vmem:[%s543 + $0x20] sm:$0xff]
        %v1273 = vld [vmem:[%s543 + $0x30] sm:$0xff]
        %v1274 = vld [vmem:[%s543 + $0x40] sm:$0xff]
        %v1275 = vld [vmem:[%s543 + $0x50] sm:$0xff]
        %v1276 = vld [vmem:[%s543 + $0x60] sm:$0xff]
        %v1277 = vld [vmem:[%s543 + $0x70] sm:$0xff]
        %1286 = vrot.lane.b32.xlu0 %v1270, 64
        %v1287 = vpop.permute.xlu0 %1286
        %1288 = vrot.lane.b32.xlu0 %v1271, 64
        %v1289 = vpop.permute.xlu0 %1288
        %1290 = vrot.lane.b32.xlu0 %v1272, 64
        %v1291 = vpop.permute.xlu0 %1290
        %1292 = vrot.lane.b32.xlu0 %v1273, 64
        %v1293 = vpop.permute.xlu0 %1292
        %1294 = vrot.lane.b32.xlu0 %v1274, 64
        %v1295 = vpop.permute.xlu0 %1294
        %1296 = vrot.lane.b32.xlu0 %v1275, 64
        %v1297 = vpop.permute.xlu0 %1296
        %1298 = vrot.lane.b32.xlu0 %v1276, 64
        %v1299 = vpop.permute.xlu0 %1298
        %1300 = vrot.lane.b32.xlu0 %v1277, 64
        %v1301 = vpop.permute.xlu0 %1300
        %1310 = vst.msk [vmem:[#allocation3 + $0x8] sm:$0xff] %vm421, %v1287
        %1311 = vst.msk [vmem:[#allocation3 + $0x20] sm:$0xff] %vm421, %v1289
        %1312 = vst.msk [vmem:[#allocation3 + $0x38] sm:$0xff] %vm421, %v1291
        %1313 = vst.msk [vmem:[#allocation3 + $0x50] sm:$0xff] %vm421, %v1293
        %1314 = vst.msk [vmem:[#allocation3 + $0x68] sm:$0xff] %vm421, %v1295
        %1315 = vst.msk [vmem:[#allocation3 + $0x80] sm:$0xff] %vm421, %v1297
        %1316 = vst.msk [vmem:[#allocation3 + $0x98] sm:$0xff] %vm421, %v1299
        %1317 = vst.msk [vmem:[#allocation3 + $0xb0] sm:$0xff] %vm421, %v1301
        %v1318 = vld [vmem:[%s543 + $0x1] sm:$0xff]
        %v1319 = vld [vmem:[%s543 + $0x11] sm:$0xff]
        %v1320 = vld [vmem:[%s543 + $0x21] sm:$0xff]
        %v1321 = vld [vmem:[%s543 + $0x31] sm:$0xff]
        %v1322 = vld [vmem:[%s543 + $0x41] sm:$0xff]
        %v1323 = vld [vmem:[%s543 + $0x51] sm:$0xff]
        %v1324 = vld [vmem:[%s543 + $0x61] sm:$0xff]
        %v1325 = vld [vmem:[%s543 + $0x71] sm:$0xff]
        %1334 = vrot.lane.b32.xlu0 %v1318, 96
        %v1335 = vpop.permute.xlu0 %1334
        %1336 = vrot.lane.b32.xlu0 %v1319, 96
        %v1337 = vpop.permute.xlu0 %1336
        %1338 = vrot.lane.b32.xlu0 %v1320, 96
        %v1339 = vpop.permute.xlu0 %1338
        %1340 = vrot.lane.b32.xlu0 %v1321, 96
        %v1341 = vpop.permute.xlu0 %1340
        %1342 = vrot.lane.b32.xlu0 %v1322, 96
        %v1343 = vpop.permute.xlu0 %1342
        %1344 = vrot.lane.b32.xlu0 %v1323, 96
        %v1345 = vpop.permute.xlu0 %1344
        %1346 = vrot.lane.b32.xlu0 %v1324, 96
        %v1347 = vpop.permute.xlu0 %1346
        %1348 = vrot.lane.b32.xlu0 %v1325, 96
        %v1349 = vpop.permute.xlu0 %1348
        %1358 = vst.msk [vmem:[#allocation3 + $0x8] sm:$0xff] %vm470, %v1335
        %1359 = vst.msk [vmem:[#allocation3 + $0x20] sm:$0xff] %vm470, %v1337
        %1360 = vst.msk [vmem:[#allocation3 + $0x38] sm:$0xff] %vm470, %v1339
        %1361 = vst.msk [vmem:[#allocation3 + $0x50] sm:$0xff] %vm470, %v1341
        %1362 = vst.msk [vmem:[#allocation3 + $0x68] sm:$0xff] %vm470, %v1343
        %1363 = vst.msk [vmem:[#allocation3 + $0x80] sm:$0xff] %vm470, %v1345
        %1364 = vst.msk [vmem:[#allocation3 + $0x98] sm:$0xff] %vm470, %v1347
        %1365 = vst.msk [vmem:[#allocation3 + $0xb0] sm:$0xff] %vm470, %v1349
        %v1366 = vld [vmem:[%s543 + $0x2] sm:$0xff]
        %v1367 = vld [vmem:[%s543 + $0x12] sm:$0xff]
        %v1368 = vld [vmem:[%s543 + $0x22] sm:$0xff]
        %v1369 = vld [vmem:[%s543 + $0x32] sm:$0xff]
        %v1370 = vld [vmem:[%s543 + $0x42] sm:$0xff]
        %v1371 = vld [vmem:[%s543 + $0x52] sm:$0xff]
        %v1372 = vld [vmem:[%s543 + $0x62] sm:$0xff]
        %v1373 = vld [vmem:[%s543 + $0x72] sm:$0xff]
        %1374 = vst.msk [vmem:[#allocation3 + $0x10] sm:$0xff] %vm277, %v1366
        %1375 = vst.msk [vmem:[#allocation3 + $0x28] sm:$0xff] %vm277, %v1367
        %1376 = vst.msk [vmem:[#allocation3 + $0x40] sm:$0xff] %vm277, %v1368
        %1377 = vst.msk [vmem:[#allocation3 + $0x58] sm:$0xff] %vm277, %v1369
        %1378 = vst.msk [vmem:[#allocation3 + $0x70] sm:$0xff] %vm277, %v1370
        %1379 = vst.msk [vmem:[#allocation3 + $0x88] sm:$0xff] %vm277, %v1371
        %1380 = vst.msk [vmem:[#allocation3 + $0xa0] sm:$0xff] %vm277, %v1372
        %1381 = vst.msk [vmem:[#allocation3 + $0xb8] sm:$0xff] %vm277, %v1373
        %v1382 = vld [vmem:[#allocation3] sm:$0xff]
        %v1383 = vld [vmem:[#allocation3 + $0x8] sm:$0xff]
        %v1384 = vld [vmem:[#allocation3 + $0x10] sm:$0xff]
        %v1385 = vld [vmem:[#allocation3 + $0x18] sm:$0xff]
        %v1386 = vld [vmem:[#allocation3 + $0x20] sm:$0xff]
        %v1387 = vld [vmem:[#allocation3 + $0x28] sm:$0xff]
        %v1388 = vld [vmem:[#allocation3 + $0x30] sm:$0xff]
        %v1389 = vld [vmem:[#allocation3 + $0x38] sm:$0xff]
        %v1390 = vld [vmem:[#allocation3 + $0x40] sm:$0xff]
        %v1391 = vld [vmem:[#allocation3 + $0x48] sm:$0xff]
        %v1392 = vld [vmem:[#allocation3 + $0x50] sm:$0xff]
        %v1393 = vld [vmem:[#allocation3 + $0x58] sm:$0xff]
        %v1394 = vld [vmem:[#allocation3 + $0x60] sm:$0xff]
        %v1395 = vld [vmem:[#allocation3 + $0x68] sm:$0xff]
        %v1396 = vld [vmem:[#allocation3 + $0x70] sm:$0xff]
        %v1397 = vld [vmem:[#allocation3 + $0x78] sm:$0xff]
        %v1398 = vld [vmem:[#allocation3 + $0x80] sm:$0xff]
        %v1399 = vld [vmem:[#allocation3 + $0x88] sm:$0xff]
        %v1400 = vld [vmem:[#allocation3 + $0x90] sm:$0xff]
        %v1401 = vld [vmem:[#allocation3 + $0x98] sm:$0xff]
        %v1402 = vld [vmem:[#allocation3 + $0xa0] sm:$0xff]
        %v1403 = vld [vmem:[#allocation3 + $0xa8] sm:$0xff]
        %v1404 = vld [vmem:[#allocation3 + $0xb0] sm:$0xff]
        %v1405 = vld [vmem:[#allocation3 + $0xb8] sm:$0xff]
        %v1406 = vld [vmem:[%s3] sm:$0xff]
        %v1407 = vld [vmem:[%s3 + $0x8] sm:$0xff]
        %v1408 = vld [vmem:[%s3 + $0x10] sm:$0xff]
        %v1409 = vld [vmem:[%s3 + $0x18] sm:$0xff]
        %v1410 = vld [vmem:[%s3 + $0x20] sm:$0xff]
        %v1411 = vld [vmem:[%s3 + $0x28] sm:$0xff]
        %v1412 = vld [vmem:[%s3 + $0x30] sm:$0xff]
        %v1413 = vld [vmem:[%s3 + $0x38] sm:$0xff]
        %v1414 = vld [vmem:[%s3 + $0x40] sm:$0xff]
        %v1415 = vld [vmem:[%s3 + $0x48] sm:$0xff]
        %v1416 = vld [vmem:[%s3 + $0x50] sm:$0xff]
        %v1417 = vld [vmem:[%s3 + $0x58] sm:$0xff]
        %v1418 = vld [vmem:[%s3 + $0x60] sm:$0xff]
        %v1419 = vld [vmem:[%s3 + $0x68] sm:$0xff]
        %v1420 = vld [vmem:[%s3 + $0x70] sm:$0xff]
        %v1421 = vld [vmem:[%s3 + $0x78] sm:$0xff]
        %v1422 = vld [vmem:[%s3 + $0x80] sm:$0xff]
        %v1423 = vld [vmem:[%s3 + $0x88] sm:$0xff]
        %v1424 = vld [vmem:[%s3 + $0x90] sm:$0xff]
        %v1425 = vld [vmem:[%s3 + $0x98] sm:$0xff]
        %v1426 = vld [vmem:[%s3 + $0xa0] sm:$0xff]
        %v1427 = vld [vmem:[%s3 + $0xa8] sm:$0xff]
        %v1428 = vld [vmem:[%s3 + $0xb0] sm:$0xff]
        %v1429 = vld [vmem:[%s3 + $0xb8] sm:$0xff]
        %v1430 = vld [vmem:[%s3 + $0xc0] sm:$0xff]
        %v1431 = vld [vmem:[%s3 + $0xc8] sm:$0xff]
        %v1432 = vld [vmem:[%s3 + $0xd0] sm:$0xff]
        %v1433 = vld [vmem:[%s3 + $0xd8] sm:$0xff]
        %v1434 = vld [vmem:[%s3 + $0xe0] sm:$0xff]
        %v1435 = vld [vmem:[%s3 + $0xe8] sm:$0xff]
        %v1436 = vld [vmem:[%s3 + $0xf0] sm:$0xff]
        %v1437 = vld [vmem:[%s3 + $0xf8] sm:$0xff]
        %v1438 = vld [vmem:[%s3 + $0x100] sm:$0xff]
        %v1439 = vld [vmem:[%s3 + $0x108] sm:$0xff]
        %v1440 = vld [vmem:[%s3 + $0x110] sm:$0xff]
        %v1441 = vld [vmem:[%s3 + $0x118] sm:$0xff]
        %v1442 = vld [vmem:[%s4] sm:$0x1]
        %v1444 = vlaneseq
        %v1445 = vshrl.u32 %v1444, 7
        %v1446 = vsub.s32 0, %v1445
        %v1447 = vrot.slane %v1442, %v1446
        %v1450 = vsel %vm277, %v1384, 0
        %v1453 = vsel %vm277, %v1387, 0
        %v1456 = vsel %vm277, %v1390, 0
        %v1459 = vsel %vm277, %v1393, 0
        %v1462 = vsel %vm277, %v1396, 0
        %v1465 = vsel %vm277, %v1399, 0
        %v1468 = vsel %vm277, %v1402, 0
        %v1471 = vsel %vm277, %v1405, 0
        %1473 = vmatprep.subr.mxu0 0.0
        %1474 = vmatpush1.msra.mxu0 %v1406
        %1475 = vmatprep.subr.mxu0 0.0
        %1476 = vmatpush1.msra.mxu0 %v1407
        %1477 = vmatprep.subr.mxu0 0.0
        %1478 = vmatpush1.msra.mxu0 %v1408
        %1479 = vmatprep.subr.mxu0 0.0
        %1480 = vmatpush1.msra.mxu0 %v1409
        %1481 = vmatprep.subr.mxu0 0.0
        %1482 = vmatpush1.msra.mxu0 %v1410
        %1483 = vmatprep.subr.mxu0 0.0
        %1484 = vmatpush1.msra.mxu0 %v1411
        %1485 = vmatprep.subr.mxu0 0.0
        %1486 = vmatpush1.msra.mxu0 %v1412
        %1487 = vmatprep.subr.mxu0 0.0
        %1488 = vmatpush1.msra.mxu0 %v1413
        %1489 = vmatprep.subr.mxu0 0.0
        %1490 = vmatpush1.msra.mxu0 %v1414
        %1491 = vmatprep.subr.mxu0 0.0
        %1492 = vmatpush1.msra.mxu0 %v1415
        %1493 = vmatprep.subr.mxu0 0.0
        %1494 = vmatpush1.msra.mxu0 %v1416
        %1495 = vmatprep.subr.mxu0 0.0
        %1496 = vmatpush1.msra.mxu0 %v1417
        %1497 = vmatprep.subr.mxu0 0.0
        %1498 = vmatpush1.msra.mxu0 %v1418
        %1499 = vmatprep.subr.mxu0 0.0
        %1500 = vmatpush1.msra.mxu0 %v1419
        %1501 = vmatprep.subr.mxu0 0.0
        %1502 = vmatpush1.msra.mxu0 %v1420
        %1503 = vmatprep.subr.mxu0 0.0
        %1504 = vmatpush1.msra.mxu0 %v1421
        %1505 = vmatprep.subr.mxu0 0.0
        %1506 = vmatpush1.msra.mxu0 %v1422
        %1507 = vmatprep.subr.mxu0 0.0
        %1508 = vmatpush1.msra.mxu0 %v1423
        %1509 = vmatprep.subr.mxu0 0.0
        %1510 = vmatpush1.msra.mxu0 %v1424
        %1511 = vmatprep.subr.mxu0 0.0
        %1512 = vmatpush1.msra.mxu0 %v1425
        %1513 = vmatprep.subr.mxu0 0.0
        %1514 = vmatpush1.msra.mxu0 %v1426
        %1515 = vmatprep.subr.mxu0 0.0
        %1516 = vmatpush1.msra.mxu0 %v1427
        %1517 = vmatprep.subr.mxu0 0.0
        %1518 = vmatpush1.msra.mxu0 %v1428
        %1519 = vmatprep.subr.mxu0 0.0
        %1520 = vmatpush1.msra.mxu0 %v1429
        %1521 = vmatprep.subr.mxu0 0.0
        %1522 = vmatpush1.msra.mxu0 %v1430
        %1523 = vmatprep.subr.mxu0 0.0
        %1524 = vmatpush1.msra.mxu0 %v1431
        %1525 = vmatprep.subr.mxu0 0.0
        %1526 = vmatpush1.msra.mxu0 %v1432
        %1527 = vmatprep.subr.mxu0 0.0
        %1528 = vmatpush1.msra.mxu0 %v1433
        %1529 = vmatprep.subr.mxu0 0.0
        %1530 = vmatpush1.msra.mxu0 %v1434
        %1531 = vmatprep.subr.mxu0 0.0
        %1532 = vmatpush1.msra.mxu0 %v1435
        %1533 = vmatprep.subr.mxu0 0.0
        %1534 = vmatpush1.msra.mxu0 %v1436
        %1535 = vmatprep.subr.mxu0 0.0
        %1536 = vmatpush1.msra.mxu0 %v1437
        %1537 = vmatprep.mubr.f32.mxu0 %v1383
        %1538 = vmatmul.mubr.f32.gmra.mrb[0].mxu0 %v1382
        %v1539 = vpop.f32.mrb[0].mxu0
        %v1540 = vadd.f32 %v1447, %v1539
        %v1541 = vpop.f32.mrb[0].mxu0
        %1542 = vmatprep.mubr.f32.mxu0 %v1386
        %1543 = vmatmul.mubr.f32.gmra.mrb[0].mxu0 %v1385
        %v1544 = vpop.f32.mrb[0].mxu0
        %v1545 = vadd.f32 %v1447, %v1544
        %v1546 = vpop.f32.mrb[0].mxu0
        %1547 = vmatprep.mubr.f32.mxu0 %v1389
        %1548 = vmatmul.mubr.f32.gmra.mrb[0].mxu0 %v1388
        %v1549 = vpop.f32.mrb[0].mxu0
        %v1550 = vadd.f32 %v1447, %v1549
        %v1551 = vpop.f32.mrb[0].mxu0
        %1552 = vmatprep.mubr.f32.mxu0 %v1392
        %1553 = vmatmul.mubr.f32.gmra.mrb[0].mxu0 %v1391
        %v1554 = vpop.f32.mrb[0].mxu0
        %v1555 = vadd.f32 %v1447, %v1554
        %v1556 = vpop.f32.mrb[0].mxu0
        %1557 = vmatprep.mubr.f32.mxu0 %v1395
        %1558 = vmatmul.mubr.f32.gmra.mrb[0].mxu0 %v1394
        %v1559 = vpop.f32.mrb[0].mxu0
        %v1560 = vadd.f32 %v1447, %v1559
        %v1561 = vpop.f32.mrb[0].mxu0
        %1562 = vmatprep.mubr.f32.mxu0 %v1398
        %1563 = vmatmul.mubr.f32.gmra.mrb[0].mxu0 %v1397
        %v1564 = vpop.f32.mrb[0].mxu0
        %v1565 = vadd.f32 %v1447, %v1564
        %v1566 = vpop.f32.mrb[0].mxu0
        %1567 = vmatprep.mubr.f32.mxu0 %v1401
        %1568 = vmatmul.mubr.f32.gmra.mrb[0].mxu0 %v1400
        %v1569 = vpop.f32.mrb[0].mxu0
        %v1570 = vadd.f32 %v1447, %v1569
        %v1571 = vpop.f32.mrb[0].mxu0
        %1572 = vmatprep.mubr.f32.mxu0 %v1404
        %1573 = vmatmul.mubr.f32.gmra.mrb[0].mxu0 %v1403
        %v1574 = vpop.f32.mrb[0].mxu0
        %v1575 = vadd.f32 %v1447, %v1574
        %v1576 = vpop.f32.mrb[0].mxu0
        %1577 = vdwg.mxu0
        %1578 = vmatprep.subr.mxu0 0.0
        %1579 = vmatpush1.msra.mxu0 %v1438
        %1580 = vmatprep.subr.mxu0 0.0
        %1581 = vmatpush1.msra.mxu0 %v1439
        %1582 = vmatprep.subr.mxu0 0.0
        %1583 = vmatpush1.msra.mxu0 %v1440
        %1584 = vmatprep.subr.mxu0 0.0
        %1585 = vmatpush1.msra.mxu0 %v1441
        %1586 = vmatprep.subr.mxu0 0.0
        %1587 = vmatpush1.msra.mxu0 0.0
        %1588 = vmatprep.subr.mxu0 0.0
        %1589 = vmatpush1.msra.mxu0 0.0
        %1590 = vmatprep.subr.mxu0 0.0
        %1591 = vmatpush1.msra.mxu0 0.0
        %1592 = vmatprep.subr.mxu0 0.0
        %1593 = vmatpush1.msra.mxu0 0.0
        %1594 = vmatprep.subr.mxu0 0.0
        %1595 = vmatpush1.msra.mxu0 0.0
        %1596 = vmatprep.subr.mxu0 0.0
        %1597 = vmatpush1.msra.mxu0 0.0
        %1598 = vmatprep.subr.mxu0 0.0
        %1599 = vmatpush1.msra.mxu0 0.0
        %1600 = vmatprep.subr.mxu0 0.0
        %1601 = vmatpush1.msra.mxu0 0.0
        %1602 = vmatprep.subr.mxu0 0.0
        %1603 = vmatpush1.msra.mxu0 0.0
        %1604 = vmatprep.subr.mxu0 0.0
        %1605 = vmatpush1.msra.mxu0 0.0
        %1606 = vmatprep.subr.mxu0 0.0
        %1607 = vmatpush1.msra.mxu0 0.0
        %1608 = vmatprep.subr.mxu0 0.0
        %1609 = vmatpush1.msra.mxu0 0.0
        %1610 = vmatprep.subr.mxu0 0.0
        %1611 = vmatpush1.msra.mxu0 0.0
        %1612 = vmatprep.subr.mxu0 0.0
        %1613 = vmatpush1.msra.mxu0 0.0
        %1614 = vmatprep.subr.mxu0 0.0
        %1615 = vmatpush1.msra.mxu0 0.0
        %1616 = vmatprep.subr.mxu0 0.0
        %1617 = vmatpush1.msra.mxu0 0.0
        %1618 = vmatprep.subr.mxu0 0.0
        %1619 = vmatpush1.msra.mxu0 0.0
        %1620 = vmatprep.subr.mxu0 0.0
        %1621 = vmatpush1.msra.mxu0 0.0
        %1622 = vmatprep.subr.mxu0 0.0
        %1623 = vmatpush1.msra.mxu0 0.0
        %1624 = vmatprep.subr.mxu0 0.0
        %1625 = vmatpush1.msra.mxu0 0.0
        %1626 = vmatprep.subr.mxu0 0.0
        %1627 = vmatpush1.msra.mxu0 0.0
        %1628 = vmatprep.subr.mxu0 0.0
        %1629 = vmatpush1.msra.mxu0 0.0
        %1630 = vmatprep.subr.mxu0 0.0
        %1631 = vmatpush1.msra.mxu0 0.0
        %1632 = vmatprep.subr.mxu0 0.0
        %1633 = vmatpush1.msra.mxu0 0.0
        %1634 = vmatprep.subr.mxu0 0.0
        %1635 = vmatpush1.msra.mxu0 0.0
        %1636 = vmatprep.subr.mxu0 0.0
        %1637 = vmatpush1.msra.mxu0 0.0
        %1638 = vmatprep.subr.mxu0 0.0
        %1639 = vmatpush1.msra.mxu0 0.0
        %1640 = vmatprep.subr.mxu0 0.0
        %1641 = vmatpush1.msra.mxu0 0.0
        %1642 = vmatprep.mubr.f32.mxu0 0.0
        %1643 = vmatmul.mubr.f32.gmra.mrb[0].mxu0 %v1450
        %v1644 = vpop.f32.mrb[0].mxu0
        %v1645 = vadd.f32 %v1540, %v1644
        %v1646 = vpop.f32.mrb[0].mxu0
        %1647 = vmatprep.mubr.f32.mxu0 0.0
        %1648 = vmatmul.mubr.f32.gmra.mrb[0].mxu0 %v1453
        %v1649 = vpop.f32.mrb[0].mxu0
        %v1650 = vadd.f32 %v1545, %v1649
        %v1651 = vpop.f32.mrb[0].mxu0
        %1652 = vmatprep.mubr.f32.mxu0 0.0
        %1653 = vmatmul.mubr.f32.gmra.mrb[0].mxu0 %v1456
        %v1654 = vpop.f32.mrb[0].mxu0
        %v1655 = vadd.f32 %v1550, %v1654
        %v1656 = vpop.f32.mrb[0].mxu0
        %1657 = vmatprep.mubr.f32.mxu0 0.0
        %1658 = vmatmul.mubr.f32.gmra.mrb[0].mxu0 %v1459
        %v1659 = vpop.f32.mrb[0].mxu0
        %v1660 = vadd.f32 %v1555, %v1659
        %v1661 = vpop.f32.mrb[0].mxu0
        %1662 = vmatprep.mubr.f32.mxu0 0.0
        %1663 = vmatmul.mubr.f32.gmra.mrb[0].mxu0 %v1462
        %v1664 = vpop.f32.mrb[0].mxu0
        %v1665 = vadd.f32 %v1560, %v1664
        %v1666 = vpop.f32.mrb[0].mxu0
        %1667 = vmatprep.mubr.f32.mxu0 0.0
        %1668 = vmatmul.mubr.f32.gmra.mrb[0].mxu0 %v1465
        %v1669 = vpop.f32.mrb[0].mxu0
        %v1670 = vadd.f32 %v1565, %v1669
        %v1671 = vpop.f32.mrb[0].mxu0
        %1672 = vmatprep.mubr.f32.mxu0 0.0
        %1673 = vmatmul.mubr.f32.gmra.mrb[0].mxu0 %v1468
        %v1674 = vpop.f32.mrb[0].mxu0
        %v1675 = vadd.f32 %v1570, %v1674
        %v1676 = vpop.f32.mrb[0].mxu0
        %1677 = vmatprep.mubr.f32.mxu0 0.0
        %1678 = vmatmul.mubr.f32.gmra.mrb[0].mxu0 %v1471
        %v1679 = vpop.f32.mrb[0].mxu0
        %v1680 = vadd.f32 %v1575, %v1679
        %v1681 = vpop.f32.mrb[0].mxu0
        %1682 = vdwg.mxu0
        %v1683 = vsel %vm277, %v1645, 0.0
        %v1684 = vsel %vm277, %v1650, 0.0
        %v1685 = vadd.f32 %v1683, %v1684
        %v1686 = vsel %vm277, %v1655, 0.0
        %v1687 = vadd.f32 %v1685, %v1686
        %v1688 = vsel %vm277, %v1660, 0.0
        %v1689 = vadd.f32 %v1687, %v1688
        %v1690 = vsel %vm277, %v1665, 0.0
        %v1691 = vadd.f32 %v1689, %v1690
        %v1692 = vsel %vm277, %v1670, 0.0
        %v1693 = vadd.f32 %v1691, %v1692
        %v1694 = vsel %vm277, %v1675, 0.0
        %v1695 = vadd.f32 %v1693, %v1694
        %v1696 = vsel %vm277, %v1680, 0.0
        %v1697 = vadd.f32 %v1695, %v1696
        %v1698 = vrot.slane %v1697, 4
        %v1699 = vadd.f32 %v1697, %v1698
        %v1700 = vrot.slane %v1699, 2
        %v1701 = vadd.f32 %v1699, %v1700
        %v1702 = vrot.slane %v1701, 1
        %v1703 = vadd.f32 %v1701, %v1702
        %v1704 = vmul.f32 %v1645, %v1645
        %v1705 = vmul.f32 %v1650, %v1650
        %v1706 = vmul.f32 %v1655, %v1655
        %v1707 = vmul.f32 %v1660, %v1660
        %v1708 = vmul.f32 %v1665, %v1665
        %v1709 = vmul.f32 %v1670, %v1670
        %v1710 = vmul.f32 %v1675, %v1675
        %v1711 = vmul.f32 %v1680, %v1680
        %v1712 = vsel %vm277, %v1704, 0.0
        %v1713 = vsel %vm277, %v1705, 0.0
        %v1714 = vadd.f32 %v1712, %v1713
        %v1715 = vsel %vm277, %v1706, 0.0
        %v1716 = vadd.f32 %v1714, %v1715
        %v1717 = vsel %vm277, %v1707, 0.0
        %v1718 = vadd.f32 %v1716, %v1717
        %v1719 = vsel %vm277, %v1708, 0.0
        %v1720 = vadd.f32 %v1718, %v1719
        %v1721 = vsel %vm277, %v1709, 0.0
        %v1722 = vadd.f32 %v1720, %v1721
        %v1723 = vsel %vm277, %v1710, 0.0
        %v1724 = vadd.f32 %v1722, %v1723
        %v1725 = vsel %vm277, %v1711, 0.0
        %v1726 = vadd.f32 %v1724, %v1725
        %v1727 = vrot.slane %v1726, 4
        %v1728 = vadd.f32 %v1726, %v1727
        %v1729 = vrot.slane %v1728, 2
        %v1730 = vadd.f32 %v1728, %v1729
        %v1731 = vrot.slane %v1730, 1
        %v1732 = vadd.f32 %v1730, %v1731
        %v1733 = vmul.f32 %v1703, 0.015625
        %v1734 = vmul.f32 %v1732, 0.015625
        %v1735 = vmul.f32 %v1733, %v1733
        %v1736 = vsub.f32 %v1734, %v1735
        %v1737 = vmax.f32 %v1736, 0.0
        %v1738 = vsub.f32 %v1645, %v1733
        %v1739 = vsub.f32 %v1650, %v1733
        %v1740 = vsub.f32 %v1655, %v1733
        %v1741 = vsub.f32 %v1660, %v1733
        %v1742 = vsub.f32 %v1665, %v1733
        %v1743 = vsub.f32 %v1670, %v1733
        %v1744 = vsub.f32 %v1675, %v1733
        %v1745 = vsub.f32 %v1680, %v1733
        %v1746 = vadd.f32 %v1737, 1e-05
        %v1747 = vrsqrt.pop %v1746
        %v1748 = vmul.f32 %v1738, %v1747
        %v1749 = vmul.f32 %v1739, %v1747
        %v1750 = vmul.f32 %v1740, %v1747
        %v1751 = vmul.f32 %v1741, %v1747
        %v1752 = vmul.f32 %v1742, %v1747
        %v1753 = vmul.f32 %v1743, %v1747
        %v1754 = vmul.f32 %v1744, %v1747
        %v1755 = vmul.f32 %v1745, %v1747
        %v1756 = vmax.f32 %v1748, 0.0
        %v1757 = vmax.f32 %v1749, 0.0
        %v1758 = vmax.f32 %v1750, 0.0
        %v1759 = vmax.f32 %v1751, 0.0
        %v1760 = vmax.f32 %v1752, 0.0
        %v1761 = vmax.f32 %v1753, 0.0
        %v1762 = vmax.f32 %v1754, 0.0
        %v1763 = vmax.f32 %v1755, 0.0
        %1764 = vst.msk [vmem:[%s307 + $0x1] sm:$0xff] %vm277, %v1756
        %1765 = vst.msk [vmem:[%s307 + $0x11] sm:$0xff] %vm277, %v1757
        %1766 = vst.msk [vmem:[%s307 + $0x21] sm:$0xff] %vm277, %v1758
        %1767 = vst.msk [vmem:[%s307 + $0x31] sm:$0xff] %vm277, %v1759
        %1768 = vst.msk [vmem:[%s307 + $0x41] sm:$0xff] %vm277, %v1760
        %1769 = vst.msk [vmem:[%s307 + $0x51] sm:$0xff] %vm277, %v1761
        %1770 = vst.msk [vmem:[%s307 + $0x61] sm:$0xff] %vm277, %v1762
        %1771 = vst.msk [vmem:[%s307 + $0x71] sm:$0xff] %vm277, %v1763
        %v1772 = vld [vmem:[#allocation2] sm:$0xff]
        %v1773 = vld [vmem:[#allocation2 + $0x10] sm:$0xff]
        %v1774 = vld [vmem:[#allocation2 + $0x20] sm:$0xff]
        %v1775 = vld [vmem:[#allocation2 + $0x30] sm:$0xff]
        %v1776 = vld [vmem:[#allocation2 + $0x40] sm:$0xff]
        %v1777 = vld [vmem:[#allocation2 + $0x50] sm:$0xff]
        %v1778 = vld [vmem:[#allocation2 + $0x60] sm:$0xff]
        %v1779 = vld [vmem:[#allocation2 + $0x70] sm:$0xff]
        %1780 = vst.msk [vmem:[#allocation3] sm:$0xff] %vm277, %v1772
        %1781 = vst.msk [vmem:[#allocation3 + $0x18] sm:$0xff] %vm277, %v1773
        %1782 = vst.msk [vmem:[#allocation3 + $0x30] sm:$0xff] %vm277, %v1774
        %1783 = vst.msk [vmem:[#allocation3 + $0x48] sm:$0xff] %vm277, %v1775
        %1784 = vst.msk [vmem:[#allocation3 + $0x60] sm:$0xff] %vm277, %v1776
        %1785 = vst.msk [vmem:[#allocation3 + $0x78] sm:$0xff] %vm277, %v1777
        %1786 = vst.msk [vmem:[#allocation3 + $0x90] sm:$0xff] %vm277, %v1778
        %1787 = vst.msk [vmem:[#allocation3 + $0xa8] sm:$0xff] %vm277, %v1779
        %v1788 = vld [vmem:[#allocation2 + $0x1] sm:$0xff]
        %v1789 = vld [vmem:[#allocation2 + $0x11] sm:$0xff]
        %v1790 = vld [vmem:[#allocation2 + $0x21] sm:$0xff]
        %v1791 = vld [vmem:[#allocation2 + $0x31] sm:$0xff]
        %v1792 = vld [vmem:[#allocation2 + $0x41] sm:$0xff]
        %v1793 = vld [vmem:[#allocation2 + $0x51] sm:$0xff]
        %v1794 = vld [vmem:[#allocation2 + $0x61] sm:$0xff]
        %v1795 = vld [vmem:[#allocation2 + $0x71] sm:$0xff]
        %1804 = vrot.lane.b32.xlu0 %v1788, 32
        %v1805 = vpop.permute.xlu0 %1804
        %1806 = vrot.lane.b32.xlu0 %v1789, 32
        %v1807 = vpop.permute.xlu0 %1806
        %1808 = vrot.lane.b32.xlu0 %v1790, 32
        %v1809 = vpop.permute.xlu0 %1808
        %1810 = vrot.lane.b32.xlu0 %v1791, 32
        %v1811 = vpop.permute.xlu0 %1810
        %1812 = vrot.lane.b32.xlu0 %v1792, 32
        %v1813 = vpop.permute.xlu0 %1812
        %1814 = vrot.lane.b32.xlu0 %v1793, 32
        %v1815 = vpop.permute.xlu0 %1814
        %1816 = vrot.lane.b32.xlu0 %v1794, 32
        %v1817 = vpop.permute.xlu0 %1816
        %1818 = vrot.lane.b32.xlu0 %v1795, 32
        %v1819 = vpop.permute.xlu0 %1818
        %1828 = vst.msk [vmem:[#allocation3] sm:$0xff] %vm372, %v1805
        %1829 = vst.msk [vmem:[#allocation3 + $0x18] sm:$0xff] %vm372, %v1807
        %1830 = vst.msk [vmem:[#allocation3 + $0x30] sm:$0xff] %vm372, %v1809
        %1831 = vst.msk [vmem:[#allocation3 + $0x48] sm:$0xff] %vm372, %v1811
        %1832 = vst.msk [vmem:[#allocation3 + $0x60] sm:$0xff] %vm372, %v1813
        %1833 = vst.msk [vmem:[#allocation3 + $0x78] sm:$0xff] %vm372, %v1815
        %1834 = vst.msk [vmem:[#allocation3 + $0x90] sm:$0xff] %vm372, %v1817
        %1835 = vst.msk [vmem:[#allocation3 + $0xa8] sm:$0xff] %vm372, %v1819
        %v1836 = vld [vmem:[#allocation2 + $0x2] sm:$0xff]
        %v1837 = vld [vmem:[#allocation2 + $0x12] sm:$0xff]
        %v1838 = vld [vmem:[#allocation2 + $0x22] sm:$0xff]
        %v1839 = vld [vmem:[#allocation2 + $0x32] sm:$0xff]
        %v1840 = vld [vmem:[#allocation2 + $0x42] sm:$0xff]
        %v1841 = vld [vmem:[#allocation2 + $0x52] sm:$0xff]
        %v1842 = vld [vmem:[#allocation2 + $0x62] sm:$0xff]
        %v1843 = vld [vmem:[#allocation2 + $0x72] sm:$0xff]
        %1852 = vrot.lane.b32.xlu0 %v1836, 64
        %v1853 = vpop.permute.xlu0 %1852
        %1854 = vrot.lane.b32.xlu0 %v1837, 64
        %v1855 = vpop.permute.xlu0 %1854
        %1856 = vrot.lane.b32.xlu0 %v1838, 64
        %v1857 = vpop.permute.xlu0 %1856
        %1858 = vrot.lane.b32.xlu0 %v1839, 64
        %v1859 = vpop.permute.xlu0 %1858
        %1860 = vrot.lane.b32.xlu0 %v1840, 64
        %v1861 = vpop.permute.xlu0 %1860
        %1862 = vrot.lane.b32.xlu0 %v1841, 64
        %v1863 = vpop.permute.xlu0 %1862
        %1864 = vrot.lane.b32.xlu0 %v1842, 64
        %v1865 = vpop.permute.xlu0 %1864
        %1866 = vrot.lane.b32.xlu0 %v1843, 64
        %v1867 = vpop.permute.xlu0 %1866
        %1876 = vst.msk [vmem:[#allocation3] sm:$0xff] %vm421, %v1853
        %1877 = vst.msk [vmem:[#allocation3 + $0x18] sm:$0xff] %vm421, %v1855
        %1878 = vst.msk [vmem:[#allocation3 + $0x30] sm:$0xff] %vm421, %v1857
        %1879 = vst.msk [vmem:[#allocation3 + $0x48] sm:$0xff] %vm421, %v1859
        %1880 = vst.msk [vmem:[#allocation3 + $0x60] sm:$0xff] %vm421, %v1861
        %1881 = vst.msk [vmem:[#allocation3 + $0x78] sm:$0xff] %vm421, %v1863
        %1882 = vst.msk [vmem:[#allocation3 + $0x90] sm:$0xff] %vm421, %v1865
        %1883 = vst.msk [vmem:[#allocation3 + $0xa8] sm:$0xff] %vm421, %v1867
        %v1884 = vld [vmem:[%s307] sm:$0xff]
        %v1885 = vld [vmem:[%s307 + $0x10] sm:$0xff]
        %v1886 = vld [vmem:[%s307 + $0x20] sm:$0xff]
        %v1887 = vld [vmem:[%s307 + $0x30] sm:$0xff]
        %v1888 = vld [vmem:[%s307 + $0x40] sm:$0xff]
        %v1889 = vld [vmem:[%s307 + $0x50] sm:$0xff]
        %v1890 = vld [vmem:[%s307 + $0x60] sm:$0xff]
        %v1891 = vld [vmem:[%s307 + $0x70] sm:$0xff]
        %1900 = vrot.lane.b32.xlu0 %v1884, 96
        %v1901 = vpop.permute.xlu0 %1900
        %1902 = vrot.lane.b32.xlu0 %v1885, 96
        %v1903 = vpop.permute.xlu0 %1902
        %1904 = vrot.lane.b32.xlu0 %v1886, 96
        %v1905 = vpop.permute.xlu0 %1904
        %1906 = vrot.lane.b32.xlu0 %v1887, 96
        %v1907 = vpop.permute.xlu0 %1906
        %1908 = vrot.lane.b32.xlu0 %v1888, 96
        %v1909 = vpop.permute.xlu0 %1908
        %1910 = vrot.lane.b32.xlu0 %v1889, 96
        %v1911 = vpop.permute.xlu0 %1910
        %1912 = vrot.lane.b32.xlu0 %v1890, 96
        %v1913 = vpop.permute.xlu0 %1912
        %1914 = vrot.lane.b32.xlu0 %v1891, 96
        %v1915 = vpop.permute.xlu0 %1914
        %1924 = vst.msk [vmem:[#allocation3] sm:$0xff] %vm470, %v1901
        %1925 = vst.msk [vmem:[#allocation3 + $0x18] sm:$0xff] %vm470, %v1903
        %1926 = vst.msk [vmem:[#allocation3 + $0x30] sm:$0xff] %vm470, %v1905
        %1927 = vst.msk [vmem:[#allocation3 + $0x48] sm:$0xff] %vm470, %v1907
        %1928 = vst.msk [vmem:[#allocation3 + $0x60] sm:$0xff] %vm470, %v1909
        %1929 = vst.msk [vmem:[#allocation3 + $0x78] sm:$0xff] %vm470, %v1911
        %1930 = vst.msk [vmem:[#allocation3 + $0x90] sm:$0xff] %vm470, %v1913
        %1931 = vst.msk [vmem:[#allocation3 + $0xa8] sm:$0xff] %vm470, %v1915
        %v1932 = vld [vmem:[%s307 + $0x1] sm:$0xff]
        %v1933 = vld [vmem:[%s307 + $0x11] sm:$0xff]
        %v1934 = vld [vmem:[%s307 + $0x21] sm:$0xff]
        %v1935 = vld [vmem:[%s307 + $0x31] sm:$0xff]
        %v1936 = vld [vmem:[%s307 + $0x41] sm:$0xff]
        %v1937 = vld [vmem:[%s307 + $0x51] sm:$0xff]
        %v1938 = vld [vmem:[%s307 + $0x61] sm:$0xff]
        %v1939 = vld [vmem:[%s307 + $0x71] sm:$0xff]
        %1940 = vst.msk [vmem:[#allocation3 + $0x8] sm:$0xff] %vm277, %v1932
        %1941 = vst.msk [vmem:[#allocation3 + $0x20] sm:$0xff] %vm277, %v1933
        %1942 = vst.msk [vmem:[#allocation3 + $0x38] sm:$0xff] %vm277, %v1934
        %1943 = vst.msk [vmem:[#allocation3 + $0x50] sm:$0xff] %vm277, %v1935
        %1944 = vst.msk [vmem:[#allocation3 + $0x68] sm:$0xff] %vm277, %v1936
        %1945 = vst.msk [vmem:[#allocation3 + $0x80] sm:$0xff] %vm277, %v1937
        %1946 = vst.msk [vmem:[#allocation3 + $0x98] sm:$0xff] %vm277, %v1938
        %1947 = vst.msk [vmem:[#allocation3 + $0xb0] sm:$0xff] %vm277, %v1939
        %v1948 = vld [vmem:[%s307 + $0x2] sm:$0xff]
        %v1949 = vld [vmem:[%s307 + $0x12] sm:$0xff]
        %v1950 = vld [vmem:[%s307 + $0x22] sm:$0xff]
        %v1951 = vld [vmem:[%s307 + $0x32] sm:$0xff]
        %v1952 = vld [vmem:[%s307 + $0x42] sm:$0xff]
        %v1953 = vld [vmem:[%s307 + $0x52] sm:$0xff]
        %v1954 = vld [vmem:[%s307 + $0x62] sm:$0xff]
        %v1955 = vld [vmem:[%s307 + $0x72] sm:$0xff]
        %1964 = vrot.lane.b32.xlu0 %v1948, 32
        %v1965 = vpop.permute.xlu0 %1964
        %1966 = vrot.lane.b32.xlu0 %v1949, 32
        %v1967 = vpop.permute.xlu0 %1966
        %1968 = vrot.lane.b32.xlu0 %v1950, 32
        %v1969 = vpop.permute.xlu0 %1968
        %1970 = vrot.lane.b32.xlu0 %v1951, 32
        %v1971 = vpop.permute.xlu0 %1970
        %1972 = vrot.lane.b32.xlu0 %v1952, 32
        %v1973 = vpop.permute.xlu0 %1972
        %1974 = vrot.lane.b32.xlu0 %v1953, 32
        %v1975 = vpop.permute.xlu0 %1974
        %1976 = vrot.lane.b32.xlu0 %v1954, 32
        %v1977 = vpop.permute.xlu0 %1976
        %1978 = vrot.lane.b32.xlu0 %v1955, 32
        %v1979 = vpop.permute.xlu0 %1978
        %1988 = vst.msk [vmem:[#allocation3 + $0x8] sm:$0xff] %vm372, %v1965
        %1989 = vst.msk [vmem:[#allocation3 + $0x20] sm:$0xff] %vm372, %v1967
        %1990 = vst.msk [vmem:[#allocation3 + $0x38] sm:$0xff] %vm372, %v1969
        %1991 = vst.msk [vmem:[#allocation3 + $0x50] sm:$0xff] %vm372, %v1971
        %1992 = vst.msk [vmem:[#allocation3 + $0x68] sm:$0xff] %vm372, %v1973
        %1993 = vst.msk [vmem:[#allocation3 + $0x80] sm:$0xff] %vm372, %v1975
        %1994 = vst.msk [vmem:[#allocation3 + $0x98] sm:$0xff] %vm372, %v1977
        %1995 = vst.msk [vmem:[#allocation3 + $0xb0] sm:$0xff] %vm372, %v1979
        %v1996 = vld [vmem:[%s543] sm:$0xff]
        %v1997 = vld [vmem:[%s543 + $0x10] sm:$0xff]
        %v1998 = vld [vmem:[%s543 + $0x20] sm:$0xff]
        %v1999 = vld [vmem:[%s543 + $0x30] sm:$0xff]
        %v2000 = vld [vmem:[%s543 + $0x40] sm:$0xff]
        %v2001 = vld [vmem:[%s543 + $0x50] sm:$0xff]
        %v2002 = vld [vmem:[%s543 + $0x60] sm:$0xff]
        %v2003 = vld [vmem:[%s543 + $0x70] sm:$0xff]
        %2012 = vrot.lane.b32.xlu0 %v1996, 64
        %v2013 = vpop.permute.xlu0 %2012
        %2014 = vrot.lane.b32.xlu0 %v1997, 64
        %v2015 = vpop.permute.xlu0 %2014
        %2016 = vrot.lane.b32.xlu0 %v1998, 64
        %v2017 = vpop.permute.xlu0 %2016
        %2018 = vrot.lane.b32.xlu0 %v1999, 64
        %v2019 = vpop.permute.xlu0 %2018
        %2020 = vrot.lane.b32.xlu0 %v2000, 64
        %v2021 = vpop.permute.xlu0 %2020
        %2022 = vrot.lane.b32.xlu0 %v2001, 64
        %v2023 = vpop.permute.xlu0 %2022
        %2024 = vrot.lane.b32.xlu0 %v2002, 64
        %v2025 = vpop.permute.xlu0 %2024
        %2026 = vrot.lane.b32.xlu0 %v2003, 64
        %v2027 = vpop.permute.xlu0 %2026
        %2036 = vst.msk [vmem:[#allocation3 + $0x8] sm:$0xff] %vm421, %v2013
        %2037 = vst.msk [vmem:[#allocation3 + $0x20] sm:$0xff] %vm421, %v2015
        %2038 = vst.msk [vmem:[#allocation3 + $0x38] sm:$0xff] %vm421, %v2017
        %2039 = vst.msk [vmem:[#allocation3 + $0x50] sm:$0xff] %vm421, %v2019
        %2040 = vst.msk [vmem:[#allocation3 + $0x68] sm:$0xff] %vm421, %v2021
        %2041 = vst.msk [vmem:[#allocation3 + $0x80] sm:$0xff] %vm421, %v2023
        %2042 = vst.msk [vmem:[#allocation3 + $0x98] sm:$0xff] %vm421, %v2025
        %2043 = vst.msk [vmem:[#allocation3 + $0xb0] sm:$0xff] %vm421, %v2027
        %v2044 = vld [vmem:[%s543 + $0x1] sm:$0xff]
        %v2045 = vld [vmem:[%s543 + $0x11] sm:$0xff]
        %v2046 = vld [vmem:[%s543 + $0x21] sm:$0xff]
        %v2047 = vld [vmem:[%s543 + $0x31] sm:$0xff]
        %v2048 = vld [vmem:[%s543 + $0x41] sm:$0xff]
        %v2049 = vld [vmem:[%s543 + $0x51] sm:$0xff]
        %v2050 = vld [vmem:[%s543 + $0x61] sm:$0xff]
        %v2051 = vld [vmem:[%s543 + $0x71] sm:$0xff]
        %2060 = vrot.lane.b32.xlu0 %v2044, 96
        %v2061 = vpop.permute.xlu0 %2060
        %2062 = vrot.lane.b32.xlu0 %v2045, 96
        %v2063 = vpop.permute.xlu0 %2062
        %2064 = vrot.lane.b32.xlu0 %v2046, 96
        %v2065 = vpop.permute.xlu0 %2064
        %2066 = vrot.lane.b32.xlu0 %v2047, 96
        %v2067 = vpop.permute.xlu0 %2066
        %2068 = vrot.lane.b32.xlu0 %v2048, 96
        %v2069 = vpop.permute.xlu0 %2068
        %2070 = vrot.lane.b32.xlu0 %v2049, 96
        %v2071 = vpop.permute.xlu0 %2070
        %2072 = vrot.lane.b32.xlu0 %v2050, 96
        %v2073 = vpop.permute.xlu0 %2072
        %2074 = vrot.lane.b32.xlu0 %v2051, 96
        %v2075 = vpop.permute.xlu0 %2074
        %2084 = vst.msk [vmem:[#allocation3 + $0x8] sm:$0xff] %vm470, %v2061
        %2085 = vst.msk [vmem:[#allocation3 + $0x20] sm:$0xff] %vm470, %v2063
        %2086 = vst.msk [vmem:[#allocation3 + $0x38] sm:$0xff] %vm470, %v2065
        %2087 = vst.msk [vmem:[#allocation3 + $0x50] sm:$0xff] %vm470, %v2067
        %2088 = vst.msk [vmem:[#allocation3 + $0x68] sm:$0xff] %vm470, %v2069
        %2089 = vst.msk [vmem:[#allocation3 + $0x80] sm:$0xff] %vm470, %v2071
        %2090 = vst.msk [vmem:[#allocation3 + $0x98] sm:$0xff] %vm470, %v2073
        %2091 = vst.msk [vmem:[#allocation3 + $0xb0] sm:$0xff] %vm470, %v2075
        %v2092 = vld [vmem:[%s543 + $0x2] sm:$0xff]
        %v2093 = vld [vmem:[%s543 + $0x12] sm:$0xff]
        %v2094 = vld [vmem:[%s543 + $0x22] sm:$0xff]
        %v2095 = vld [vmem:[%s543 + $0x32] sm:$0xff]
        %v2096 = vld [vmem:[%s543 + $0x42] sm:$0xff]
        %v2097 = vld [vmem:[%s543 + $0x52] sm:$0xff]
        %v2098 = vld [vmem:[%s543 + $0x62] sm:$0xff]
        %v2099 = vld [vmem:[%s543 + $0x72] sm:$0xff]
        %2100 = vst.msk [vmem:[#allocation3 + $0x10] sm:$0xff] %vm277, %v2092
        %2101 = vst.msk [vmem:[#allocation3 + $0x28] sm:$0xff] %vm277, %v2093
        %2102 = vst.msk [vmem:[#allocation3 + $0x40] sm:$0xff] %vm277, %v2094
        %2103 = vst.msk [vmem:[#allocation3 + $0x58] sm:$0xff] %vm277, %v2095
        %2104 = vst.msk [vmem:[#allocation3 + $0x70] sm:$0xff] %vm277, %v2096
        %2105 = vst.msk [vmem:[#allocation3 + $0x88] sm:$0xff] %vm277, %v2097
        %2106 = vst.msk [vmem:[#allocation3 + $0xa0] sm:$0xff] %vm277, %v2098
        %2107 = vst.msk [vmem:[#allocation3 + $0xb8] sm:$0xff] %vm277, %v2099
        %v2108 = vld [vmem:[#allocation3] sm:$0xff]
        %v2109 = vld [vmem:[#allocation3 + $0x8] sm:$0xff]
        %v2110 = vld [vmem:[#allocation3 + $0x10] sm:$0xff]
        %v2111 = vld [vmem:[#allocation3 + $0x18] sm:$0xff]
        %v2112 = vld [vmem:[#allocation3 + $0x20] sm:$0xff]
        %v2113 = vld [vmem:[#allocation3 + $0x28] sm:$0xff]
        %v2114 = vld [vmem:[#allocation3 + $0x30] sm:$0xff]
        %v2115 = vld [vmem:[#allocation3 + $0x38] sm:$0xff]
        %v2116 = vld [vmem:[#allocation3 + $0x40] sm:$0xff]
        %v2117 = vld [vmem:[#allocation3 + $0x48] sm:$0xff]
        %v2118 = vld [vmem:[#allocation3 + $0x50] sm:$0xff]
        %v2119 = vld [vmem:[#allocation3 + $0x58] sm:$0xff]
        %v2120 = vld [vmem:[#allocation3 + $0x60] sm:$0xff]
        %v2121 = vld [vmem:[#allocation3 + $0x68] sm:$0xff]
        %v2122 = vld [vmem:[#allocation3 + $0x70] sm:$0xff]
        %v2123 = vld [vmem:[#allocation3 + $0x78] sm:$0xff]
        %v2124 = vld [vmem:[#allocation3 + $0x80] sm:$0xff]
        %v2125 = vld [vmem:[#allocation3 + $0x88] sm:$0xff]
        %v2126 = vld [vmem:[#allocation3 + $0x90] sm:$0xff]
        %v2127 = vld [vmem:[#allocation3 + $0x98] sm:$0xff]
        %v2128 = vld [vmem:[#allocation3 + $0xa0] sm:$0xff]
        %v2129 = vld [vmem:[#allocation3 + $0xa8] sm:$0xff]
        %v2130 = vld [vmem:[#allocation3 + $0xb0] sm:$0xff]
        %v2131 = vld [vmem:[#allocation3 + $0xb8] sm:$0xff]
        %v2132 = vld [vmem:[%s5] sm:$0xff]
        %v2133 = vld [vmem:[%s5 + $0x8] sm:$0xff]
        %v2134 = vld [vmem:[%s5 + $0x10] sm:$0xff]
        %v2135 = vld [vmem:[%s5 + $0x18] sm:$0xff]
        %v2136 = vld [vmem:[%s5 + $0x20] sm:$0xff]
        %v2137 = vld [vmem:[%s5 + $0x28] sm:$0xff]
        %v2138 = vld [vmem:[%s5 + $0x30] sm:$0xff]
        %v2139 = vld [vmem:[%s5 + $0x38] sm:$0xff]
        %v2140 = vld [vmem:[%s5 + $0x40] sm:$0xff]
        %v2141 = vld [vmem:[%s5 + $0x48] sm:$0xff]
        %v2142 = vld [vmem:[%s5 + $0x50] sm:$0xff]
        %v2143 = vld [vmem:[%s5 + $0x58] sm:$0xff]
        %v2144 = vld [vmem:[%s5 + $0x60] sm:$0xff]
        %v2145 = vld [vmem:[%s5 + $0x68] sm:$0xff]
        %v2146 = vld [vmem:[%s5 + $0x70] sm:$0xff]
        %v2147 = vld [vmem:[%s5 + $0x78] sm:$0xff]
        %v2148 = vld [vmem:[%s5 + $0x80] sm:$0xff]
        %v2149 = vld [vmem:[%s5 + $0x88] sm:$0xff]
        %v2150 = vld [vmem:[%s5 + $0x90] sm:$0xff]
        %v2151 = vld [vmem:[%s5 + $0x98] sm:$0xff]
        %v2152 = vld [vmem:[%s5 + $0xa0] sm:$0xff]
        %v2153 = vld [vmem:[%s5 + $0xa8] sm:$0xff]
        %v2154 = vld [vmem:[%s5 + $0xb0] sm:$0xff]
        %v2155 = vld [vmem:[%s5 + $0xb8] sm:$0xff]
        %v2156 = vld [vmem:[%s5 + $0xc0] sm:$0xff]
        %v2157 = vld [vmem:[%s5 + $0xc8] sm:$0xff]
        %v2158 = vld [vmem:[%s5 + $0xd0] sm:$0xff]
        %v2159 = vld [vmem:[%s5 + $0xd8] sm:$0xff]
        %v2160 = vld [vmem:[%s5 + $0xe0] sm:$0xff]
        %v2161 = vld [vmem:[%s5 + $0xe8] sm:$0xff]
        %v2162 = vld [vmem:[%s5 + $0xf0] sm:$0xff]
        %v2163 = vld [vmem:[%s5 + $0xf8] sm:$0xff]
        %v2164 = vld [vmem:[%s5 + $0x100] sm:$0xff]
        %v2165 = vld [vmem:[%s5 + $0x108] sm:$0xff]
        %v2166 = vld [vmem:[%s5 + $0x110] sm:$0xff]
        %v2167 = vld [vmem:[%s5 + $0x118] sm:$0xff]
        %v2168 = vld [vmem:[%s6] sm:$0x1]
        %v2170 = vlaneseq
        %v2171 = vshrl.u32 %v2170, 7
        %v2172 = vsub.s32 0, %v2171
        %v2173 = vrot.slane %v2168, %v2172
        %v2176 = vsel %vm277, %v2110, 0
        %v2179 = vsel %vm277, %v2113, 0
        %v2182 = vsel %vm277, %v2116, 0
        %v2185 = vsel %vm277, %v2119, 0
        %v2188 = vsel %vm277, %v2122, 0
        %v2191 = vsel %vm277, %v2125, 0
        %v2194 = vsel %vm277, %v2128, 0
        %v2197 = vsel %vm277, %v2131, 0
        %2199 = vmatprep.subr.mxu0 0.0
        %2200 = vmatpush1.msra.mxu0 %v2132
        %2201 = vmatprep.subr.mxu0 0.0
        %2202 = vmatpush1.msra.mxu0 %v2133
        %2203 = vmatprep.subr.mxu0 0.0
        %2204 = vmatpush1.msra.mxu0 %v2134
        %2205 = vmatprep.subr.mxu0 0.0
        %2206 = vmatpush1.msra.mxu0 %v2135
        %2207 = vmatprep.subr.mxu0 0.0
        %2208 = vmatpush1.msra.mxu0 %v2136
        %2209 = vmatprep.subr.mxu0 0.0
        %2210 = vmatpush1.msra.mxu0 %v2137
        %2211 = vmatprep.subr.mxu0 0.0
        %2212 = vmatpush1.msra.mxu0 %v2138
        %2213 = vmatprep.subr.mxu0 0.0
        %2214 = vmatpush1.msra.mxu0 %v2139
        %2215 = vmatprep.subr.mxu0 0.0
        %2216 = vmatpush1.msra.mxu0 %v2140
        %2217 = vmatprep.subr.mxu0 0.0
        %2218 = vmatpush1.msra.mxu0 %v2141
        %2219 = vmatprep.subr.mxu0 0.0
        %2220 = vmatpush1.msra.mxu0 %v2142
        %2221 = vmatprep.subr.mxu0 0.0
        %2222 = vmatpush1.msra.mxu0 %v2143
        %2223 = vmatprep.subr.mxu0 0.0
        %2224 = vmatpush1.msra.mxu0 %v2144
        %2225 = vmatprep.subr.mxu0 0.0
        %2226 = vmatpush1.msra.mxu0 %v2145
        %2227 = vmatprep.subr.mxu0 0.0
        %2228 = vmatpush1.msra.mxu0 %v2146
        %2229 = vmatprep.subr.mxu0 0.0
        %2230 = vmatpush1.msra.mxu0 %v2147
        %2231 = vmatprep.subr.mxu0 0.0
        %2232 = vmatpush1.msra.mxu0 %v2148
        %2233 = vmatprep.subr.mxu0 0.0
        %2234 = vmatpush1.msra.mxu0 %v2149
        %2235 = vmatprep.subr.mxu0 0.0
        %2236 = vmatpush1.msra.mxu0 %v2150
        %2237 = vmatprep.subr.mxu0 0.0
        %2238 = vmatpush1.msra.mxu0 %v2151
        %2239 = vmatprep.subr.mxu0 0.0
        %2240 = vmatpush1.msra.mxu0 %v2152
        %2241 = vmatprep.subr.mxu0 0.0
        %2242 = vmatpush1.msra.mxu0 %v2153
        %2243 = vmatprep.subr.mxu0 0.0
        %2244 = vmatpush1.msra.mxu0 %v2154
        %2245 = vmatprep.subr.mxu0 0.0
        %2246 = vmatpush1.msra.mxu0 %v2155
        %2247 = vmatprep.subr.mxu0 0.0
        %2248 = vmatpush1.msra.mxu0 %v2156
        %2249 = vmatprep.subr.mxu0 0.0
        %2250 = vmatpush1.msra.mxu0 %v2157
        %2251 = vmatprep.subr.mxu0 0.0
        %2252 = vmatpush1.msra.mxu0 %v2158
        %2253 = vmatprep.subr.mxu0 0.0
        %2254 = vmatpush1.msra.mxu0 %v2159
        %2255 = vmatprep.subr.mxu0 0.0
        %2256 = vmatpush1.msra.mxu0 %v2160
        %2257 = vmatprep.subr.mxu0 0.0
        %2258 = vmatpush1.msra.mxu0 %v2161
        %2259 = vmatprep.subr.mxu0 0.0
        %2260 = vmatpush1.msra.mxu0 %v2162
        %2261 = vmatprep.subr.mxu0 0.0
        %2262 = vmatpush1.msra.mxu0 %v2163
        %2263 = vmatprep.mubr.f32.mxu0 %v2109
        %2264 = vmatmul.mubr.f32.gmra.mrb[0].mxu0 %v2108
        %v2265 = vpop.f32.mrb[0].mxu0
        %v2266 = vadd.f32 %v2173, %v2265
        %v2267 = vpop.f32.mrb[0].mxu0
        %2268 = vmatprep.mubr.f32.mxu0 %v2112
        %2269 = vmatmul.mubr.f32.gmra.mrb[0].mxu0 %v2111
        %v2270 = vpop.f32.mrb[0].mxu0
        %v2271 = vadd.f32 %v2173, %v2270
        %v2272 = vpop.f32.mrb[0].mxu0
        %2273 = vmatprep.mubr.f32.mxu0 %v2115
        %2274 = vmatmul.mubr.f32.gmra.mrb[0].mxu0 %v2114
        %v2275 = vpop.f32.mrb[0].mxu0
        %v2276 = vadd.f32 %v2173, %v2275
        %v2277 = vpop.f32.mrb[0].mxu0
        %2278 = vmatprep.mubr.f32.mxu0 %v2118
        %2279 = vmatmul.mubr.f32.gmra.mrb[0].mxu0 %v2117
        %v2280 = vpop.f32.mrb[0].mxu0
        %v2281 = vadd.f32 %v2173, %v2280
        %v2282 = vpop.f32.mrb[0].mxu0
        %2283 = vmatprep.mubr.f32.mxu0 %v2121
        %2284 = vmatmul.mubr.f32.gmra.mrb[0].mxu0 %v2120
        %v2285 = vpop.f32.mrb[0].mxu0
        %v2286 = vadd.f32 %v2173, %v2285
        %v2287 = vpop.f32.mrb[0].mxu0
        %2288 = vmatprep.mubr.f32.mxu0 %v2124
        %2289 = vmatmul.mubr.f32.gmra.mrb[0].mxu0 %v2123
        %v2290 = vpop.f32.mrb[0].mxu0
        %v2291 = vadd.f32 %v2173, %v2290
        %v2292 = vpop.f32.mrb[0].mxu0
        %2293 = vmatprep.mubr.f32.mxu0 %v2127
        %2294 = vmatmul.mubr.f32.gmra.mrb[0].mxu0 %v2126
        %v2295 = vpop.f32.mrb[0].mxu0
        %v2296 = vadd.f32 %v2173, %v2295
        %v2297 = vpop.f32.mrb[0].mxu0
        %2298 = vmatprep.mubr.f32.mxu0 %v2130
        %2299 = vmatmul.mubr.f32.gmra.mrb[0].mxu0 %v2129
        %v2300 = vpop.f32.mrb[0].mxu0
        %v2301 = vadd.f32 %v2173, %v2300
        %v2302 = vpop.f32.mrb[0].mxu0
        %2303 = vdwg.mxu0
        %2304 = vmatprep.subr.mxu0 0.0
        %2305 = vmatpush1.msra.mxu0 %v2164
        %2306 = vmatprep.subr.mxu0 0.0
        %2307 = vmatpush1.msra.mxu0 %v2165
        %2308 = vmatprep.subr.mxu0 0.0
        %2309 = vmatpush1.msra.mxu0 %v2166
        %2310 = vmatprep.subr.mxu0 0.0
        %2311 = vmatpush1.msra.mxu0 %v2167
        %2312 = vmatprep.subr.mxu0 0.0
        %2313 = vmatpush1.msra.mxu0 0.0
        %2314 = vmatprep.subr.mxu0 0.0
        %2315 = vmatpush1.msra.mxu0 0.0
        %2316 = vmatprep.subr.mxu0 0.0
        %2317 = vmatpush1.msra.mxu0 0.0
        %2318 = vmatprep.subr.mxu0 0.0
        %2319 = vmatpush1.msra.mxu0 0.0
        %2320 = vmatprep.subr.mxu0 0.0
        %2321 = vmatpush1.msra.mxu0 0.0
        %2322 = vmatprep.subr.mxu0 0.0
        %2323 = vmatpush1.msra.mxu0 0.0
        %2324 = vmatprep.subr.mxu0 0.0
        %2325 = vmatpush1.msra.mxu0 0.0
        %2326 = vmatprep.subr.mxu0 0.0
        %2327 = vmatpush1.msra.mxu0 0.0
        %2328 = vmatprep.subr.mxu0 0.0
        %2329 = vmatpush1.msra.mxu0 0.0
        %2330 = vmatprep.subr.mxu0 0.0
        %2331 = vmatpush1.msra.mxu0 0.0
        %2332 = vmatprep.subr.mxu0 0.0
        %2333 = vmatpush1.msra.mxu0 0.0
        %2334 = vmatprep.subr.mxu0 0.0
        %2335 = vmatpush1.msra.mxu0 0.0
        %2336 = vmatprep.subr.mxu0 0.0
        %2337 = vmatpush1.msra.mxu0 0.0
        %2338 = vmatprep.subr.mxu0 0.0
        %2339 = vmatpush1.msra.mxu0 0.0
        %2340 = vmatprep.subr.mxu0 0.0
        %2341 = vmatpush1.msra.mxu0 0.0
        %2342 = vmatprep.subr.mxu0 0.0
        %2343 = vmatpush1.msra.mxu0 0.0
        %2344 = vmatprep.subr.mxu0 0.0
        %2345 = vmatpush1.msra.mxu0 0.0
        %2346 = vmatprep.subr.mxu0 0.0
        %2347 = vmatpush1.msra.mxu0 0.0
        %2348 = vmatprep.subr.mxu0 0.0
        %2349 = vmatpush1.msra.mxu0 0.0
        %2350 = vmatprep.subr.mxu0 0.0
        %2351 = vmatpush1.msra.mxu0 0.0
        %2352 = vmatprep.subr.mxu0 0.0
        %2353 = vmatpush1.msra.mxu0 0.0
        %2354 = vmatprep.subr.mxu0 0.0
        %2355 = vmatpush1.msra.mxu0 0.0
        %2356 = vmatprep.subr.mxu0 0.0
        %2357 = vmatpush1.msra.mxu0 0.0
        %2358 = vmatprep.subr.mxu0 0.0
        %2359 = vmatpush1.msra.mxu0 0.0
        %2360 = vmatprep.subr.mxu0 0.0
        %2361 = vmatpush1.msra.mxu0 0.0
        %2362 = vmatprep.subr.mxu0 0.0
        %2363 = vmatpush1.msra.mxu0 0.0
        %2364 = vmatprep.subr.mxu0 0.0
        %2365 = vmatpush1.msra.mxu0 0.0
        %2366 = vmatprep.subr.mxu0 0.0
        %2367 = vmatpush1.msra.mxu0 0.0
        %2368 = vmatprep.mubr.f32.mxu0 0.0
        %2369 = vmatmul.mubr.f32.gmra.mrb[0].mxu0 %v2176
        %v2370 = vpop.f32.mrb[0].mxu0
        %v2371 = vadd.f32 %v2266, %v2370
        %v2372 = vpop.f32.mrb[0].mxu0
        %2373 = vmatprep.mubr.f32.mxu0 0.0
        %2374 = vmatmul.mubr.f32.gmra.mrb[0].mxu0 %v2179
        %v2375 = vpop.f32.mrb[0].mxu0
        %v2376 = vadd.f32 %v2271, %v2375
        %v2377 = vpop.f32.mrb[0].mxu0
        %2378 = vmatprep.mubr.f32.mxu0 0.0
        %2379 = vmatmul.mubr.f32.gmra.mrb[0].mxu0 %v2182
        %v2380 = vpop.f32.mrb[0].mxu0
        %v2381 = vadd.f32 %v2276, %v2380
        %v2382 = vpop.f32.mrb[0].mxu0
        %2383 = vmatprep.mubr.f32.mxu0 0.0
        %2384 = vmatmul.mubr.f32.gmra.mrb[0].mxu0 %v2185
        %v2385 = vpop.f32.mrb[0].mxu0
        %v2386 = vadd.f32 %v2281, %v2385
        %v2387 = vpop.f32.mrb[0].mxu0
        %2388 = vmatprep.mubr.f32.mxu0 0.0
        %2389 = vmatmul.mubr.f32.gmra.mrb[0].mxu0 %v2188
        %v2390 = vpop.f32.mrb[0].mxu0
        %v2391 = vadd.f32 %v2286, %v2390
        %v2392 = vpop.f32.mrb[0].mxu0
        %2393 = vmatprep.mubr.f32.mxu0 0.0
        %2394 = vmatmul.mubr.f32.gmra.mrb[0].mxu0 %v2191
        %v2395 = vpop.f32.mrb[0].mxu0
        %v2396 = vadd.f32 %v2291, %v2395
        %v2397 = vpop.f32.mrb[0].mxu0
        %2398 = vmatprep.mubr.f32.mxu0 0.0
        %2399 = vmatmul.mubr.f32.gmra.mrb[0].mxu0 %v2194
        %v2400 = vpop.f32.mrb[0].mxu0
        %v2401 = vadd.f32 %v2296, %v2400
        %v2402 = vpop.f32.mrb[0].mxu0
        %2403 = vmatprep.mubr.f32.mxu0 0.0
        %2404 = vmatmul.mubr.f32.gmra.mrb[0].mxu0 %v2197
        %v2405 = vpop.f32.mrb[0].mxu0
        %v2406 = vadd.f32 %v2301, %v2405
        %v2407 = vpop.f32.mrb[0].mxu0
        %2408 = vdwg.mxu0
        %v2409 = vadd.f32 %v2371, %v919
        %v2410 = vadd.f32 %v2376, %v924
        %v2411 = vadd.f32 %v2381, %v929
        %v2412 = vadd.f32 %v2386, %v934
        %v2413 = vadd.f32 %v2391, %v939
        %v2414 = vadd.f32 %v2396, %v944
        %v2415 = vadd.f32 %v2401, %v949
        %v2416 = vadd.f32 %v2406, %v954
        %2417 = vst.msk [vmem:[%s271] sm:$0xff] %vm277, %v2409
        %2418 = vst.msk [vmem:[%s271 + $0x8] sm:$0xff] %vm277, %v2410
        %2419 = vst.msk [vmem:[%s271 + $0x10] sm:$0xff] %vm277, %v2411
        %2420 = vst.msk [vmem:[%s271 + $0x18] sm:$0xff] %vm277, %v2412
        %2421 = vst.msk [vmem:[%s271 + $0x20] sm:$0xff] %vm277, %v2413
        %2422 = vst.msk [vmem:[%s271 + $0x28] sm:$0xff] %vm277, %v2414
        %2423 = vst.msk [vmem:[%s271 + $0x30] sm:$0xff] %vm277, %v2415
        %2424 = vst.msk [vmem:[%s271 + $0x38] sm:$0xff] %vm277, %v2416
        %s2425 = sand.u32 %s181, 1
        %s2426 = scalar_lea.sflag [#allocation5], %s2425
        %s2427 = sand.u32 %s181, 1
        %s2428 = smul.addr %s2427, 64
        %s2429 = scalar_lea.vmem [#allocation4], %s2428
        // Predicated region
        $region49: #{tpu_custom_call.1} parent=47 // pred_check
          %p2430 = pneg %p191
        $region50: #{tpu_custom_call.1} parent=47 // pred_check_branch
          %2432 = sbr.rel (%p2430) target = $region52
        $region51: #{tpu_custom_call.1} parent=47 // pred_region
          %s2434 = ssub.s32 1024, 1024
          %2435 = vsyncadd %s2426, %s2434
          %s2436 = smul.addr %s21, 8
          %s2437 = smul.addr %s2436, 128
          %s2438 = scalar_lea.hbm %s7, %s2437
          %s2439 = sshll.u32 %s2429, 4
          %s2440 = int_to_ptr.vmem [resolvable:$true] %s2439
          %2445 = dma.vmem_to_hbm [thread:$0]  %s2440, 1024, %s2438, %s2426, 128, 128, 8
        $region52: #{tpu_custom_call.1} parent=47 // pred_fallthru
          _
      $region48: #{tpu_custom_call.1} parent=5 // pred_fallthru
        _
      %p2446 = scmp.le.s32.totalorder 2, %s16
      // Predicated region
      $region53: #{tpu_custom_call.1} parent=5 // pred_check
        %p2447 = pneg %p2446
      $region54: #{tpu_custom_call.1} parent=5 // pred_check_branch
        %2449 = sbr.rel (%p2447) target = $region56
      $region55: #{tpu_custom_call.1} parent=5 // pred_region
        %s2450 = ssub.s32 %s16, 2
        // Predicated region
        $region57: #{tpu_custom_call.1} parent=55 // pred_check
          %p2451 = pneg %p197
        $region58: #{tpu_custom_call.1} parent=55 // pred_check_branch
          %2453 = sbr.rel (%p2451) target = $region60
        $region59: #{tpu_custom_call.1} parent=55 // pred_region
          %s2454 = sand.u32 %s182, 1
          %s2455 = scalar_lea.sflag [#allocation5], %s2454
          %s2456 = sand.u32 %s182, 1
          %s2457 = smul.addr %s2456, 64
          %s2458 = scalar_lea.vmem [#allocation4], %s2457
          %2459 = dma.done %s2455, 1024
        $region60: #{tpu_custom_call.1} parent=55 // pred_fallthru
          _
      $region56: #{tpu_custom_call.1} parent=5 // pred_fallthru
        _
    $region6: #{tpu_custom_call.1} parent=1 // loop_footer
      %s20 = sadd.s32 1, %s16
    $region7: #{tpu_custom_call.1} parent=1 // loop_footer_branch
      %15 = sbr.rel target = $region3
    $region8: #{tpu_custom_call.1} parent=1 // loop_exit
      _
    %2460 = vsyncpa [#allocation5], 1
    %s2461 = scalar_lea.sflag [#allocation5], 1
    %2462 = vsyncpa %s2461, 1

</llo_original>
